<compile_context>
chip_gen: v6e
topology: v6e:2x2x1
jax: 0.10.0
libtpu: 0.0.40
codegen_flags: <defaults>
</compile_context>

<pallas_src>
import functools

import jax
import jax.numpy as jnp
from jax.experimental import pallas as pl
from jax.experimental.pallas import tpu as pltpu

HIDDEN = 750       # logical hidden width (matches nn.Linear(state_dim, 750))
HIDDEN_PAD = 768   # padded to a multiple of (8, 128) for aligned tiles


def _round_up(x, m):
    return (x + m - 1) // m * m


def vae_state_kernel(max_state, latent_dim,
                     state_ref, noise_ref,
                     e1w_ref, e1b_ref, e2w_ref, e2b_ref,
                     hw_ref, hb_ref,
                     d1w_ref, d1b_ref, d2w_ref, d2b_ref,
                     d3w_ref, d3b_ref,
                     u_ref, mean_ref, std_ref):
    f32 = jnp.float32
    bf16 = jnp.bfloat16

    x = state_ref[...]                                   # [tb, sd] f32

    # ---- encoder ----
    # e1: K = state_dim (tiny, e.g. 3) -> VPU broadcast FMAs instead of an MXU
    # dot that would use <3% of the systolic rows.
    e1w = e1w_ref[...].astype(f32)                       # [sd, H] (bf16 -> f32)
    sd = x.shape[1]
    h = x[:, 0:1] * e1w[0:1, :]
    for k in range(1, sd):
        h = h + x[:, k:k + 1] * e1w[k:k + 1, :]
    h = jnp.maximum(h + e1b_ref[...], 0.0)               # relu, [tb, H] f32

    # e2: 768x768 bf16 matmul, f32 accumulation.
    h = jnp.maximum(
        jnp.dot(h.astype(bf16), e2w_ref[...],
                preferred_element_type=f32) + e2b_ref[...], 0.0)

    # fused mean || log_std head: one [H, 2*latent] matmul, then slice.
    head = jnp.dot(h.astype(bf16), hw_ref[...],
                   preferred_element_type=f32) + hb_ref[...]
    mean = head[:, :latent_dim]
    log_std = jnp.clip(head[:, latent_dim:], -4.0, 15.0)  # .clamp(-4, 15)
    std = jnp.exp(log_std)

    # reparameterization: z = mean + std * eps
    z = mean + std * noise_ref[...]

    # ---- decoder ----
    s = jnp.maximum(
        jnp.dot(z.astype(bf16), d1w_ref[...],
                preferred_element_type=f32) + d1b_ref[...], 0.0)
    s = jnp.maximum(
        jnp.dot(s.astype(bf16), d2w_ref[...],
                preferred_element_type=f32) + d2b_ref[...], 0.0)
    out = jnp.dot(s.astype(bf16), d3w_ref[...],
                  preferred_element_type=f32) + d3b_ref[...]

    if max_state is None:
        u_ref[...] = out
    else:
        u_ref[...] = max_state * jnp.tanh(out)            # max_state * tanh(d3(s))
    mean_ref[...] = mean
    std_ref[...] = std


def vae_state_forward(state, noise, prepared, max_state, *, block_b=256):
    """state: [B, state_dim] f32; noise: [B, latent_dim] f32 (~N(0,1)).

    `prepared` is the dict returned by prepare_params (bf16 / padded weights).
    """
    B, state_dim = state.shape
    latent_dim = noise.shape[1]

    # Batch tile: at least one sublane group (8 rows), at most block_b.
    tb = min(block_b, _round_up(B, 8))
    B_pad = _round_up(B, tb)
    if B_pad != B:
        state = jnp.pad(state, ((0, B_pad - B), (0, 0)))
        noise = jnp.pad(noise, ((0, B_pad - B), (0, 0)))

    weight_names = ("e1w", "e1b", "e2w", "e2b", "hw", "hb",
                    "d1w", "d1b", "d2w", "d2b", "d3w", "d3b")
    weights = [prepared[k] for k in weight_names]

    def batch_spec(ncols):
        # Activations / outputs stream over the batch grid axis.
        return pl.BlockSpec((tb, ncols), lambda i: (i, 0))

    def const_spec(arr):
        # Constant block index -> weight DMA'd into VMEM once, resident for
        # every batch tile.
        return pl.BlockSpec(arr.shape, lambda i: (0, 0))

    grid = (B_pad // tb,)
    kernel = functools.partial(
        vae_state_kernel,
        None if max_state is None else float(max_state),
        latent_dim)

    out_shape = (
        jax.ShapeDtypeStruct((B_pad, state_dim), jnp.float32),   # u
        jax.ShapeDtypeStruct((B_pad, latent_dim), jnp.float32),  # mean
        jax.ShapeDtypeStruct((B_pad, latent_dim), jnp.float32),  # std
    )

    u, mean, std = pl.pallas_call(
        kernel,
        out_shape=out_shape,
        grid=grid,
        in_specs=[batch_spec(state_dim), batch_spec(latent_dim)]
                 + [const_spec(w) for w in weights],
        out_specs=(batch_spec(state_dim),
                   batch_spec(latent_dim),
                   batch_spec(latent_dim)),
        compiler_params=pltpu.CompilerParams(
            dimension_semantics=("parallel",),   # v7x: split batch over 2 TCs
            vmem_limit_bytes=16 << 20,           # footprint is only a few MiB
        ),
    )(state, noise, *weights)

    return u[:B], mean[:B], std[:B]


# ----------------------------------------------------------------------------
# Parameter construction / preparation (matches PyTorch nn.Linear semantics).
# ----------------------------------------------------------------------------
def init_linear(key, fan_in, fan_out):
    # PyTorch nn.Linear default init: U(-1/sqrt(fan_in), 1/sqrt(fan_in)).
    kw, kb = jax.random.split(key)
    bound = 1.0 / jnp.sqrt(jnp.float32(fan_in))
    w = jax.random.uniform(kw, (fan_in, fan_out), jnp.float32, -bound, bound)
    b = jax.random.uniform(kb, (1, fan_out), jnp.float32, -bound, bound)
    return w, b


def make_params(key, state_dim, latent_dim):
    keys = jax.random.split(key, 7)
    p = {}
    p["e1w"], p["e1b"] = init_linear(keys[0], state_dim, HIDDEN)
    p["e2w"], p["e2b"] = init_linear(keys[1], HIDDEN, HIDDEN)
    p["mw"], p["mb"] = init_linear(keys[2], HIDDEN, latent_dim)
    p["lw"], p["lb"] = init_linear(keys[3], HIDDEN, latent_dim)
    p["d1w"], p["d1b"] = init_linear(keys[4], latent_dim, HIDDEN)
    p["d2w"], p["d2b"] = init_linear(keys[5], HIDDEN, HIDDEN)
    p["d3w"], p["d3b"] = init_linear(keys[6], HIDDEN, state_dim)
    return p


def prepare_params(p, state_dim, latent_dim):
    """Zero-pad hidden dim 750->768, fuse mean/log_std head, cast weights bf16."""
    HP = HIDDEN_PAD
    bf16 = jnp.bfloat16

    def padw(w, rows, cols):
        return jnp.pad(w, ((0, rows - w.shape[0]), (0, cols - w.shape[1])))

    def padb(b, cols):
        return jnp.pad(b, ((0, 0), (0, cols - b.shape[1])))

    out = {}
    out["e1w"] = padw(p["e1w"], state_dim, HP).astype(bf16)
    out["e1b"] = padb(p["e1b"], HP)
    out["e2w"] = padw(p["e2w"], HP, HP).astype(bf16)
    out["e2b"] = padb(p["e2b"], HP)
    hw = jnp.concatenate([p["mw"], p["lw"]], axis=1)      # [750, 2*latent]
    hb = jnp.concatenate([p["mb"], p["lb"]], axis=1)      # [1, 2*latent]
    out["hw"] = padw(hw, HP, 2 * latent_dim).astype(bf16)
    out["hb"] = hb
    out["d1w"] = padw(p["d1w"], latent_dim, HP).astype(bf16)
    out["d1b"] = padb(p["d1b"], HP)
    out["d2w"] = padw(p["d2w"], HP, HP).astype(bf16)
    out["d2b"] = padb(p["d2b"], HP)
    out["d3w"] = padw(p["d3w"], HP, state_dim).astype(bf16)
    out["d3b"] = p["d3b"]
    return out


def ref_forward(state, noise, prepared, max_state, latent_dim):
    """Pure-JAX reference mirroring the kernel's bf16 weight / cast scheme."""
    f32 = jnp.float32
    bf16 = jnp.bfloat16
    h = jnp.maximum(state @ prepared["e1w"].astype(f32) + prepared["e1b"], 0.0)
    h = jnp.maximum(
        jnp.dot(h.astype(bf16), prepared["e2w"], preferred_element_type=f32)
        + prepared["e2b"], 0.0)
    head = jnp.dot(h.astype(bf16), prepared["hw"],
                   preferred_element_type=f32) + prepared["hb"]
    mean = head[:, :latent_dim]
    log_std = jnp.clip(head[:, latent_dim:], -4.0, 15.0)
    std = jnp.exp(log_std)
    z = mean + std * noise
    s = jnp.maximum(
        jnp.dot(z.astype(bf16), prepared["d1w"], preferred_element_type=f32)
        + prepared["d1b"], 0.0)
    s = jnp.maximum(
        jnp.dot(s.astype(bf16), prepared["d2w"], preferred_element_type=f32)
        + prepared["d2b"], 0.0)
    out = jnp.dot(s.astype(bf16), prepared["d3w"],
                  preferred_element_type=f32) + prepared["d3b"]
    u = out if max_state is None else max_state * jnp.tanh(out)
    return u, mean, std


if __name__ == "__main__":
    # Pendulum-like sizes: state_dim=3, latent_dim=2*state_dim=6, small batch.
    state_dim = 3
    latent_dim = 2 * state_dim
    batch = 32
    max_state = 1.0

    root = jax.random.PRNGKey(0)
    k_params, k_state, k_noise = jax.random.split(root, 3)

    params = make_params(k_params, state_dim, latent_dim)
    prepared = prepare_params(params, state_dim, latent_dim)
    state = jax.random.normal(k_state, (batch, state_dim), jnp.float32)
    # torch.randn_like(std) equivalent (generated in glue, fed to the kernel):
    noise = jax.random.normal(k_noise, (batch, latent_dim), jnp.float32)

    # Small block_b here just to exercise the batch grid (grid=(4,)); in
    # production use the default block_b=256 so >=256 MXU rows are used.
    u, mean, std = vae_state_forward(state, noise, prepared, max_state,
                                     block_b=8)
    jax.block_until_ready((u, mean, std))

    # Sanity check against a pure-JAX reference with the same bf16 weights
    # (results intentionally differ slightly from a pure-f32 torch model).
    u_r, mean_r, std_r = ref_forward(state, noise, prepared, max_state,
                                     latent_dim)
    assert u.shape == (batch, state_dim)
    assert mean.shape == (batch, latent_dim) and std.shape == (batch, latent_dim)
    assert jnp.allclose(u, u_r, atol=1e-2, rtol=1e-2)
    assert jnp.allclose(mean, mean_r, atol=1e-2, rtol=1e-2)
    assert jnp.allclose(std, std_r, atol=1e-2, rtol=1e-2)

    print("KERNEL_OK")
</pallas_src>

<mosaic_0001>
module attributes {stable_mosaic.version = 11 : i64} {
  func.func @vae_state_kernel(%arg0: i32, %arg1: memref<8x3xf32, #tpu.memory_space<vmem>>, %arg2: memref<8x6xf32, #tpu.memory_space<vmem>>, %arg3: memref<3x768xbf16, #tpu.memory_space<vmem>>, %arg4: memref<1x768xf32, #tpu.memory_space<vmem>>, %arg5: memref<768x768xbf16, #tpu.memory_space<vmem>>, %arg6: memref<1x768xf32, #tpu.memory_space<vmem>>, %arg7: memref<768x12xbf16, #tpu.memory_space<vmem>>, %arg8: memref<1x12xf32, #tpu.memory_space<vmem>>, %arg9: memref<6x768xbf16, #tpu.memory_space<vmem>>, %arg10: memref<1x768xf32, #tpu.memory_space<vmem>>, %arg11: memref<768x768xbf16, #tpu.memory_space<vmem>>, %arg12: memref<1x768xf32, #tpu.memory_space<vmem>>, %arg13: memref<768x3xbf16, #tpu.memory_space<vmem>>, %arg14: memref<1x3xf32, #tpu.memory_space<vmem>>, %arg15: memref<8x3xf32, #tpu.memory_space<vmem>>, %arg16: memref<8x6xf32, #tpu.memory_space<vmem>>, %arg17: memref<8x6xf32, #tpu.memory_space<vmem>>) attributes {dimension_semantics = [#tpu.dimension_semantics<parallel>], iteration_bounds = array<i64: 4>, scalar_prefetch = 0 : i64, scratch_operands = 0 : i64, tpu.core_type = #tpu.core_type<tc>, window_params = [{transform_indices = @transform_0, window_bounds = array<i64: 8, 3>}, {transform_indices = @transform_1, window_bounds = array<i64: 8, 6>}, {pipeline_mode = #tpu.pipeline_mode<synchronous>, transform_indices = @transform_2, window_bounds = array<i64: 3, 768>}, {pipeline_mode = #tpu.pipeline_mode<synchronous>, transform_indices = @transform_3, window_bounds = array<i64: 1, 768>}, {pipeline_mode = #tpu.pipeline_mode<synchronous>, transform_indices = @transform_4, window_bounds = array<i64: 768, 768>}, {pipeline_mode = #tpu.pipeline_mode<synchronous>, transform_indices = @transform_5, window_bounds = array<i64: 1, 768>}, {pipeline_mode = #tpu.pipeline_mode<synchronous>, transform_indices = @transform_6, window_bounds = array<i64: 768, 12>}, {pipeline_mode = #tpu.pipeline_mode<synchronous>, transform_indices = @transform_7, window_bounds = array<i64: 1, 12>}, {pipeline_mode = #tpu.pipeline_mode<synchronous>, transform_indices = @transform_8, window_bounds = array<i64: 6, 768>}, {pipeline_mode = #tpu.pipeline_mode<synchronous>, transform_indices = @transform_9, window_bounds = array<i64: 1, 768>}, {pipeline_mode = #tpu.pipeline_mode<synchronous>, transform_indices = @transform_10, window_bounds = array<i64: 768, 768>}, {pipeline_mode = #tpu.pipeline_mode<synchronous>, transform_indices = @transform_11, window_bounds = array<i64: 1, 768>}, {pipeline_mode = #tpu.pipeline_mode<synchronous>, transform_indices = @transform_12, window_bounds = array<i64: 768, 3>}, {pipeline_mode = #tpu.pipeline_mode<synchronous>, transform_indices = @transform_13, window_bounds = array<i64: 1, 3>}, {transform_indices = @transform_14, window_bounds = array<i64: 8, 3>}, {transform_indices = @transform_15, window_bounds = array<i64: 8, 6>}, {transform_indices = @transform_16, window_bounds = array<i64: 8, 6>}]} {
    %c0 = arith.constant 0 : index
    %c0_0 = arith.constant 0 : index
    %0 = vector.load %arg1[%c0, %c0_0] : memref<8x3xf32, #tpu.memory_space<vmem>>, vector<8x3xf32>
    %c0_1 = arith.constant 0 : index
    %c0_2 = arith.constant 0 : index
    %1 = vector.load %arg3[%c0_1, %c0_2] : memref<3x768xbf16, #tpu.memory_space<vmem>>, vector<3x768xbf16>
    %2 = arith.extf %1 : vector<3x768xbf16> to vector<3x768xf32>
    %3 = vector.extract_strided_slice %0 {offsets = [0, 0], sizes = [8, 1], strides = [1, 1]} : vector<8x3xf32> to vector<8x1xf32>
    %4 = vector.extract_strided_slice %2 {offsets = [0, 0], sizes = [1, 768], strides = [1, 1]} : vector<3x768xf32> to vector<1x768xf32>
    %5 = vector.broadcast %3 : vector<8x1xf32> to vector<8x768xf32>
    %6 = vector.broadcast %4 : vector<1x768xf32> to vector<8x768xf32>
    %7 = arith.mulf %5, %6 : vector<8x768xf32>
    %8 = vector.extract_strided_slice %0 {offsets = [0, 1], sizes = [8, 1], strides = [1, 1]} : vector<8x3xf32> to vector<8x1xf32>
    %9 = vector.extract_strided_slice %2 {offsets = [1, 0], sizes = [1, 768], strides = [1, 1]} : vector<3x768xf32> to vector<1x768xf32>
    %10 = vector.broadcast %8 : vector<8x1xf32> to vector<8x768xf32>
    %11 = vector.broadcast %9 : vector<1x768xf32> to vector<8x768xf32>
    %12 = arith.mulf %10, %11 : vector<8x768xf32>
    %13 = arith.addf %7, %12 : vector<8x768xf32>
    %14 = vector.extract_strided_slice %0 {offsets = [0, 2], sizes = [8, 1], strides = [1, 1]} : vector<8x3xf32> to vector<8x1xf32>
    %15 = vector.extract_strided_slice %2 {offsets = [2, 0], sizes = [1, 768], strides = [1, 1]} : vector<3x768xf32> to vector<1x768xf32>
    %16 = vector.broadcast %14 : vector<8x1xf32> to vector<8x768xf32>
    %17 = vector.broadcast %15 : vector<1x768xf32> to vector<8x768xf32>
    %18 = arith.mulf %16, %17 : vector<8x768xf32>
    %19 = arith.addf %13, %18 : vector<8x768xf32>
    %c0_3 = arith.constant 0 : index
    %c0_4 = arith.constant 0 : index
    %20 = vector.load %arg4[%c0_3, %c0_4] : memref<1x768xf32, #tpu.memory_space<vmem>>, vector<1x768xf32>
    %21 = vector.broadcast %20 : vector<1x768xf32> to vector<8x768xf32>
    %22 = arith.addf %19, %21 : vector<8x768xf32>
    %cst = arith.constant 0.000000e+00 : f32
    %23 = vector.broadcast %cst : f32 to vector<8x768xf32>
    %24 = arith.maximumf %22, %23 : vector<8x768xf32>
    %25 = arith.truncf %24 : vector<8x768xf32> to vector<8x768xbf16>
    %c0_5 = arith.constant 0 : index
    %c0_6 = arith.constant 0 : index
    %26 = vector.load %arg5[%c0_5, %c0_6] : memref<768x768xbf16, #tpu.memory_space<vmem>>, vector<768x768xbf16>
    %cst_7 = arith.constant dense<0.000000e+00> : vector<8x768xf32>
    %27 = tpu.matmul %25, %26, %cst_7 {dimension_numbers = #tpu.dot_dimension_numbers<[1], [0], [0], [1], [0, 0, 1, 1], [], []>} : vector<8x768xbf16>, vector<768x768xbf16>, vector<8x768xf32> -> vector<8x768xf32>
    %c0_8 = arith.constant 0 : index
    %c0_9 = arith.constant 0 : index
    %28 = vector.load %arg6[%c0_8, %c0_9] : memref<1x768xf32, #tpu.memory_space<vmem>>, vector<1x768xf32>
    %29 = vector.broadcast %28 : vector<1x768xf32> to vector<8x768xf32>
    %30 = arith.addf %27, %29 : vector<8x768xf32>
    %cst_10 = arith.constant 0.000000e+00 : f32
    %31 = vector.broadcast %cst_10 : f32 to vector<8x768xf32>
    %32 = arith.maximumf %30, %31 : vector<8x768xf32>
    %33 = arith.truncf %32 : vector<8x768xf32> to vector<8x768xbf16>
    %c0_11 = arith.constant 0 : index
    %c0_12 = arith.constant 0 : index
    %34 = vector.load %arg7[%c0_11, %c0_12] : memref<768x12xbf16, #tpu.memory_space<vmem>>, vector<768x12xbf16>
    %cst_13 = arith.constant dense<0.000000e+00> : vector<8x12xf32>
    %35 = tpu.matmul %33, %34, %cst_13 {dimension_numbers = #tpu.dot_dimension_numbers<[1], [0], [0], [1], [0, 0, 1, 1], [], []>} : vector<8x768xbf16>, vector<768x12xbf16>, vector<8x12xf32> -> vector<8x12xf32>
    %c0_14 = arith.constant 0 : index
    %c0_15 = arith.constant 0 : index
    %36 = vector.load %arg8[%c0_14, %c0_15] : memref<1x12xf32, #tpu.memory_space<vmem>>, vector<1x12xf32>
    %37 = vector.broadcast %36 : vector<1x12xf32> to vector<8x12xf32>
    %38 = arith.addf %35, %37 : vector<8x12xf32>
    %39 = vector.extract_strided_slice %38 {offsets = [0, 0], sizes = [8, 6], strides = [1, 1]} : vector<8x12xf32> to vector<8x6xf32>
    %40 = vector.extract_strided_slice %38 {offsets = [0, 6], sizes = [8, 6], strides = [1, 1]} : vector<8x12xf32> to vector<8x6xf32>
    %cst_16 = arith.constant -4.000000e+00 : f32
    %cst_17 = arith.constant 1.500000e+01 : f32
    %41 = vector.broadcast %cst_16 : f32 to vector<8x6xf32>
    %42 = arith.maximumf %41, %40 : vector<8x6xf32>
    %43 = vector.broadcast %cst_17 : f32 to vector<8x6xf32>
    %44 = arith.minimumf %43, %42 : vector<8x6xf32>
    %45 = math.exp %44 : vector<8x6xf32>
    %c0_18 = arith.constant 0 : index
    %c0_19 = arith.constant 0 : index
    %46 = vector.load %arg2[%c0_18, %c0_19] : memref<8x6xf32, #tpu.memory_space<vmem>>, vector<8x6xf32>
    %47 = arith.mulf %45, %46 : vector<8x6xf32>
    %48 = arith.addf %39, %47 : vector<8x6xf32>
    %49 = arith.truncf %48 : vector<8x6xf32> to vector<8x6xbf16>
    %c0_20 = arith.constant 0 : index
    %c0_21 = arith.constant 0 : index
    %50 = vector.load %arg9[%c0_20, %c0_21] : memref<6x768xbf16, #tpu.memory_space<vmem>>, vector<6x768xbf16>
    %cst_22 = arith.constant dense<0.000000e+00> : vector<8x768xf32>
    %51 = tpu.matmul %49, %50, %cst_22 {dimension_numbers = #tpu.dot_dimension_numbers<[1], [0], [0], [1], [0, 0, 1, 1], [], []>} : vector<8x6xbf16>, vector<6x768xbf16>, vector<8x768xf32> -> vector<8x768xf32>
    %c0_23 = arith.constant 0 : index
    %c0_24 = arith.constant 0 : index
    %52 = vector.load %arg10[%c0_23, %c0_24] : memref<1x768xf32, #tpu.memory_space<vmem>>, vector<1x768xf32>
    %53 = vector.broadcast %52 : vector<1x768xf32> to vector<8x768xf32>
    %54 = arith.addf %51, %53 : vector<8x768xf32>
    %cst_25 = arith.constant 0.000000e+00 : f32
    %55 = vector.broadcast %cst_25 : f32 to vector<8x768xf32>
    %56 = arith.maximumf %54, %55 : vector<8x768xf32>
    %57 = arith.truncf %56 : vector<8x768xf32> to vector<8x768xbf16>
    %c0_26 = arith.constant 0 : index
    %c0_27 = arith.constant 0 : index
    %58 = vector.load %arg11[%c0_26, %c0_27] : memref<768x768xbf16, #tpu.memory_space<vmem>>, vector<768x768xbf16>
    %cst_28 = arith.constant dense<0.000000e+00> : vector<8x768xf32>
    %59 = tpu.matmul %57, %58, %cst_28 {dimension_numbers = #tpu.dot_dimension_numbers<[1], [0], [0], [1], [0, 0, 1, 1], [], []>} : vector<8x768xbf16>, vector<768x768xbf16>, vector<8x768xf32> -> vector<8x768xf32>
    %c0_29 = arith.constant 0 : index
    %c0_30 = arith.constant 0 : index
    %60 = vector.load %arg12[%c0_29, %c0_30] : memref<1x768xf32, #tpu.memory_space<vmem>>, vector<1x768xf32>
    %61 = vector.broadcast %60 : vector<1x768xf32> to vector<8x768xf32>
    %62 = arith.addf %59, %61 : vector<8x768xf32>
    %cst_31 = arith.constant 0.000000e+00 : f32
    %63 = vector.broadcast %cst_31 : f32 to vector<8x768xf32>
    %64 = arith.maximumf %62, %63 : vector<8x768xf32>
    %65 = arith.truncf %64 : vector<8x768xf32> to vector<8x768xbf16>
    %c0_32 = arith.constant 0 : index
    %c0_33 = arith.constant 0 : index
    %66 = vector.load %arg13[%c0_32, %c0_33] : memref<768x3xbf16, #tpu.memory_space<vmem>>, vector<768x3xbf16>
    %cst_34 = arith.constant dense<0.000000e+00> : vector<8x3xf32>
    %67 = tpu.matmul %65, %66, %cst_34 {dimension_numbers = #tpu.dot_dimension_numbers<[1], [0], [0], [1], [0, 0, 1, 1], [], []>} : vector<8x768xbf16>, vector<768x3xbf16>, vector<8x3xf32> -> vector<8x3xf32>
    %c0_35 = arith.constant 0 : index
    %c0_36 = arith.constant 0 : index
    %68 = vector.load %arg14[%c0_35, %c0_36] : memref<1x3xf32, #tpu.memory_space<vmem>>, vector<1x3xf32>
    %69 = vector.broadcast %68 : vector<1x3xf32> to vector<8x3xf32>
    %70 = arith.addf %67, %69 : vector<8x3xf32>
    %71 = math.tanh %70 : vector<8x3xf32>
    %cst_37 = arith.constant 1.000000e+00 : f32
    %72 = vector.broadcast %cst_37 : f32 to vector<8x3xf32>
    %73 = arith.mulf %72, %71 : vector<8x3xf32>
    %c0_38 = arith.constant 0 : index
    %c0_39 = arith.constant 0 : index
    %74 = vector.load %arg15[%c0_38, %c0_39] : memref<8x3xf32, #tpu.memory_space<vmem>>, vector<8x3xf32>
    tpu.vector_store %arg15[%c0_38, %c0_39], %73 {strides = array<i32>} : memref<8x3xf32, #tpu.memory_space<vmem>>, vector<8x3xf32>,
    %c0_40 = arith.constant 0 : index
    %c0_41 = arith.constant 0 : index
    %75 = vector.load %arg16[%c0_40, %c0_41] : memref<8x6xf32, #tpu.memory_space<vmem>>, vector<8x6xf32>
    tpu.vector_store %arg16[%c0_40, %c0_41], %39 {strides = array<i32>} : memref<8x6xf32, #tpu.memory_space<vmem>>, vector<8x6xf32>,
    %c0_42 = arith.constant 0 : index
    %c0_43 = arith.constant 0 : index
    %76 = vector.load %arg17[%c0_42, %c0_43] : memref<8x6xf32, #tpu.memory_space<vmem>>, vector<8x6xf32>
    tpu.vector_store %arg17[%c0_42, %c0_43], %45 {strides = array<i32>} : memref<8x6xf32, #tpu.memory_space<vmem>>, vector<8x6xf32>,
    return
  }
  func.func @transform_0(%arg0: i32) -> (i32, i32) {
    %c0_i32 = arith.constant 0 : i32
    %c0_i32_0 = arith.constant 0 : i32
    return %arg0, %c0_i32 : i32, i32
  }
  func.func @transform_1(%arg0: i32) -> (i32, i32) {
    %c0_i32 = arith.constant 0 : i32
    %c0_i32_0 = arith.constant 0 : i32
    return %arg0, %c0_i32 : i32, i32
  }
  func.func @transform_2(%arg0: i32) -> (i32, i32) {
    %c0_i32 = arith.constant 0 : i32
    %c0_i32_0 = arith.constant 0 : i32
    %c0_i32_1 = arith.constant 0 : i32
    return %c0_i32, %c0_i32_0 : i32, i32
  }
  func.func @transform_3(%arg0: i32) -> (i32, i32) {
    %c0_i32 = arith.constant 0 : i32
    %c0_i32_0 = arith.constant 0 : i32
    %c0_i32_1 = arith.constant 0 : i32
    return %c0_i32, %c0_i32_0 : i32, i32
  }
  func.func @transform_4(%arg0: i32) -> (i32, i32) {
    %c0_i32 = arith.constant 0 : i32
    %c0_i32_0 = arith.constant 0 : i32
    %c0_i32_1 = arith.constant 0 : i32
    return %c0_i32, %c0_i32_0 : i32, i32
  }
  func.func @transform_5(%arg0: i32) -> (i32, i32) {
    %c0_i32 = arith.constant 0 : i32
    %c0_i32_0 = arith.constant 0 : i32
    %c0_i32_1 = arith.constant 0 : i32
    return %c0_i32, %c0_i32_0 : i32, i32
  }
  func.func @transform_6(%arg0: i32) -> (i32, i32) {
    %c0_i32 = arith.constant 0 : i32
    %c0_i32_0 = arith.constant 0 : i32
    %c0_i32_1 = arith.constant 0 : i32
    return %c0_i32, %c0_i32_0 : i32, i32
  }
  func.func @transform_7(%arg0: i32) -> (i32, i32) {
    %c0_i32 = arith.constant 0 : i32
    %c0_i32_0 = arith.constant 0 : i32
    %c0_i32_1 = arith.constant 0 : i32
    return %c0_i32, %c0_i32_0 : i32, i32
  }
  func.func @transform_8(%arg0: i32) -> (i32, i32) {
    %c0_i32 = arith.constant 0 : i32
    %c0_i32_0 = arith.constant 0 : i32
    %c0_i32_1 = arith.constant 0 : i32
    return %c0_i32, %c0_i32_0 : i32, i32
  }
  func.func @transform_9(%arg0: i32) -> (i32, i32) {
    %c0_i32 = arith.constant 0 : i32
    %c0_i32_0 = arith.constant 0 : i32
    %c0_i32_1 = arith.constant 0 : i32
    return %c0_i32, %c0_i32_0 : i32, i32
  }
  func.func @transform_10(%arg0: i32) -> (i32, i32) {
    %c0_i32 = arith.constant 0 : i32
    %c0_i32_0 = arith.constant 0 : i32
    %c0_i32_1 = arith.constant 0 : i32
    return %c0_i32, %c0_i32_0 : i32, i32
  }
  func.func @transform_11(%arg0: i32) -> (i32, i32) {
    %c0_i32 = arith.constant 0 : i32
    %c0_i32_0 = arith.constant 0 : i32
    %c0_i32_1 = arith.constant 0 : i32
    return %c0_i32, %c0_i32_0 : i32, i32
  }
  func.func @transform_12(%arg0: i32) -> (i32, i32) {
    %c0_i32 = arith.constant 0 : i32
    %c0_i32_0 = arith.constant 0 : i32
    %c0_i32_1 = arith.constant 0 : i32
    return %c0_i32, %c0_i32_0 : i32, i32
  }
  func.func @transform_13(%arg0: i32) -> (i32, i32) {
    %c0_i32 = arith.constant 0 : i32
    %c0_i32_0 = arith.constant 0 : i32
    %c0_i32_1 = arith.constant 0 : i32
    return %c0_i32, %c0_i32_0 : i32, i32
  }
  func.func @transform_14(%arg0: i32) -> (i32, i32) {
    %c0_i32 = arith.constant 0 : i32
    %c0_i32_0 = arith.constant 0 : i32
    return %arg0, %c0_i32 : i32, i32
  }
  func.func @transform_15(%arg0: i32) -> (i32, i32) {
    %c0_i32 = arith.constant 0 : i32
    %c0_i32_0 = arith.constant 0 : i32
    return %arg0, %c0_i32 : i32, i32
  }
  func.func @transform_16(%arg0: i32) -> (i32, i32) {
    %c0_i32 = arith.constant 0 : i32
    %c0_i32_0 = arith.constant 0 : i32
    return %arg0, %c0_i32 : i32, i32
  }
}

</mosaic_0001>

<llo_original>
// kernel: tpu_custom_call.1
$region0: #{tpu_custom_call.1}
  #allocation0 [shape = 'u32[]', space=smem, size = 0x4, offset = 0x4, fixed_abs, tag = 'smem constant byte address 0x4 - core index']
  #allocation1 [shape = 'u32[144,128]{1,0:T(1,128)}', space=vmem, size = 0x12000, scoped, tag = 'internal scratch']
  %s0 = inlined_call_operand.vmem [shape: f32[32,3], index: 0, kind: input, shape index: {}]
  %s1 = inlined_call_operand.vmem [shape: f32[32,6], index: 1, kind: input, shape index: {}]
  %s2 = inlined_call_operand.hbm [shape: bf16[3,768], index: 2, kind: input, shape index: {}]
  %s3 = inlined_call_operand.hbm [shape: f32[1,768], index: 3, kind: input, shape index: {}]
  %s4 = inlined_call_operand.hbm [shape: bf16[768,768], index: 4, kind: input, shape index: {}]
  %s5 = inlined_call_operand.hbm [shape: f32[1,768], index: 5, kind: input, shape index: {}]
  %s6 = inlined_call_operand.vmem [shape: bf16[768,12], index: 6, kind: input, shape index: {}]
  %s7 = inlined_call_operand.hbm [shape: f32[1,12], index: 7, kind: input, shape index: {}]
  %s8 = inlined_call_operand.hbm [shape: bf16[6,768], index: 8, kind: input, shape index: {}]
  %s9 = inlined_call_operand.hbm [shape: f32[1,768], index: 9, kind: input, shape index: {}]
  %s10 = inlined_call_operand.hbm [shape: bf16[768,768], index: 10, kind: input, shape index: {}]
  %s11 = inlined_call_operand.hbm [shape: f32[1,768], index: 11, kind: input, shape index: {}]
  %s12 = inlined_call_operand.vmem [shape: bf16[768,3], index: 12, kind: input, shape index: {}]
  %s13 = inlined_call_operand.hbm [shape: f32[1,3], index: 13, kind: input, shape index: {}]
  %s14 = inlined_call_operand.vmem [shape: f32[32,3], index: 14, kind: output, shape index: {0}]
  %s15 = inlined_call_operand.vmem [shape: f32[32,6], index: 15, kind: output, shape index: {1}]
  %s16 = inlined_call_operand.vmem [shape: f32[32,6], index: 16, kind: output, shape index: {2}]
  %17 = xla_tuple %s14, %s15, %s16
  %s18 = sld [smem:[#allocation0]]
  $region145: #{tpu_custom_call.1} parent=0
    _
  %s20 = ssub.s32 1, %s18
  %s21 = scalar_select 0, %s20, %s18
  $region1: #{tpu_custom_call.1} parent=0
    #allocation2 [shape = 'u8[6144]{0}', space=vmem, size = 0x1800, scoped, tag = 'input window, operand 2, single buffered']
    #allocation3 [shape = 's32[2]{0}', space=sflag, size = 0x8, scoped, tag = 'scoped memory for tpu_custom_call.1']
    #allocation4 [shape = 'u8[3072]{0}', space=vmem, size = 0xc00, scoped, tag = 'input window, operand 3, single buffered']
    #allocation5 [shape = 's32[1]{0}', space=sflag, size = 0x4, scoped, tag = 'scoped memory for tpu_custom_call.1']
    #allocation6 [shape = 'u8[1179648]{0}', space=vmem, size = 0x120000, scoped, tag = 'input window, operand 4, single buffered']
    #allocation7 [shape = 'u8[3072]{0}', space=vmem, size = 0xc00, scoped, tag = 'input window, operand 5, single buffered']
    #allocation8 [shape = 's32[1]{0}', space=sflag, size = 0x4, scoped, tag = 'scoped memory for tpu_custom_call.1']
    #allocation9 [shape = 'u8[512]{0}', space=vmem, size = 0x400, scoped, tag = 'input window, operand 7, single buffered']
    #allocation10 [shape = 'u8[12288]{0}', space=vmem, size = 0x3000, scoped, tag = 'input window, operand 8, single buffered']
    #allocation11 [shape = 's32[1]{0}', space=sflag, size = 0x4, scoped, tag = 'scoped memory for tpu_custom_call.1']
    #allocation12 [shape = 'u8[3072]{0}', space=vmem, size = 0xc00, scoped, tag = 'input window, operand 9, single buffered']
    #allocation13 [shape = 'u8[1179648]{0}', space=vmem, size = 0x120000, scoped, tag = 'input window, operand 10, single buffered']
    #allocation14 [shape = 's32[1]{0}', space=sflag, size = 0x4, scoped, tag = 'scoped memory for tpu_custom_call.1']
    #allocation15 [shape = 'u8[3072]{0}', space=vmem, size = 0xc00, scoped, tag = 'input window, operand 11, single buffered']
    #allocation16 [shape = 'u8[512]{0}', space=vmem, size = 0x400, scoped, tag = 'input window, operand 13, single buffered']
    #allocation17 [shape = 's32[1]{0}', space=sflag, size = 0x4, scoped, tag = 'scoped memory for tpu_custom_call.1']
    %22 = vsyncpa [#allocation3], 0
    %23 = vsyncpa [#allocation5], 0
    %24 = vsyncpa [#allocation8], 0
    %25 = vsyncpa [#allocation11], 0
    %26 = vsyncpa [#allocation14], 0
    %27 = vsyncpa [#allocation17], 0
    loop: start=0, step=1, limit=6
    $region2: #{tpu_custom_call.1} parent=1 // loop_pre_header
      _
    $region3: #{tpu_custom_call.1} parent=1 // loop_header
      %s29 = sphi 0, %s33
      %p30 = scmp.ge.s32.totalorder %s29, 6
      %s39 = sphi 0, %s41
      %s42 = sphi 0, %s39
      %s43 = sphi 0, %s42
      %s59 = sphi 0, %s43
      %s65 = sphi 0, %s67
      %s68 = sphi 0, %s65
      %s69 = sphi 0, %s68
      %s85 = sphi 0, %s69
      %s89 = sphi 0, %s89
      %s91 = sphi 0, %s89
      %s92 = sphi 0, %s91
      %s106 = sphi 0, %s92
      %s110 = sphi 0, %s110
      %s112 = sphi 0, %s110
      %s113 = sphi 0, %s112
      %s127 = sphi 0, %s113
      %s131 = sphi 0, %s131
      %s133 = sphi 0, %s131
      %s134 = sphi 0, %s133
      %s148 = sphi 0, %s134
      %s152 = sphi 0, %s152
      %s154 = sphi 0, %s152
      %s155 = sphi 0, %s154
      %s169 = sphi 0, %s155
      %s173 = sphi 0, %s173
      %s175 = sphi 0, %s173
      %s176 = sphi 0, %s175
      %s190 = sphi 0, %s176
      %s194 = sphi 0, %s194
      %s196 = sphi 0, %s194
      %s197 = sphi 0, %s196
      %s211 = sphi 0, %s197
      %s215 = sphi 0, %s215
      %s217 = sphi 0, %s215
      %s218 = sphi 0, %s217
      %s232 = sphi 0, %s218
      %s236 = sphi 0, %s236
      %s238 = sphi 0, %s236
      %s239 = sphi 0, %s238
      %s253 = sphi 0, %s239
      %s257 = sphi 0, %s257
      %s259 = sphi 0, %s257
      %s260 = sphi 0, %s259
      %s274 = sphi 0, %s260
      %s278 = sphi 0, %s278
      %s280 = sphi 0, %s278
      %s281 = sphi 0, %s280
      %s295 = sphi 0, %s281
      %s299 = sphi 0, %s299
      %s301 = sphi 0, %s299
      %s302 = sphi 0, %s301
      %s316 = sphi 0, %s302
      %s320 = sphi 0, %s320
      %s322 = sphi 0, %s320
      %s323 = sphi 0, %s322
      %s337 = sphi 0, %s323
      %s343 = sphi 0, %s345
      %s346 = sphi 0, %s343
      %s347 = sphi 0, %s346
      %s363 = sphi 0, %s347
      %s369 = sphi 0, %s371
      %s372 = sphi 0, %s369
      %s373 = sphi 0, %s372
      %s389 = sphi 0, %s373
      %s395 = sphi 0, %s397
      %s398 = sphi 0, %s395
      %s399 = sphi 0, %s398
      %s415 = sphi 0, %s399
    $region4: #{tpu_custom_call.1} parent=1 // loop_header_branch
      %32 = sbr.rel (%p30) target = $region8
    $region5: #{tpu_custom_call.1} parent=1 // loop_body
      %s34 = ssub.s32 %s29, 1
      %s35 = ssub.s32 %s29, 2
      %s36 = sadd.s32 %s29, 1
      %s37 = ssub.s32 %s29, %s36
      %p38 = scmp.eq.s32.totalorder %s37, 0
      %s40 = sadd.s32 %s39, 1
      %s41 = scalar_select %p38, %s39, %s40
      %p44 = pneg %p38
      %p45 = scmp.eq.s32.totalorder %s29, 3
      %p46 = por %p44, %p45
      %p47 = scmp.ne.s32.totalorder %s39, %s42
      %p48 = scmp.eq.s32.totalorder %s29, 0
      %p49 = por %p47, %p48
      %p50 = scmp.ne.s32.totalorder %s39, %s42
      %p51 = scmp.eq.s32.totalorder %s34, 3
      %p52 = por %p50, %p51
      %p53 = scmp.ne.s32.totalorder %s42, %s43
      %p54 = scmp.eq.s32.totalorder %s34, 0
      %p55 = por %p53, %p54
      %p56 = scmp.ne.s32.totalorder %s42, %s43
      %p57 = scmp.eq.s32.totalorder %s35, 3
      %p58 = por %p56, %p57
      %p60 = scmp.ne.s32.totalorder %s43, %s59
      %p61 = scmp.eq.s32.totalorder %s35, 0
      %p62 = por %p60, %p61
      %s63 = ssub.s32 %s29, %s36
      %p64 = scmp.eq.s32.totalorder %s63, 0
      %s66 = sadd.s32 %s65, 1
      %s67 = scalar_select %p64, %s65, %s66
      %p70 = pneg %p64
      %p71 = scmp.eq.s32.totalorder %s29, 3
      %p72 = por %p70, %p71
      %p73 = scmp.ne.s32.totalorder %s65, %s68
      %p74 = scmp.eq.s32.totalorder %s29, 0
      %p75 = por %p73, %p74
      %p76 = scmp.ne.s32.totalorder %s65, %s68
      %p77 = scmp.eq.s32.totalorder %s34, 3
      %p78 = por %p76, %p77
      %p79 = scmp.ne.s32.totalorder %s68, %s69
      %p80 = scmp.eq.s32.totalorder %s34, 0
      %p81 = por %p79, %p80
      %p82 = scmp.ne.s32.totalorder %s68, %s69
      %p83 = scmp.eq.s32.totalorder %s35, 3
      %p84 = por %p82, %p83
      %p86 = scmp.ne.s32.totalorder %s69, %s85
      %p87 = scmp.eq.s32.totalorder %s35, 0
      %p88 = por %p86, %p87
      %s90 = sadd.s32 %s89, 1
      %p93 = scmp.eq.s32.totalorder %s29, 3
      %p94 = scmp.ne.s32.totalorder %s89, %s91
      %p95 = scmp.eq.s32.totalorder %s29, 0
      %p96 = por %p94, %p95
      %p97 = scmp.ne.s32.totalorder %s89, %s91
      %p98 = scmp.eq.s32.totalorder %s34, 3
      %p99 = por %p97, %p98
      %p100 = scmp.ne.s32.totalorder %s91, %s92
      %p101 = scmp.eq.s32.totalorder %s34, 0
      %p102 = por %p100, %p101
      %p103 = scmp.ne.s32.totalorder %s91, %s92
      %p104 = scmp.eq.s32.totalorder %s35, 3
      %p105 = por %p103, %p104
      %p107 = scmp.ne.s32.totalorder %s92, %s106
      %p108 = scmp.eq.s32.totalorder %s35, 0
      %p109 = por %p107, %p108
      %s111 = sadd.s32 %s110, 1
      %p114 = scmp.eq.s32.totalorder %s29, 3
      %p115 = scmp.ne.s32.totalorder %s110, %s112
      %p116 = scmp.eq.s32.totalorder %s29, 0
      %p117 = por %p115, %p116
      %p118 = scmp.ne.s32.totalorder %s110, %s112
      %p119 = scmp.eq.s32.totalorder %s34, 3
      %p120 = por %p118, %p119
      %p121 = scmp.ne.s32.totalorder %s112, %s113
      %p122 = scmp.eq.s32.totalorder %s34, 0
      %p123 = por %p121, %p122
      %p124 = scmp.ne.s32.totalorder %s112, %s113
      %p125 = scmp.eq.s32.totalorder %s35, 3
      %p126 = por %p124, %p125
      %p128 = scmp.ne.s32.totalorder %s113, %s127
      %p129 = scmp.eq.s32.totalorder %s35, 0
      %p130 = por %p128, %p129
      %s132 = sadd.s32 %s131, 1
      %p135 = scmp.eq.s32.totalorder %s29, 3
      %p136 = scmp.ne.s32.totalorder %s131, %s133
      %p137 = scmp.eq.s32.totalorder %s29, 0
      %p138 = por %p136, %p137
      %p139 = scmp.ne.s32.totalorder %s131, %s133
      %p140 = scmp.eq.s32.totalorder %s34, 3
      %p141 = por %p139, %p140
      %p142 = scmp.ne.s32.totalorder %s133, %s134
      %p143 = scmp.eq.s32.totalorder %s34, 0
      %p144 = por %p142, %p143
      %p145 = scmp.ne.s32.totalorder %s133, %s134
      %p146 = scmp.eq.s32.totalorder %s35, 3
      %p147 = por %p145, %p146
      %p149 = scmp.ne.s32.totalorder %s134, %s148
      %p150 = scmp.eq.s32.totalorder %s35, 0
      %p151 = por %p149, %p150
      %s153 = sadd.s32 %s152, 1
      %p156 = scmp.eq.s32.totalorder %s29, 3
      %p157 = scmp.ne.s32.totalorder %s152, %s154
      %p158 = scmp.eq.s32.totalorder %s29, 0
      %p159 = por %p157, %p158
      %p160 = scmp.ne.s32.totalorder %s152, %s154
      %p161 = scmp.eq.s32.totalorder %s34, 3
      %p162 = por %p160, %p161
      %p163 = scmp.ne.s32.totalorder %s154, %s155
      %p164 = scmp.eq.s32.totalorder %s34, 0
      %p165 = por %p163, %p164
      %p166 = scmp.ne.s32.totalorder %s154, %s155
      %p167 = scmp.eq.s32.totalorder %s35, 3
      %p168 = por %p166, %p167
      %p170 = scmp.ne.s32.totalorder %s155, %s169
      %p171 = scmp.eq.s32.totalorder %s35, 0
      %p172 = por %p170, %p171
      %s174 = sadd.s32 %s173, 1
      %p177 = scmp.eq.s32.totalorder %s29, 3
      %p178 = scmp.ne.s32.totalorder %s173, %s175
      %p179 = scmp.eq.s32.totalorder %s29, 0
      %p180 = por %p178, %p179
      %p181 = scmp.ne.s32.totalorder %s173, %s175
      %p182 = scmp.eq.s32.totalorder %s34, 3
      %p183 = por %p181, %p182
      %p184 = scmp.ne.s32.totalorder %s175, %s176
      %p185 = scmp.eq.s32.totalorder %s34, 0
      %p186 = por %p184, %p185
      %p187 = scmp.ne.s32.totalorder %s175, %s176
      %p188 = scmp.eq.s32.totalorder %s35, 3
      %p189 = por %p187, %p188
      %p191 = scmp.ne.s32.totalorder %s176, %s190
      %p192 = scmp.eq.s32.totalorder %s35, 0
      %p193 = por %p191, %p192
      %s195 = sadd.s32 %s194, 1
      %p198 = scmp.eq.s32.totalorder %s29, 3
      %p199 = scmp.ne.s32.totalorder %s194, %s196
      %p200 = scmp.eq.s32.totalorder %s29, 0
      %p201 = por %p199, %p200
      %p202 = scmp.ne.s32.totalorder %s194, %s196
      %p203 = scmp.eq.s32.totalorder %s34, 3
      %p204 = por %p202, %p203
      %p205 = scmp.ne.s32.totalorder %s196, %s197
      %p206 = scmp.eq.s32.totalorder %s34, 0
      %p207 = por %p205, %p206
      %p208 = scmp.ne.s32.totalorder %s196, %s197
      %p209 = scmp.eq.s32.totalorder %s35, 3
      %p210 = por %p208, %p209
      %p212 = scmp.ne.s32.totalorder %s197, %s211
      %p213 = scmp.eq.s32.totalorder %s35, 0
      %p214 = por %p212, %p213
      %s216 = sadd.s32 %s215, 1
      %p219 = scmp.eq.s32.totalorder %s29, 3
      %p220 = scmp.ne.s32.totalorder %s215, %s217
      %p221 = scmp.eq.s32.totalorder %s29, 0
      %p222 = por %p220, %p221
      %p223 = scmp.ne.s32.totalorder %s215, %s217
      %p224 = scmp.eq.s32.totalorder %s34, 3
      %p225 = por %p223, %p224
      %p226 = scmp.ne.s32.totalorder %s217, %s218
      %p227 = scmp.eq.s32.totalorder %s34, 0
      %p228 = por %p226, %p227
      %p229 = scmp.ne.s32.totalorder %s217, %s218
      %p230 = scmp.eq.s32.totalorder %s35, 3
      %p231 = por %p229, %p230
      %p233 = scmp.ne.s32.totalorder %s218, %s232
      %p234 = scmp.eq.s32.totalorder %s35, 0
      %p235 = por %p233, %p234
      %s237 = sadd.s32 %s236, 1
      %p240 = scmp.eq.s32.totalorder %s29, 3
      %p241 = scmp.ne.s32.totalorder %s236, %s238
      %p242 = scmp.eq.s32.totalorder %s29, 0
      %p243 = por %p241, %p242
      %p244 = scmp.ne.s32.totalorder %s236, %s238
      %p245 = scmp.eq.s32.totalorder %s34, 3
      %p246 = por %p244, %p245
      %p247 = scmp.ne.s32.totalorder %s238, %s239
      %p248 = scmp.eq.s32.totalorder %s34, 0
      %p249 = por %p247, %p248
      %p250 = scmp.ne.s32.totalorder %s238, %s239
      %p251 = scmp.eq.s32.totalorder %s35, 3
      %p252 = por %p250, %p251
      %p254 = scmp.ne.s32.totalorder %s239, %s253
      %p255 = scmp.eq.s32.totalorder %s35, 0
      %p256 = por %p254, %p255
      %s258 = sadd.s32 %s257, 1
      %p261 = scmp.eq.s32.totalorder %s29, 3
      %p262 = scmp.ne.s32.totalorder %s257, %s259
      %p263 = scmp.eq.s32.totalorder %s29, 0
      %p264 = por %p262, %p263
      %p265 = scmp.ne.s32.totalorder %s257, %s259
      %p266 = scmp.eq.s32.totalorder %s34, 3
      %p267 = por %p265, %p266
      %p268 = scmp.ne.s32.totalorder %s259, %s260
      %p269 = scmp.eq.s32.totalorder %s34, 0
      %p270 = por %p268, %p269
      %p271 = scmp.ne.s32.totalorder %s259, %s260
      %p272 = scmp.eq.s32.totalorder %s35, 3
      %p273 = por %p271, %p272
      %p275 = scmp.ne.s32.totalorder %s260, %s274
      %p276 = scmp.eq.s32.totalorder %s35, 0
      %p277 = por %p275, %p276
      %s279 = sadd.s32 %s278, 1
      %p282 = scmp.eq.s32.totalorder %s29, 3
      %p283 = scmp.ne.s32.totalorder %s278, %s280
      %p284 = scmp.eq.s32.totalorder %s29, 0
      %p285 = por %p283, %p284
      %p286 = scmp.ne.s32.totalorder %s278, %s280
      %p287 = scmp.eq.s32.totalorder %s34, 3
      %p288 = por %p286, %p287
      %p289 = scmp.ne.s32.totalorder %s280, %s281
      %p290 = scmp.eq.s32.totalorder %s34, 0
      %p291 = por %p289, %p290
      %p292 = scmp.ne.s32.totalorder %s280, %s281
      %p293 = scmp.eq.s32.totalorder %s35, 3
      %p294 = por %p292, %p293
      %p296 = scmp.ne.s32.totalorder %s281, %s295
      %p297 = scmp.eq.s32.totalorder %s35, 0
      %p298 = por %p296, %p297
      %s300 = sadd.s32 %s299, 1
      %p303 = scmp.eq.s32.totalorder %s29, 3
      %p304 = scmp.ne.s32.totalorder %s299, %s301
      %p305 = scmp.eq.s32.totalorder %s29, 0
      %p306 = por %p304, %p305
      %p307 = scmp.ne.s32.totalorder %s299, %s301
      %p308 = scmp.eq.s32.totalorder %s34, 3
      %p309 = por %p307, %p308
      %p310 = scmp.ne.s32.totalorder %s301, %s302
      %p311 = scmp.eq.s32.totalorder %s34, 0
      %p312 = por %p310, %p311
      %p313 = scmp.ne.s32.totalorder %s301, %s302
      %p314 = scmp.eq.s32.totalorder %s35, 3
      %p315 = por %p313, %p314
      %p317 = scmp.ne.s32.totalorder %s302, %s316
      %p318 = scmp.eq.s32.totalorder %s35, 0
      %p319 = por %p317, %p318
      %s321 = sadd.s32 %s320, 1
      %p324 = scmp.eq.s32.totalorder %s29, 3
      %p325 = scmp.ne.s32.totalorder %s320, %s322
      %p326 = scmp.eq.s32.totalorder %s29, 0
      %p327 = por %p325, %p326
      %p328 = scmp.ne.s32.totalorder %s320, %s322
      %p329 = scmp.eq.s32.totalorder %s34, 3
      %p330 = por %p328, %p329
      %p331 = scmp.ne.s32.totalorder %s322, %s323
      %p332 = scmp.eq.s32.totalorder %s34, 0
      %p333 = por %p331, %p332
      %p334 = scmp.ne.s32.totalorder %s322, %s323
      %p335 = scmp.eq.s32.totalorder %s35, 3
      %p336 = por %p334, %p335
      %p338 = scmp.ne.s32.totalorder %s323, %s337
      %p339 = scmp.eq.s32.totalorder %s35, 0
      %p340 = por %p338, %p339
      %s341 = ssub.s32 %s29, %s36
      %p342 = scmp.eq.s32.totalorder %s341, 0
      %s344 = sadd.s32 %s343, 1
      %s345 = scalar_select %p342, %s343, %s344
      %p348 = pneg %p342
      %p349 = scmp.eq.s32.totalorder %s29, 3
      %p350 = por %p348, %p349
      %p351 = scmp.ne.s32.totalorder %s343, %s346
      %p352 = scmp.eq.s32.totalorder %s29, 0
      %p353 = por %p351, %p352
      %p354 = scmp.ne.s32.totalorder %s343, %s346
      %p355 = scmp.eq.s32.totalorder %s34, 3
      %p356 = por %p354, %p355
      %p357 = scmp.ne.s32.totalorder %s346, %s347
      %p358 = scmp.eq.s32.totalorder %s34, 0
      %p359 = por %p357, %p358
      %p360 = scmp.ne.s32.totalorder %s346, %s347
      %p361 = scmp.eq.s32.totalorder %s35, 3
      %p362 = por %p360, %p361
      %p364 = scmp.ne.s32.totalorder %s347, %s363
      %p365 = scmp.eq.s32.totalorder %s35, 0
      %p366 = por %p364, %p365
      %s367 = ssub.s32 %s29, %s36
      %p368 = scmp.eq.s32.totalorder %s367, 0
      %s370 = sadd.s32 %s369, 1
      %s371 = scalar_select %p368, %s369, %s370
      %p374 = pneg %p368
      %p375 = scmp.eq.s32.totalorder %s29, 3
      %p376 = por %p374, %p375
      %p377 = scmp.ne.s32.totalorder %s369, %s372
      %p378 = scmp.eq.s32.totalorder %s29, 0
      %p379 = por %p377, %p378
      %p380 = scmp.ne.s32.totalorder %s369, %s372
      %p381 = scmp.eq.s32.totalorder %s34, 3
      %p382 = por %p380, %p381
      %p383 = scmp.ne.s32.totalorder %s372, %s373
      %p384 = scmp.eq.s32.totalorder %s34, 0
      %p385 = por %p383, %p384
      %p386 = scmp.ne.s32.totalorder %s372, %s373
      %p387 = scmp.eq.s32.totalorder %s35, 3
      %p388 = por %p386, %p387
      %p390 = scmp.ne.s32.totalorder %s373, %s389
      %p391 = scmp.eq.s32.totalorder %s35, 0
      %p392 = por %p390, %p391
      %s393 = ssub.s32 %s29, %s36
      %p394 = scmp.eq.s32.totalorder %s393, 0
      %s396 = sadd.s32 %s395, 1
      %s397 = scalar_select %p394, %s395, %s396
      %p400 = pneg %p394
      %p401 = scmp.eq.s32.totalorder %s29, 3
      %p402 = por %p400, %p401
      %p403 = scmp.ne.s32.totalorder %s395, %s398
      %p404 = scmp.eq.s32.totalorder %s29, 0
      %p405 = por %p403, %p404
      %p406 = scmp.ne.s32.totalorder %s395, %s398
      %p407 = scmp.eq.s32.totalorder %s34, 3
      %p408 = por %p406, %p407
      %p409 = scmp.ne.s32.totalorder %s398, %s399
      %p410 = scmp.eq.s32.totalorder %s34, 0
      %p411 = por %p409, %p410
      %p412 = scmp.ne.s32.totalorder %s398, %s399
      %p413 = scmp.eq.s32.totalorder %s35, 3
      %p414 = por %p412, %p413
      %p416 = scmp.ne.s32.totalorder %s399, %s415
      %p417 = scmp.eq.s32.totalorder %s35, 0
      %p418 = por %p416, %p417
      %p419 = scmp.le.s32.totalorder 1, %s29
      %p420 = scmp.lt.s32.totalorder %s29, 5
      %p421 = pnand %p419, %p420
      %p422 = pneg %p421
      // Predicated region
      $region9: #{tpu_custom_call.1} parent=5 // pred_check
        _
      $region10: #{tpu_custom_call.1} parent=5 // pred_check_branch
        %424 = sbr.rel (%p421) target = $region12
      $region11: #{tpu_custom_call.1} parent=5 // pred_region
        %s425 = ssub.s32 %s29, 1
        // Predicated region
        $region13: #{tpu_custom_call.1} parent=11 // pred_check
          %p426 = pneg %p102
        $region14: #{tpu_custom_call.1} parent=11 // pred_check_branch
          %428 = sbr.rel (%p426) target = $region16
        $region15: #{tpu_custom_call.1} parent=11 // pred_region
          %s430 = ssub.s32 192, 192
          %431 = vsyncadd [#allocation3], %s430
          %s433 = sshll.u32 [#allocation2], 4
          %s434 = int_to_ptr.vmem [resolvable:$true] %s433
          %436 = dma.hbm_to_vmem [thread:$0]  %s2, 192, %s434, [#allocation3]
        $region16: #{tpu_custom_call.1} parent=11 // pred_fallthru
          _
        // Predicated region
        $region17: #{tpu_custom_call.1} parent=11 // pred_check
          %p437 = pneg %p123
        $region18: #{tpu_custom_call.1} parent=11 // pred_check_branch
          %439 = sbr.rel (%p437) target = $region20
        $region19: #{tpu_custom_call.1} parent=11 // pred_region
          %s441 = ssub.s32 96, 96
          %442 = vsyncadd [#allocation5], %s441
          %s444 = sshll.u32 [#allocation4], 4
          %s445 = int_to_ptr.vmem [resolvable:$true] %s444
          %447 = dma.hbm_to_vmem [thread:$0]  %s3, 96, %s445, [#allocation5]
        $region20: #{tpu_custom_call.1} parent=11 // pred_fallthru
          _
        // Predicated region
        $region21: #{tpu_custom_call.1} parent=11 // pred_check
          %p448 = pneg %p144
        $region22: #{tpu_custom_call.1} parent=11 // pred_check_branch
          %450 = sbr.rel (%p448) target = $region24
        $region23: #{tpu_custom_call.1} parent=11 // pred_region
          %s452 = ssub.s32 36864, 36864
          %453 = vsyncadd [#allocation5], %s452
          %s454 = sshll.u32 [#allocation6], 4
          %s455 = int_to_ptr.vmem [resolvable:$true] %s454
          %460 = dma.hbm_to_vmem [thread:$0]  %s4, 36864, %s455, [#allocation5], 384, 384, 24
        $region24: #{tpu_custom_call.1} parent=11 // pred_fallthru
          _
        // Predicated region
        $region25: #{tpu_custom_call.1} parent=11 // pred_check
          %p461 = pneg %p165
        $region26: #{tpu_custom_call.1} parent=11 // pred_check_branch
          %463 = sbr.rel (%p461) target = $region28
        $region27: #{tpu_custom_call.1} parent=11 // pred_region
          %s465 = ssub.s32 96, 96
          %466 = vsyncadd [#allocation8], %s465
          %s468 = sshll.u32 [#allocation7], 4
          %s469 = int_to_ptr.vmem [resolvable:$true] %s468
          %471 = dma.hbm_to_vmem [thread:$0]  %s5, 96, %s469, [#allocation8]
        $region28: #{tpu_custom_call.1} parent=11 // pred_fallthru
          _
        // Predicated region
        $region29: #{tpu_custom_call.1} parent=11 // pred_check
          %p472 = pneg %p186
        $region30: #{tpu_custom_call.1} parent=11 // pred_check_branch
          %474 = sbr.rel (%p472) target = $region32
        $region31: #{tpu_custom_call.1} parent=11 // pred_region
          _
        $region32: #{tpu_custom_call.1} parent=11 // pred_fallthru
          _
        // Predicated region
        $region33: #{tpu_custom_call.1} parent=11 // pred_check
          %p475 = pneg %p207
        $region34: #{tpu_custom_call.1} parent=11 // pred_check_branch
          %477 = sbr.rel (%p475) target = $region36
        $region35: #{tpu_custom_call.1} parent=11 // pred_region
          %s479 = ssub.s32 16, 16
          %480 = vsyncadd [#allocation8], %s479
          %s482 = sshll.u32 [#allocation9], 4
          %s483 = int_to_ptr.vmem [resolvable:$true] %s482
          %485 = dma.hbm_to_vmem [thread:$0]  %s7, 16, %s483, [#allocation8]
        $region36: #{tpu_custom_call.1} parent=11 // pred_fallthru
          _
        // Predicated region
        $region37: #{tpu_custom_call.1} parent=11 // pred_check
          %p486 = pneg %p228
        $region38: #{tpu_custom_call.1} parent=11 // pred_check_branch
          %488 = sbr.rel (%p486) target = $region40
        $region39: #{tpu_custom_call.1} parent=11 // pred_region
          %s490 = ssub.s32 384, 384
          %491 = vsyncadd [#allocation11], %s490
          %s493 = sshll.u32 [#allocation10], 4
          %s494 = int_to_ptr.vmem [resolvable:$true] %s493
          %496 = dma.hbm_to_vmem [thread:$0]  %s8, 384, %s494, [#allocation11]
        $region40: #{tpu_custom_call.1} parent=11 // pred_fallthru
          _
        // Predicated region
        $region41: #{tpu_custom_call.1} parent=11 // pred_check
          %p497 = pneg %p249
        $region42: #{tpu_custom_call.1} parent=11 // pred_check_branch
          %499 = sbr.rel (%p497) target = $region44
        $region43: #{tpu_custom_call.1} parent=11 // pred_region
          %s501 = ssub.s32 96, 96
          %502 = vsyncadd [#allocation11], %s501
          %s504 = sshll.u32 [#allocation12], 4
          %s505 = int_to_ptr.vmem [resolvable:$true] %s504
          %507 = dma.hbm_to_vmem [thread:$0]  %s9, 96, %s505, [#allocation11]
        $region44: #{tpu_custom_call.1} parent=11 // pred_fallthru
          _
        // Predicated region
        $region45: #{tpu_custom_call.1} parent=11 // pred_check
          %p508 = pneg %p270
        $region46: #{tpu_custom_call.1} parent=11 // pred_check_branch
          %510 = sbr.rel (%p508) target = $region48
        $region47: #{tpu_custom_call.1} parent=11 // pred_region
          %s512 = ssub.s32 36864, 36864
          %513 = vsyncadd [#allocation14], %s512
          %s514 = sshll.u32 [#allocation13], 4
          %s515 = int_to_ptr.vmem [resolvable:$true] %s514
          %520 = dma.hbm_to_vmem [thread:$0]  %s10, 36864, %s515, [#allocation14], 384, 384, 24
        $region48: #{tpu_custom_call.1} parent=11 // pred_fallthru
          _
        // Predicated region
        $region49: #{tpu_custom_call.1} parent=11 // pred_check
          %p521 = pneg %p291
        $region50: #{tpu_custom_call.1} parent=11 // pred_check_branch
          %523 = sbr.rel (%p521) target = $region52
        $region51: #{tpu_custom_call.1} parent=11 // pred_region
          %s525 = ssub.s32 96, 96
          %526 = vsyncadd [#allocation14], %s525
          %s528 = sshll.u32 [#allocation15], 4
          %s529 = int_to_ptr.vmem [resolvable:$true] %s528
          %531 = dma.hbm_to_vmem [thread:$0]  %s11, 96, %s529, [#allocation14]
        $region52: #{tpu_custom_call.1} parent=11 // pred_fallthru
          _
        // Predicated region
        $region53: #{tpu_custom_call.1} parent=11 // pred_check
          %p532 = pneg %p312
        $region54: #{tpu_custom_call.1} parent=11 // pred_check_branch
          %534 = sbr.rel (%p532) target = $region56
        $region55: #{tpu_custom_call.1} parent=11 // pred_region
          _
        $region56: #{tpu_custom_call.1} parent=11 // pred_fallthru
          _
        // Predicated region
        $region57: #{tpu_custom_call.1} parent=11 // pred_check
          %p535 = pneg %p333
        $region58: #{tpu_custom_call.1} parent=11 // pred_check_branch
          %537 = sbr.rel (%p535) target = $region60
        $region59: #{tpu_custom_call.1} parent=11 // pred_region
          %s539 = ssub.s32 16, 16
          %540 = vsyncadd [#allocation17], %s539
          %s542 = sshll.u32 [#allocation16], 4
          %s543 = int_to_ptr.vmem [resolvable:$true] %s542
          %545 = dma.hbm_to_vmem [thread:$0]  %s13, 16, %s543, [#allocation17]
        $region60: #{tpu_custom_call.1} parent=11 // pred_fallthru
          _
      $region12: #{tpu_custom_call.1} parent=5 // pred_fallthru
        _
      %p546 = scmp.lt.s32.totalorder %s29, 4
      // Predicated region
      $region61: #{tpu_custom_call.1} parent=5 // pred_check
        %p547 = pneg %p546
      $region62: #{tpu_custom_call.1} parent=5 // pred_check_branch
        %549 = sbr.rel (%p547) target = $region64
      $region63: #{tpu_custom_call.1} parent=5 // pred_region
        // Predicated region
        $region65: #{tpu_custom_call.1} parent=63 // pred_check
          %p550 = pneg %p49
        $region66: #{tpu_custom_call.1} parent=63 // pred_check_branch
          %552 = sbr.rel (%p550) target = $region68
        $region67: #{tpu_custom_call.1} parent=63 // pred_region
          %p553 = scmp.lt.s32.totalorder %s29, 3
          %s554 = scalar_select %p553, %s29, 3
          %s555 = smul.addr %s554, 8
          %s556 = scalar_lea.vmem %s0, %s555
        $region68: #{tpu_custom_call.1} parent=63 // pred_fallthru
          _
        // Predicated region
        $region69: #{tpu_custom_call.1} parent=63 // pred_check
          %p557 = pneg %p75
        $region70: #{tpu_custom_call.1} parent=63 // pred_check_branch
          %559 = sbr.rel (%p557) target = $region72
        $region71: #{tpu_custom_call.1} parent=63 // pred_region
          %p560 = scmp.lt.s32.totalorder %s29, 3
          %s561 = scalar_select %p560, %s29, 3
          %s562 = smul.addr %s561, 8
          %s563 = scalar_lea.vmem %s1, %s562
        $region72: #{tpu_custom_call.1} parent=63 // pred_fallthru
          _
      $region64: #{tpu_custom_call.1} parent=5 // pred_fallthru
        _
      %p564 = scmp.le.s32.totalorder 1, %s29
      %p565 = scmp.lt.s32.totalorder %s29, 5
      %p566 = pnand %p564, %p565
      %p567 = pneg %p566
      // Predicated region
      $region73: #{tpu_custom_call.1} parent=5 // pred_check
        _
      $region74: #{tpu_custom_call.1} parent=5 // pred_check_branch
        %569 = sbr.rel (%p566) target = $region76
      $region75: #{tpu_custom_call.1} parent=5 // pred_region
        %s570 = ssub.s32 %s29, 1
        // Predicated region
        $region77: #{tpu_custom_call.1} parent=75 // pred_check
          %p571 = pneg %p102
        $region78: #{tpu_custom_call.1} parent=75 // pred_check_branch
          %573 = sbr.rel (%p571) target = $region80
        $region79: #{tpu_custom_call.1} parent=75 // pred_region
          %574 = dma.done [#allocation3], 192
        $region80: #{tpu_custom_call.1} parent=75 // pred_fallthru
          _
        // Predicated region
        $region81: #{tpu_custom_call.1} parent=75 // pred_check
          %p575 = pneg %p123
        $region82: #{tpu_custom_call.1} parent=75 // pred_check_branch
          %577 = sbr.rel (%p575) target = $region84
        $region83: #{tpu_custom_call.1} parent=75 // pred_region
          %578 = dma.done [#allocation5], 96
        $region84: #{tpu_custom_call.1} parent=75 // pred_fallthru
          _
        // Predicated region
        $region85: #{tpu_custom_call.1} parent=75 // pred_check
          %p579 = pneg %p144
        $region86: #{tpu_custom_call.1} parent=75 // pred_check_branch
          %581 = sbr.rel (%p579) target = $region88
        $region87: #{tpu_custom_call.1} parent=75 // pred_region
          %582 = dma.done [#allocation5], 36864
        $region88: #{tpu_custom_call.1} parent=75 // pred_fallthru
          _
        // Predicated region
        $region89: #{tpu_custom_call.1} parent=75 // pred_check
          %p583 = pneg %p165
        $region90: #{tpu_custom_call.1} parent=75 // pred_check_branch
          %585 = sbr.rel (%p583) target = $region92
        $region91: #{tpu_custom_call.1} parent=75 // pred_region
          %586 = dma.done [#allocation8], 96
        $region92: #{tpu_custom_call.1} parent=75 // pred_fallthru
          _
        // Predicated region
        $region93: #{tpu_custom_call.1} parent=75 // pred_check
          %p587 = pneg %p207
        $region94: #{tpu_custom_call.1} parent=75 // pred_check_branch
          %589 = sbr.rel (%p587) target = $region96
        $region95: #{tpu_custom_call.1} parent=75 // pred_region
          %590 = dma.done [#allocation8], 16
        $region96: #{tpu_custom_call.1} parent=75 // pred_fallthru
          _
        // Predicated region
        $region97: #{tpu_custom_call.1} parent=75 // pred_check
          %p591 = pneg %p228
        $region98: #{tpu_custom_call.1} parent=75 // pred_check_branch
          %593 = sbr.rel (%p591) target = $region100
        $region99: #{tpu_custom_call.1} parent=75 // pred_region
          %594 = dma.done [#allocation11], 384
        $region100: #{tpu_custom_call.1} parent=75 // pred_fallthru
          _
        // Predicated region
        $region101: #{tpu_custom_call.1} parent=75 // pred_check
          %p595 = pneg %p249
        $region102: #{tpu_custom_call.1} parent=75 // pred_check_branch
          %597 = sbr.rel (%p595) target = $region104
        $region103: #{tpu_custom_call.1} parent=75 // pred_region
          %598 = dma.done [#allocation11], 96
        $region104: #{tpu_custom_call.1} parent=75 // pred_fallthru
          _
        // Predicated region
        $region105: #{tpu_custom_call.1} parent=75 // pred_check
          %p599 = pneg %p270
        $region106: #{tpu_custom_call.1} parent=75 // pred_check_branch
          %601 = sbr.rel (%p599) target = $region108
        $region107: #{tpu_custom_call.1} parent=75 // pred_region
          %602 = dma.done [#allocation14], 36864
        $region108: #{tpu_custom_call.1} parent=75 // pred_fallthru
          _
        // Predicated region
        $region109: #{tpu_custom_call.1} parent=75 // pred_check
          %p603 = pneg %p291
        $region110: #{tpu_custom_call.1} parent=75 // pred_check_branch
          %605 = sbr.rel (%p603) target = $region112
        $region111: #{tpu_custom_call.1} parent=75 // pred_region
          %606 = dma.done [#allocation14], 96
        $region112: #{tpu_custom_call.1} parent=75 // pred_fallthru
          _
        // Predicated region
        $region113: #{tpu_custom_call.1} parent=75 // pred_check
          %p607 = pneg %p333
        $region114: #{tpu_custom_call.1} parent=75 // pred_check_branch
          %609 = sbr.rel (%p607) target = $region116
        $region115: #{tpu_custom_call.1} parent=75 // pred_region
          %610 = dma.done [#allocation17], 16
        $region116: #{tpu_custom_call.1} parent=75 // pred_fallthru
          _
        %p611 = scmp.lt.s32.totalorder %s34, 3
        %s612 = scalar_select %p611, %s34, 3
        %s613 = smul.addr %s612, 8
        %s614 = scalar_lea.vmem %s0, %s613
        %p615 = pneg %p55
        %p616 = pneg %p52
        %p617 = scmp.lt.s32.totalorder %s34, 3
        %s618 = scalar_select %p617, %s34, 3
        %s619 = smul.addr %s618, 8
        %s620 = scalar_lea.vmem %s1, %s619
        %p621 = pneg %p81
        %p622 = pneg %p78
        %p623 = pneg %p102
        %p624 = pneg %p99
        %p625 = pneg %p123
        %p626 = pneg %p120
        %p627 = pneg %p144
        %p628 = pneg %p141
        %p629 = pneg %p165
        %p630 = pneg %p162
        %p631 = pneg %p186
        %p632 = pneg %p183
        %p633 = pneg %p207
        %p634 = pneg %p204
        %p635 = pneg %p228
        %p636 = pneg %p225
        %p637 = pneg %p249
        %p638 = pneg %p246
        %p639 = pneg %p270
        %p640 = pneg %p267
        %p641 = pneg %p291
        %p642 = pneg %p288
        %p643 = pneg %p312
        %p644 = pneg %p309
        %p645 = pneg %p333
        %p646 = pneg %p330
        %p647 = pneg %p359
        %p648 = pneg %p356
        %p649 = scmp.lt.s32.totalorder %s34, 3
        %s650 = scalar_select %p649, %s34, 3
        %s651 = smul.addr %s650, 8
        %s652 = scalar_lea.vmem %s14, %s651
        %p653 = pneg %p385
        %p654 = pneg %p382
        %p655 = scmp.lt.s32.totalorder %s34, 3
        %s656 = scalar_select %p655, %s34, 3
        %s657 = smul.addr %s656, 8
        %s658 = scalar_lea.vmem %s15, %s657
        %p659 = pneg %p411
        %p660 = pneg %p408
        %p661 = scmp.lt.s32.totalorder %s34, 3
        %s662 = scalar_select %p661, %s34, 3
        %s663 = smul.addr %s662, 8
        %s664 = scalar_lea.vmem %s16, %s663
        %p665 = scmp.lt.s32.totalorder %s34, 3
        %s666 = scalar_select %p665, %s34, 3
        %s667 = smul.addr %s666, 8
        %s668 = scalar_lea.vmem %s0, %s667
        %p669 = scmp.lt.s32.totalorder %s34, 3
        %s670 = scalar_select %p669, %s34, 3
        %s671 = smul.addr %s670, 8
        %s672 = scalar_lea.vmem %s1, %s671
        %p673 = scmp.lt.s32.totalorder %s34, 3
        %s674 = scalar_select %p673, %s34, 3
        %s675 = smul.addr %s674, 8
        %s676 = scalar_lea.vmem %s14, %s675
        %p677 = scmp.lt.s32.totalorder %s34, 3
        %s678 = scalar_select %p677, %s34, 3
        %s679 = smul.addr %s678, 8
        %s680 = scalar_lea.vmem %s15, %s679
        %p681 = scmp.lt.s32.totalorder %s34, 3
        %s682 = scalar_select %p681, %s34, 3
        %s683 = smul.addr %s682, 8
        %s684 = scalar_lea.vmem %s16, %s683
        %v686 = vld [vmem:[%s668] sm:$0xff]
        %v687 = vld [vmem:[#allocation2] sm:$0xff]
        %v688 = vld [vmem:[#allocation2 + $0x8] sm:$0xf]
        %v689 = vunpack.c.l.bf16 %v687
        %v690 = vunpack.c.h.bf16 %v687
        %v691 = vunpack.c.l.bf16 %v688
        %693 = vset.pattern.permute.xlu0 0
        %694 = vperm.xlu0 %693, %v686
        %v695 = vpop.permute.xlu0 %694
        %v700 = vlaneseq
        %v701 = vshrl.u32 %v700, 7
        %v702 = vsub.s32 0, %v701
        %v703 = vrot.slane %v689, %v702
        %v704 = vlaneseq
        %v705 = vshrl.u32 %v704, 7
        %v706 = vsub.s32 4, %v705
        %v707 = vrot.slane %v689, %v706
        %v708 = vlaneseq
        %v709 = vshrl.u32 %v708, 7
        %v710 = vsub.s32 0, %v709
        %v711 = vrot.slane %v690, %v710
        %v712 = vlaneseq
        %v713 = vshrl.u32 %v712, 7
        %v714 = vsub.s32 4, %v713
        %v715 = vrot.slane %v690, %v714
        %v716 = vlaneseq
        %v717 = vshrl.u32 %v716, 7
        %v718 = vsub.s32 0, %v717
        %v719 = vrot.slane %v691, %v718
        %v720 = vlaneseq
        %v721 = vshrl.u32 %v720, 7
        %v722 = vsub.s32 4, %v721
        %v723 = vrot.slane %v691, %v722
        %v730 = vlaneseq
        %v731 = vshrl.u32 %v730, 7
        %v732 = vsub.s32 0, %v731
        %v733 = vrot.slane %v703, %v732
        %v734 = vlaneseq
        %v735 = vshrl.u32 %v734, 7
        %v736 = vsub.s32 0, %v735
        %v737 = vrot.slane %v707, %v736
        %v738 = vlaneseq
        %v739 = vshrl.u32 %v738, 7
        %v740 = vsub.s32 0, %v739
        %v741 = vrot.slane %v711, %v740
        %v742 = vlaneseq
        %v743 = vshrl.u32 %v742, 7
        %v744 = vsub.s32 0, %v743
        %v745 = vrot.slane %v715, %v744
        %v746 = vlaneseq
        %v747 = vshrl.u32 %v746, 7
        %v748 = vsub.s32 0, %v747
        %v749 = vrot.slane %v719, %v748
        %v750 = vlaneseq
        %v751 = vshrl.u32 %v750, 7
        %v752 = vsub.s32 0, %v751
        %v753 = vrot.slane %v723, %v752
        %v754 = vmul.f32 %v695, %v733
        %v755 = vmul.f32 %v695, %v737
        %v756 = vmul.f32 %v695, %v741
        %v757 = vmul.f32 %v695, %v745
        %v758 = vmul.f32 %v695, %v749
        %v759 = vmul.f32 %v695, %v753
        %760 = vset.pattern.permute.xlu0 1
        %761 = vperm.xlu0 %760, %v686
        %v762 = vpop.permute.xlu0 %761
        %v764 = vlaneseq
        %v765 = vshrl.u32 %v764, 7
        %v766 = vsub.s32 1, %v765
        %v767 = vrot.slane %v689, %v766
        %v768 = vlaneseq
        %v769 = vshrl.u32 %v768, 7
        %v770 = vsub.s32 5, %v769
        %v771 = vrot.slane %v689, %v770
        %v772 = vlaneseq
        %v773 = vshrl.u32 %v772, 7
        %v774 = vsub.s32 1, %v773
        %v775 = vrot.slane %v690, %v774
        %v776 = vlaneseq
        %v777 = vshrl.u32 %v776, 7
        %v778 = vsub.s32 5, %v777
        %v779 = vrot.slane %v690, %v778
        %v780 = vlaneseq
        %v781 = vshrl.u32 %v780, 7
        %v782 = vsub.s32 1, %v781
        %v783 = vrot.slane %v691, %v782
        %v784 = vlaneseq
        %v785 = vshrl.u32 %v784, 7
        %v786 = vsub.s32 5, %v785
        %v787 = vrot.slane %v691, %v786
        %v794 = vlaneseq
        %v795 = vshrl.u32 %v794, 7
        %v796 = vsub.s32 1, %v795
        %v797 = vrot.slane %v767, %v796
        %v798 = vlaneseq
        %v799 = vshrl.u32 %v798, 7
        %v800 = vsub.s32 1, %v799
        %v801 = vrot.slane %v771, %v800
        %v802 = vlaneseq
        %v803 = vshrl.u32 %v802, 7
        %v804 = vsub.s32 1, %v803
        %v805 = vrot.slane %v775, %v804
        %v806 = vlaneseq
        %v807 = vshrl.u32 %v806, 7
        %v808 = vsub.s32 1, %v807
        %v809 = vrot.slane %v779, %v808
        %v810 = vlaneseq
        %v811 = vshrl.u32 %v810, 7
        %v812 = vsub.s32 1, %v811
        %v813 = vrot.slane %v783, %v812
        %v814 = vlaneseq
        %v815 = vshrl.u32 %v814, 7
        %v816 = vsub.s32 1, %v815
        %v817 = vrot.slane %v787, %v816
        %v818 = vmul.f32 %v762, %v797
        %v819 = vmul.f32 %v762, %v801
        %v820 = vmul.f32 %v762, %v805
        %v821 = vmul.f32 %v762, %v809
        %v822 = vmul.f32 %v762, %v813
        %v823 = vmul.f32 %v762, %v817
        %v824 = vadd.f32 %v754, %v818
        %v825 = vadd.f32 %v755, %v819
        %v826 = vadd.f32 %v756, %v820
        %v827 = vadd.f32 %v757, %v821
        %v828 = vadd.f32 %v758, %v822
        %v829 = vadd.f32 %v759, %v823
        %830 = vset.pattern.permute.xlu0 2
        %831 = vperm.xlu0 %830, %v686
        %v832 = vpop.permute.xlu0 %831
        %v834 = vlaneseq
        %v835 = vshrl.u32 %v834, 7
        %v836 = vsub.s32 2, %v835
        %v837 = vrot.slane %v689, %v836
        %v838 = vlaneseq
        %v839 = vshrl.u32 %v838, 7
        %v840 = vsub.s32 6, %v839
        %v841 = vrot.slane %v689, %v840
        %v842 = vlaneseq
        %v843 = vshrl.u32 %v842, 7
        %v844 = vsub.s32 2, %v843
        %v845 = vrot.slane %v690, %v844
        %v846 = vlaneseq
        %v847 = vshrl.u32 %v846, 7
        %v848 = vsub.s32 6, %v847
        %v849 = vrot.slane %v690, %v848
        %v850 = vlaneseq
        %v851 = vshrl.u32 %v850, 7
        %v852 = vsub.s32 2, %v851
        %v853 = vrot.slane %v691, %v852
        %v854 = vlaneseq
        %v855 = vshrl.u32 %v854, 7
        %v856 = vsub.s32 6, %v855
        %v857 = vrot.slane %v691, %v856
        %v864 = vlaneseq
        %v865 = vshrl.u32 %v864, 7
        %v866 = vsub.s32 2, %v865
        %v867 = vrot.slane %v837, %v866
        %v868 = vlaneseq
        %v869 = vshrl.u32 %v868, 7
        %v870 = vsub.s32 2, %v869
        %v871 = vrot.slane %v841, %v870
        %v872 = vlaneseq
        %v873 = vshrl.u32 %v872, 7
        %v874 = vsub.s32 2, %v873
        %v875 = vrot.slane %v845, %v874
        %v876 = vlaneseq
        %v877 = vshrl.u32 %v876, 7
        %v878 = vsub.s32 2, %v877
        %v879 = vrot.slane %v849, %v878
        %v880 = vlaneseq
        %v881 = vshrl.u32 %v880, 7
        %v882 = vsub.s32 2, %v881
        %v883 = vrot.slane %v853, %v882
        %v884 = vlaneseq
        %v885 = vshrl.u32 %v884, 7
        %v886 = vsub.s32 2, %v885
        %v887 = vrot.slane %v857, %v886
        %v888 = vmul.f32 %v832, %v867
        %v889 = vmul.f32 %v832, %v871
        %v890 = vmul.f32 %v832, %v875
        %v891 = vmul.f32 %v832, %v879
        %v892 = vmul.f32 %v832, %v883
        %v893 = vmul.f32 %v832, %v887
        %v894 = vadd.f32 %v824, %v888
        %v895 = vadd.f32 %v825, %v889
        %v896 = vadd.f32 %v826, %v890
        %v897 = vadd.f32 %v827, %v891
        %v898 = vadd.f32 %v828, %v892
        %v899 = vadd.f32 %v829, %v893
        %v900 = vld [vmem:[#allocation4] sm:$0x3f]
        %v902 = vlaneseq
        %v903 = vshrl.u32 %v902, 7
        %v904 = vsub.s32 0, %v903
        %v905 = vrot.slane %v900, %v904
        %v906 = vlaneseq
        %v907 = vshrl.u32 %v906, 7
        %v908 = vsub.s32 1, %v907
        %v909 = vrot.slane %v900, %v908
        %v910 = vlaneseq
        %v911 = vshrl.u32 %v910, 7
        %v912 = vsub.s32 2, %v911
        %v913 = vrot.slane %v900, %v912
        %v914 = vlaneseq
        %v915 = vshrl.u32 %v914, 7
        %v916 = vsub.s32 3, %v915
        %v917 = vrot.slane %v900, %v916
        %v918 = vlaneseq
        %v919 = vshrl.u32 %v918, 7
        %v920 = vsub.s32 4, %v919
        %v921 = vrot.slane %v900, %v920
        %v922 = vlaneseq
        %v923 = vshrl.u32 %v922, 7
        %v924 = vsub.s32 5, %v923
        %v925 = vrot.slane %v900, %v924
        %v932 = vadd.f32 %v894, %v905
        %v933 = vadd.f32 %v895, %v909
        %v934 = vadd.f32 %v896, %v913
        %v935 = vadd.f32 %v897, %v917
        %v936 = vadd.f32 %v898, %v921
        %v937 = vadd.f32 %v899, %v925
        %v938 = vmax.f32 %v932, 0.0
        %v939 = vmax.f32 %v933, 0.0
        %v940 = vmax.f32 %v934, 0.0
        %v941 = vmax.f32 %v935, 0.0
        %v942 = vmax.f32 %v936, 0.0
        %v943 = vmax.f32 %v937, 0.0
        %v944 = vpack.c.bf16 %v938, %v938
        %v945 = vpack.c.bf16 %v939, %v939
        %v946 = vpack.c.bf16 %v940, %v940
        %v947 = vpack.c.bf16 %v941, %v941
        %v948 = vpack.c.bf16 %v942, %v942
        %v949 = vpack.c.bf16 %v943, %v943
        %v950 = vld [vmem:[#allocation6] sm:$0xff]
        %v951 = vld [vmem:[#allocation6 + $0x8] sm:$0xff]
        %v952 = vld [vmem:[#allocation6 + $0x10] sm:$0xff]
        %v953 = vld [vmem:[#allocation6 + $0x18] sm:$0xff]
        %v954 = vld [vmem:[#allocation6 + $0x20] sm:$0xff]
        %v955 = vld [vmem:[#allocation6 + $0x28] sm:$0xff]
        %v956 = vld [vmem:[#allocation6 + $0x30] sm:$0xff]
        %v957 = vld [vmem:[#allocation6 + $0x38] sm:$0xff]
        %v958 = vld [vmem:[#allocation6 + $0x40] sm:$0xff]
        %v959 = vld [vmem:[#allocation6 + $0x48] sm:$0xff]
        %v960 = vld [vmem:[#allocation6 + $0x50] sm:$0xff]
        %v961 = vld [vmem:[#allocation6 + $0x58] sm:$0xff]
        %v962 = vld [vmem:[#allocation6 + $0x60] sm:$0xff]
        %v963 = vld [vmem:[#allocation6 + $0x68] sm:$0xff]
        %v964 = vld [vmem:[#allocation6 + $0x70] sm:$0xff]
        %v965 = vld [vmem:[#allocation6 + $0x78] sm:$0xff]
        %v966 = vld [vmem:[#allocation6 + $0x80] sm:$0xff]
        %v967 = vld [vmem:[#allocation6 + $0x88] sm:$0xff]
        %v968 = vld [vmem:[#allocation6 + $0x90] sm:$0xff]
        %v969 = vld [vmem:[#allocation6 + $0x98] sm:$0xff]
        %v970 = vld [vmem:[#allocation6 + $0xa0] sm:$0xff]
        %v971 = vld [vmem:[#allocation6 + $0xa8] sm:$0xff]
        %v972 = vld [vmem:[#allocation6 + $0xb0] sm:$0xff]
        %v973 = vld [vmem:[#allocation6 + $0xb8] sm:$0xff]
        %v974 = vld [vmem:[#allocation6 + $0xc0] sm:$0xff]
        %v975 = vld [vmem:[#allocation6 + $0xc8] sm:$0xff]
        %v976 = vld [vmem:[#allocation6 + $0xd0] sm:$0xff]
        %v977 = vld [vmem:[#allocation6 + $0xd8] sm:$0xff]
        %v978 = vld [vmem:[#allocation6 + $0xe0] sm:$0xff]
        %v979 = vld [vmem:[#allocation6 + $0xe8] sm:$0xff]
        %v980 = vld [vmem:[#allocation6 + $0xf0] sm:$0xff]
        %v981 = vld [vmem:[#allocation6 + $0xf8] sm:$0xff]
        %v982 = vld [vmem:[#allocation6 + $0x100] sm:$0xff]
        %v983 = vld [vmem:[#allocation6 + $0x108] sm:$0xff]
        %v984 = vld [vmem:[#allocation6 + $0x110] sm:$0xff]
        %v985 = vld [vmem:[#allocation6 + $0x118] sm:$0xff]
        %v986 = vld [vmem:[#allocation6 + $0x120] sm:$0xff]
        %v987 = vld [vmem:[#allocation6 + $0x128] sm:$0xff]
        %v988 = vld [vmem:[#allocation6 + $0x130] sm:$0xff]
        %v989 = vld [vmem:[#allocation6 + $0x138] sm:$0xff]
        %v990 = vld [vmem:[#allocation6 + $0x140] sm:$0xff]
        %v991 = vld [vmem:[#allocation6 + $0x148] sm:$0xff]
        %v992 = vld [vmem:[#allocation6 + $0x150] sm:$0xff]
        %v993 = vld [vmem:[#allocation6 + $0x158] sm:$0xff]
        %v994 = vld [vmem:[#allocation6 + $0x160] sm:$0xff]
        %v995 = vld [vmem:[#allocation6 + $0x168] sm:$0xff]
        %v996 = vld [vmem:[#allocation6 + $0x170] sm:$0xff]
        %v997 = vld [vmem:[#allocation6 + $0x178] sm:$0xff]
        %v998 = vld [vmem:[#allocation6 + $0x180] sm:$0xff]
        %v999 = vld [vmem:[#allocation6 + $0x188] sm:$0xff]
        %v1000 = vld [vmem:[#allocation6 + $0x190] sm:$0xff]
        %v1001 = vld [vmem:[#allocation6 + $0x198] sm:$0xff]
        %v1002 = vld [vmem:[#allocation6 + $0x1a0] sm:$0xff]
        %v1003 = vld [vmem:[#allocation6 + $0x1a8] sm:$0xff]
        %v1004 = vld [vmem:[#allocation6 + $0x1b0] sm:$0xff]
        %v1005 = vld [vmem:[#allocation6 + $0x1b8] sm:$0xff]
        %v1006 = vld [vmem:[#allocation6 + $0x1c0] sm:$0xff]
        %v1007 = vld [vmem:[#allocation6 + $0x1c8] sm:$0xff]
        %v1008 = vld [vmem:[#allocation6 + $0x1d0] sm:$0xff]
        %v1009 = vld [vmem:[#allocation6 + $0x1d8] sm:$0xff]
        %v1010 = vld [vmem:[#allocation6 + $0x1e0] sm:$0xff]
        %v1011 = vld [vmem:[#allocation6 + $0x1e8] sm:$0xff]
        %v1012 = vld [vmem:[#allocation6 + $0x1f0] sm:$0xff]
        %v1013 = vld [vmem:[#allocation6 + $0x1f8] sm:$0xff]
        %v1014 = vld [vmem:[#allocation6 + $0x200] sm:$0xff]
        %v1015 = vld [vmem:[#allocation6 + $0x208] sm:$0xff]
        %v1016 = vld [vmem:[#allocation6 + $0x210] sm:$0xff]
        %v1017 = vld [vmem:[#allocation6 + $0x218] sm:$0xff]
        %v1018 = vld [vmem:[#allocation6 + $0x220] sm:$0xff]
        %v1019 = vld [vmem:[#allocation6 + $0x228] sm:$0xff]
        %v1020 = vld [vmem:[#allocation6 + $0x230] sm:$0xff]
        %v1021 = vld [vmem:[#allocation6 + $0x238] sm:$0xff]
        %v1022 = vld [vmem:[#allocation6 + $0x240] sm:$0xff]
        %v1023 = vld [vmem:[#allocation6 + $0x248] sm:$0xff]
        %v1024 = vld [vmem:[#allocation6 + $0x250] sm:$0xff]
        %v1025 = vld [vmem:[#allocation6 + $0x258] sm:$0xff]
        %v1026 = vld [vmem:[#allocation6 + $0x260] sm:$0xff]
        %v1027 = vld [vmem:[#allocation6 + $0x268] sm:$0xff]
        %v1028 = vld [vmem:[#allocation6 + $0x270] sm:$0xff]
        %v1029 = vld [vmem:[#allocation6 + $0x278] sm:$0xff]
        %v1030 = vld [vmem:[#allocation6 + $0x280] sm:$0xff]
        %v1031 = vld [vmem:[#allocation6 + $0x288] sm:$0xff]
        %v1032 = vld [vmem:[#allocation6 + $0x290] sm:$0xff]
        %v1033 = vld [vmem:[#allocation6 + $0x298] sm:$0xff]
        %v1034 = vld [vmem:[#allocation6 + $0x2a0] sm:$0xff]
        %v1035 = vld [vmem:[#allocation6 + $0x2a8] sm:$0xff]
        %v1036 = vld [vmem:[#allocation6 + $0x2b0] sm:$0xff]
        %v1037 = vld [vmem:[#allocation6 + $0x2b8] sm:$0xff]
        %v1038 = vld [vmem:[#allocation6 + $0x2c0] sm:$0xff]
        %v1039 = vld [vmem:[#allocation6 + $0x2c8] sm:$0xff]
        %v1040 = vld [vmem:[#allocation6 + $0x2d0] sm:$0xff]
        %v1041 = vld [vmem:[#allocation6 + $0x2d8] sm:$0xff]
        %v1042 = vld [vmem:[#allocation6 + $0x2e0] sm:$0xff]
        %v1043 = vld [vmem:[#allocation6 + $0x2e8] sm:$0xff]
        %v1044 = vld [vmem:[#allocation6 + $0x2f0] sm:$0xff]
        %v1045 = vld [vmem:[#allocation6 + $0x2f8] sm:$0xff]
        %v1046 = vld [vmem:[#allocation6 + $0x300] sm:$0xff]
        %v1047 = vld [vmem:[#allocation6 + $0x308] sm:$0xff]
        %v1048 = vld [vmem:[#allocation6 + $0x310] sm:$0xff]
        %v1049 = vld [vmem:[#allocation6 + $0x318] sm:$0xff]
        %v1050 = vld [vmem:[#allocation6 + $0x320] sm:$0xff]
        %v1051 = vld [vmem:[#allocation6 + $0x328] sm:$0xff]
        %v1052 = vld [vmem:[#allocation6 + $0x330] sm:$0xff]
        %v1053 = vld [vmem:[#allocation6 + $0x338] sm:$0xff]
        %v1054 = vld [vmem:[#allocation6 + $0x340] sm:$0xff]
        %v1055 = vld [vmem:[#allocation6 + $0x348] sm:$0xff]
        %v1056 = vld [vmem:[#allocation6 + $0x350] sm:$0xff]
        %v1057 = vld [vmem:[#allocation6 + $0x358] sm:$0xff]
        %v1058 = vld [vmem:[#allocation6 + $0x360] sm:$0xff]
        %v1059 = vld [vmem:[#allocation6 + $0x368] sm:$0xff]
        %v1060 = vld [vmem:[#allocation6 + $0x370] sm:$0xff]
        %v1061 = vld [vmem:[#allocation6 + $0x378] sm:$0xff]
        %v1062 = vld [vmem:[#allocation6 + $0x380] sm:$0xff]
        %v1063 = vld [vmem:[#allocation6 + $0x388] sm:$0xff]
        %v1064 = vld [vmem:[#allocation6 + $0x390] sm:$0xff]
        %v1065 = vld [vmem:[#allocation6 + $0x398] sm:$0xff]
        %v1066 = vld [vmem:[#allocation6 + $0x3a0] sm:$0xff]
        %v1067 = vld [vmem:[#allocation6 + $0x3a8] sm:$0xff]
        %v1068 = vld [vmem:[#allocation6 + $0x3b0] sm:$0xff]
        %v1069 = vld [vmem:[#allocation6 + $0x3b8] sm:$0xff]
        %v1070 = vld [vmem:[#allocation6 + $0x3c0] sm:$0xff]
        %v1071 = vld [vmem:[#allocation6 + $0x3c8] sm:$0xff]
        %v1072 = vld [vmem:[#allocation6 + $0x3d0] sm:$0xff]
        %v1073 = vld [vmem:[#allocation6 + $0x3d8] sm:$0xff]
        %v1074 = vld [vmem:[#allocation6 + $0x3e0] sm:$0xff]
        %v1075 = vld [vmem:[#allocation6 + $0x3e8] sm:$0xff]
        %v1076 = vld [vmem:[#allocation6 + $0x3f0] sm:$0xff]
        %v1077 = vld [vmem:[#allocation6 + $0x3f8] sm:$0xff]
        %v1078 = vld [vmem:[#allocation6 + $0x400] sm:$0xff]
        %v1079 = vld [vmem:[#allocation6 + $0x408] sm:$0xff]
        %v1080 = vld [vmem:[#allocation6 + $0x410] sm:$0xff]
        %v1081 = vld [vmem:[#allocation6 + $0x418] sm:$0xff]
        %v1082 = vld [vmem:[#allocation6 + $0x420] sm:$0xff]
        %v1083 = vld [vmem:[#allocation6 + $0x428] sm:$0xff]
        %v1084 = vld [vmem:[#allocation6 + $0x430] sm:$0xff]
        %v1085 = vld [vmem:[#allocation6 + $0x438] sm:$0xff]
        %v1086 = vld [vmem:[#allocation6 + $0x440] sm:$0xff]
        %v1087 = vld [vmem:[#allocation6 + $0x448] sm:$0xff]
        %v1088 = vld [vmem:[#allocation6 + $0x450] sm:$0xff]
        %v1089 = vld [vmem:[#allocation6 + $0x458] sm:$0xff]
        %v1090 = vld [vmem:[#allocation6 + $0x460] sm:$0xff]
        %v1091 = vld [vmem:[#allocation6 + $0x468] sm:$0xff]
        %v1092 = vld [vmem:[#allocation6 + $0x470] sm:$0xff]
        %v1093 = vld [vmem:[#allocation6 + $0x478] sm:$0xff]
        %v1094 = vld [vmem:[#allocation6 + $0x480] sm:$0xff]
        %v1095 = vld [vmem:[#allocation6 + $0x488] sm:$0xff]
        %v1096 = vld [vmem:[#allocation6 + $0x490] sm:$0xff]
        %v1097 = vld [vmem:[#allocation6 + $0x498] sm:$0xff]
        %v1098 = vld [vmem:[#allocation6 + $0x4a0] sm:$0xff]
        %v1099 = vld [vmem:[#allocation6 + $0x4a8] sm:$0xff]
        %v1100 = vld [vmem:[#allocation6 + $0x4b0] sm:$0xff]
        %v1101 = vld [vmem:[#allocation6 + $0x4b8] sm:$0xff]
        %v1102 = vld [vmem:[#allocation6 + $0x4c0] sm:$0xff]
        %v1103 = vld [vmem:[#allocation6 + $0x4c8] sm:$0xff]
        %v1104 = vld [vmem:[#allocation6 + $0x4d0] sm:$0xff]
        %v1105 = vld [vmem:[#allocation6 + $0x4d8] sm:$0xff]
        %v1106 = vld [vmem:[#allocation6 + $0x4e0] sm:$0xff]
        %v1107 = vld [vmem:[#allocation6 + $0x4e8] sm:$0xff]
        %v1108 = vld [vmem:[#allocation6 + $0x4f0] sm:$0xff]
        %v1109 = vld [vmem:[#allocation6 + $0x4f8] sm:$0xff]
        %v1110 = vld [vmem:[#allocation6 + $0x500] sm:$0xff]
        %v1111 = vld [vmem:[#allocation6 + $0x508] sm:$0xff]
        %v1112 = vld [vmem:[#allocation6 + $0x510] sm:$0xff]
        %v1113 = vld [vmem:[#allocation6 + $0x518] sm:$0xff]
        %v1114 = vld [vmem:[#allocation6 + $0x520] sm:$0xff]
        %v1115 = vld [vmem:[#allocation6 + $0x528] sm:$0xff]
        %v1116 = vld [vmem:[#allocation6 + $0x530] sm:$0xff]
        %v1117 = vld [vmem:[#allocation6 + $0x538] sm:$0xff]
        %v1118 = vld [vmem:[#allocation6 + $0x540] sm:$0xff]
        %v1119 = vld [vmem:[#allocation6 + $0x548] sm:$0xff]
        %v1120 = vld [vmem:[#allocation6 + $0x550] sm:$0xff]
        %v1121 = vld [vmem:[#allocation6 + $0x558] sm:$0xff]
        %v1122 = vld [vmem:[#allocation6 + $0x560] sm:$0xff]
        %v1123 = vld [vmem:[#allocation6 + $0x568] sm:$0xff]
        %v1124 = vld [vmem:[#allocation6 + $0x570] sm:$0xff]
        %v1125 = vld [vmem:[#allocation6 + $0x578] sm:$0xff]
        %v1126 = vld [vmem:[#allocation6 + $0x580] sm:$0xff]
        %v1127 = vld [vmem:[#allocation6 + $0x588] sm:$0xff]
        %v1128 = vld [vmem:[#allocation6 + $0x590] sm:$0xff]
        %v1129 = vld [vmem:[#allocation6 + $0x598] sm:$0xff]
        %v1130 = vld [vmem:[#allocation6 + $0x5a0] sm:$0xff]
        %v1131 = vld [vmem:[#allocation6 + $0x5a8] sm:$0xff]
        %v1132 = vld [vmem:[#allocation6 + $0x5b0] sm:$0xff]
        %v1133 = vld [vmem:[#allocation6 + $0x5b8] sm:$0xff]
        %v1134 = vld [vmem:[#allocation6 + $0x5c0] sm:$0xff]
        %v1135 = vld [vmem:[#allocation6 + $0x5c8] sm:$0xff]
        %v1136 = vld [vmem:[#allocation6 + $0x5d0] sm:$0xff]
        %v1137 = vld [vmem:[#allocation6 + $0x5d8] sm:$0xff]
        %v1138 = vld [vmem:[#allocation6 + $0x5e0] sm:$0xff]
        %v1139 = vld [vmem:[#allocation6 + $0x5e8] sm:$0xff]
        %v1140 = vld [vmem:[#allocation6 + $0x5f0] sm:$0xff]
        %v1141 = vld [vmem:[#allocation6 + $0x5f8] sm:$0xff]
        %v1142 = vld [vmem:[#allocation6 + $0x600] sm:$0xff]
        %v1143 = vld [vmem:[#allocation6 + $0x608] sm:$0xff]
        %v1144 = vld [vmem:[#allocation6 + $0x610] sm:$0xff]
        %v1145 = vld [vmem:[#allocation6 + $0x618] sm:$0xff]
        %v1146 = vld [vmem:[#allocation6 + $0x620] sm:$0xff]
        %v1147 = vld [vmem:[#allocation6 + $0x628] sm:$0xff]
        %v1148 = vld [vmem:[#allocation6 + $0x630] sm:$0xff]
        %v1149 = vld [vmem:[#allocation6 + $0x638] sm:$0xff]
        %v1150 = vld [vmem:[#allocation6 + $0x640] sm:$0xff]
        %v1151 = vld [vmem:[#allocation6 + $0x648] sm:$0xff]
        %v1152 = vld [vmem:[#allocation6 + $0x650] sm:$0xff]
        %v1153 = vld [vmem:[#allocation6 + $0x658] sm:$0xff]
        %v1154 = vld [vmem:[#allocation6 + $0x660] sm:$0xff]
        %v1155 = vld [vmem:[#allocation6 + $0x668] sm:$0xff]
        %v1156 = vld [vmem:[#allocation6 + $0x670] sm:$0xff]
        %v1157 = vld [vmem:[#allocation6 + $0x678] sm:$0xff]
        %v1158 = vld [vmem:[#allocation6 + $0x680] sm:$0xff]
        %v1159 = vld [vmem:[#allocation6 + $0x688] sm:$0xff]
        %v1160 = vld [vmem:[#allocation6 + $0x690] sm:$0xff]
        %v1161 = vld [vmem:[#allocation6 + $0x698] sm:$0xff]
        %v1162 = vld [vmem:[#allocation6 + $0x6a0] sm:$0xff]
        %v1163 = vld [vmem:[#allocation6 + $0x6a8] sm:$0xff]
        %v1164 = vld [vmem:[#allocation6 + $0x6b0] sm:$0xff]
        %v1165 = vld [vmem:[#allocation6 + $0x6b8] sm:$0xff]
        %v1166 = vld [vmem:[#allocation6 + $0x6c0] sm:$0xff]
        %v1167 = vld [vmem:[#allocation6 + $0x6c8] sm:$0xff]
        %v1168 = vld [vmem:[#allocation6 + $0x6d0] sm:$0xff]
        %v1169 = vld [vmem:[#allocation6 + $0x6d8] sm:$0xff]
        %v1170 = vld [vmem:[#allocation6 + $0x6e0] sm:$0xff]
        %v1171 = vld [vmem:[#allocation6 + $0x6e8] sm:$0xff]
        %v1172 = vld [vmem:[#allocation6 + $0x6f0] sm:$0xff]
        %v1173 = vld [vmem:[#allocation6 + $0x6f8] sm:$0xff]
        %v1174 = vld [vmem:[#allocation6 + $0x700] sm:$0xff]
        %v1175 = vld [vmem:[#allocation6 + $0x708] sm:$0xff]
        %v1176 = vld [vmem:[#allocation6 + $0x710] sm:$0xff]
        %v1177 = vld [vmem:[#allocation6 + $0x718] sm:$0xff]
        %v1178 = vld [vmem:[#allocation6 + $0x720] sm:$0xff]
        %v1179 = vld [vmem:[#allocation6 + $0x728] sm:$0xff]
        %v1180 = vld [vmem:[#allocation6 + $0x730] sm:$0xff]
        %v1181 = vld [vmem:[#allocation6 + $0x738] sm:$0xff]
        %v1182 = vld [vmem:[#allocation6 + $0x740] sm:$0xff]
        %v1183 = vld [vmem:[#allocation6 + $0x748] sm:$0xff]
        %v1184 = vld [vmem:[#allocation6 + $0x750] sm:$0xff]
        %v1185 = vld [vmem:[#allocation6 + $0x758] sm:$0xff]
        %v1186 = vld [vmem:[#allocation6 + $0x760] sm:$0xff]
        %v1187 = vld [vmem:[#allocation6 + $0x768] sm:$0xff]
        %v1188 = vld [vmem:[#allocation6 + $0x770] sm:$0xff]
        %v1189 = vld [vmem:[#allocation6 + $0x778] sm:$0xff]
        %v1190 = vld [vmem:[#allocation6 + $0x780] sm:$0xff]
        %v1191 = vld [vmem:[#allocation6 + $0x788] sm:$0xff]
        %v1192 = vld [vmem:[#allocation6 + $0x790] sm:$0xff]
        %v1193 = vld [vmem:[#allocation6 + $0x798] sm:$0xff]
        %v1194 = vld [vmem:[#allocation6 + $0x7a0] sm:$0xff]
        %v1195 = vld [vmem:[#allocation6 + $0x7a8] sm:$0xff]
        %v1196 = vld [vmem:[#allocation6 + $0x7b0] sm:$0xff]
        %v1197 = vld [vmem:[#allocation6 + $0x7b8] sm:$0xff]
        %v1198 = vld [vmem:[#allocation6 + $0x7c0] sm:$0xff]
        %v1199 = vld [vmem:[#allocation6 + $0x7c8] sm:$0xff]
        %v1200 = vld [vmem:[#allocation6 + $0x7d0] sm:$0xff]
        %v1201 = vld [vmem:[#allocation6 + $0x7d8] sm:$0xff]
        %v1202 = vld [vmem:[#allocation6 + $0x7e0] sm:$0xff]
        %v1203 = vld [vmem:[#allocation6 + $0x7e8] sm:$0xff]
        %v1204 = vld [vmem:[#allocation6 + $0x7f0] sm:$0xff]
        %v1205 = vld [vmem:[#allocation6 + $0x7f8] sm:$0xff]
        %v1206 = vld [vmem:[#allocation6 + $0x800] sm:$0xff]
        %v1207 = vld [vmem:[#allocation6 + $0x808] sm:$0xff]
        %v1208 = vld [vmem:[#allocation6 + $0x810] sm:$0xff]
        %v1209 = vld [vmem:[#allocation6 + $0x818] sm:$0xff]
        %v1210 = vld [vmem:[#allocation6 + $0x820] sm:$0xff]
        %v1211 = vld [vmem:[#allocation6 + $0x828] sm:$0xff]
        %v1212 = vld [vmem:[#allocation6 + $0x830] sm:$0xff]
        %v1213 = vld [vmem:[#allocation6 + $0x838] sm:$0xff]
        %v1214 = vld [vmem:[#allocation6 + $0x840] sm:$0xff]
        %v1215 = vld [vmem:[#allocation6 + $0x848] sm:$0xff]
        %v1216 = vld [vmem:[#allocation6 + $0x850] sm:$0xff]
        %v1217 = vld [vmem:[#allocation6 + $0x858] sm:$0xff]
        %v1218 = vld [vmem:[#allocation6 + $0x860] sm:$0xff]
        %v1219 = vld [vmem:[#allocation6 + $0x868] sm:$0xff]
        %v1220 = vld [vmem:[#allocation6 + $0x870] sm:$0xff]
        %v1221 = vld [vmem:[#allocation6 + $0x878] sm:$0xff]
        %v1222 = vld [vmem:[#allocation6 + $0x880] sm:$0xff]
        %v1223 = vld [vmem:[#allocation6 + $0x888] sm:$0xff]
        %v1224 = vld [vmem:[#allocation6 + $0x890] sm:$0xff]
        %v1225 = vld [vmem:[#allocation6 + $0x898] sm:$0xff]
        %v1226 = vld [vmem:[#allocation6 + $0x8a0] sm:$0xff]
        %v1227 = vld [vmem:[#allocation6 + $0x8a8] sm:$0xff]
        %v1228 = vld [vmem:[#allocation6 + $0x8b0] sm:$0xff]
        %v1229 = vld [vmem:[#allocation6 + $0x8b8] sm:$0xff]
        %v1230 = vld [vmem:[#allocation6 + $0x8c0] sm:$0xff]
        %v1231 = vld [vmem:[#allocation6 + $0x8c8] sm:$0xff]
        %v1232 = vld [vmem:[#allocation6 + $0x8d0] sm:$0xff]
        %v1233 = vld [vmem:[#allocation6 + $0x8d8] sm:$0xff]
        %v1234 = vld [vmem:[#allocation6 + $0x8e0] sm:$0xff]
        %v1235 = vld [vmem:[#allocation6 + $0x8e8] sm:$0xff]
        %v1236 = vld [vmem:[#allocation6 + $0x8f0] sm:$0xff]
        %v1237 = vld [vmem:[#allocation6 + $0x8f8] sm:$0xff]
        %v1238 = vld [vmem:[#allocation7] sm:$0x3f]
        %v1240 = vlaneseq
        %v1241 = vshrl.u32 %v1240, 7
        %v1242 = vsub.s32 0, %v1241
        %v1243 = vrot.slane %v1238, %v1242
        %v1244 = vlaneseq
        %v1245 = vshrl.u32 %v1244, 7
        %v1246 = vsub.s32 1, %v1245
        %v1247 = vrot.slane %v1238, %v1246
        %v1248 = vlaneseq
        %v1249 = vshrl.u32 %v1248, 7
        %v1250 = vsub.s32 2, %v1249
        %v1251 = vrot.slane %v1238, %v1250
        %v1252 = vlaneseq
        %v1253 = vshrl.u32 %v1252, 7
        %v1254 = vsub.s32 3, %v1253
        %v1255 = vrot.slane %v1238, %v1254
        %v1256 = vlaneseq
        %v1257 = vshrl.u32 %v1256, 7
        %v1258 = vsub.s32 4, %v1257
        %v1259 = vrot.slane %v1238, %v1258
        %v1260 = vlaneseq
        %v1261 = vshrl.u32 %v1260, 7
        %v1262 = vsub.s32 5, %v1261
        %v1263 = vrot.slane %v1238, %v1262
        %v1558 = vunpack.c.l.b16 %v950
        %v1559 = vunpack.c.h.b16 %v950
        %v1560 = vunpack.c.l.b16 %v951
        %v1561 = vunpack.c.h.b16 %v951
        %v1562 = vunpack.c.l.b16 %v952
        %v1563 = vunpack.c.h.b16 %v952
        %v1564 = vunpack.c.l.b16 %v953
        %v1565 = vunpack.c.h.b16 %v953
        %v1566 = vunpack.c.l.b16 %v954
        %v1567 = vunpack.c.h.b16 %v954
        %v1568 = vunpack.c.l.b16 %v955
        %v1569 = vunpack.c.h.b16 %v955
        %v1570 = vunpack.c.l.b16 %v956
        %v1571 = vunpack.c.h.b16 %v956
        %v1572 = vunpack.c.l.b16 %v957
        %v1573 = vunpack.c.h.b16 %v957
        %v1574 = vunpack.c.l.b16 %v958
        %v1575 = vunpack.c.h.b16 %v958
        %v1576 = vunpack.c.l.b16 %v959
        %v1577 = vunpack.c.h.b16 %v959
        %v1578 = vunpack.c.l.b16 %v960
        %v1579 = vunpack.c.h.b16 %v960
        %v1580 = vunpack.c.l.b16 %v961
        %v1581 = vunpack.c.h.b16 %v961
        %v1582 = vunpack.c.l.b16 %v962
        %v1583 = vunpack.c.h.b16 %v962
        %v1584 = vunpack.c.l.b16 %v963
        %v1585 = vunpack.c.h.b16 %v963
        %v1586 = vunpack.c.l.b16 %v964
        %v1587 = vunpack.c.h.b16 %v964
        %v1588 = vunpack.c.l.b16 %v965
        %v1589 = vunpack.c.h.b16 %v965
        %v1590 = vunpack.c.l.b16 %v966
        %v1591 = vunpack.c.h.b16 %v966
        %v1592 = vunpack.c.l.b16 %v967
        %v1593 = vunpack.c.h.b16 %v967
        %v1594 = vunpack.c.l.b16 %v968
        %v1595 = vunpack.c.h.b16 %v968
        %v1596 = vunpack.c.l.b16 %v969
        %v1597 = vunpack.c.h.b16 %v969
        %v1598 = vunpack.c.l.b16 %v970
        %v1599 = vunpack.c.h.b16 %v970
        %v1600 = vunpack.c.l.b16 %v971
        %v1601 = vunpack.c.h.b16 %v971
        %v1602 = vunpack.c.l.b16 %v972
        %v1603 = vunpack.c.h.b16 %v972
        %v1604 = vunpack.c.l.b16 %v973
        %v1605 = vunpack.c.h.b16 %v973
        %v1606 = vunpack.c.l.b16 %v974
        %v1607 = vunpack.c.h.b16 %v974
        %v1608 = vunpack.c.l.b16 %v975
        %v1609 = vunpack.c.h.b16 %v975
        %v1610 = vunpack.c.l.b16 %v976
        %v1611 = vunpack.c.h.b16 %v976
        %v1612 = vunpack.c.l.b16 %v977
        %v1613 = vunpack.c.h.b16 %v977
        %v1614 = vunpack.c.l.b16 %v978
        %v1615 = vunpack.c.h.b16 %v978
        %v1616 = vunpack.c.l.b16 %v979
        %v1617 = vunpack.c.h.b16 %v979
        %v1618 = vunpack.c.l.b16 %v980
        %v1619 = vunpack.c.h.b16 %v980
        %v1620 = vunpack.c.l.b16 %v981
        %v1621 = vunpack.c.h.b16 %v981
        %v1622 = vunpack.c.l.b16 %v982
        %v1623 = vunpack.c.h.b16 %v982
        %v1624 = vunpack.c.l.b16 %v983
        %v1625 = vunpack.c.h.b16 %v983
        %v1626 = vunpack.c.l.b16 %v984
        %v1627 = vunpack.c.h.b16 %v984
        %v1628 = vunpack.c.l.b16 %v985
        %v1629 = vunpack.c.h.b16 %v985
        %v1630 = vunpack.c.l.b16 %v986
        %v1631 = vunpack.c.h.b16 %v986
        %v1632 = vunpack.c.l.b16 %v987
        %v1633 = vunpack.c.h.b16 %v987
        %v1634 = vunpack.c.l.b16 %v988
        %v1635 = vunpack.c.h.b16 %v988
        %v1636 = vunpack.c.l.b16 %v989
        %v1637 = vunpack.c.h.b16 %v989
        %v1638 = vunpack.c.l.b16 %v990
        %v1639 = vunpack.c.h.b16 %v990
        %v1640 = vunpack.c.l.b16 %v991
        %v1641 = vunpack.c.h.b16 %v991
        %v1642 = vunpack.c.l.b16 %v992
        %v1643 = vunpack.c.h.b16 %v992
        %v1644 = vunpack.c.l.b16 %v993
        %v1645 = vunpack.c.h.b16 %v993
        %v1646 = vunpack.c.l.b16 %v994
        %v1647 = vunpack.c.h.b16 %v994
        %v1648 = vunpack.c.l.b16 %v995
        %v1649 = vunpack.c.h.b16 %v995
        %v1650 = vunpack.c.l.b16 %v996
        %v1651 = vunpack.c.h.b16 %v996
        %v1652 = vunpack.c.l.b16 %v997
        %v1653 = vunpack.c.h.b16 %v997
        %v1654 = vunpack.c.l.b16 %v998
        %v1655 = vunpack.c.h.b16 %v998
        %v1656 = vunpack.c.l.b16 %v999
        %v1657 = vunpack.c.h.b16 %v999
        %v1658 = vunpack.c.l.b16 %v1000
        %v1659 = vunpack.c.h.b16 %v1000
        %v1660 = vunpack.c.l.b16 %v1001
        %v1661 = vunpack.c.h.b16 %v1001
        %v1662 = vunpack.c.l.b16 %v1002
        %v1663 = vunpack.c.h.b16 %v1002
        %v1664 = vunpack.c.l.b16 %v1003
        %v1665 = vunpack.c.h.b16 %v1003
        %v1666 = vunpack.c.l.b16 %v1004
        %v1667 = vunpack.c.h.b16 %v1004
        %v1668 = vunpack.c.l.b16 %v1005
        %v1669 = vunpack.c.h.b16 %v1005
        %v1670 = vunpack.c.l.b16 %v1006
        %v1671 = vunpack.c.h.b16 %v1006
        %v1672 = vunpack.c.l.b16 %v1007
        %v1673 = vunpack.c.h.b16 %v1007
        %v1674 = vunpack.c.l.b16 %v1008
        %v1675 = vunpack.c.h.b16 %v1008
        %v1676 = vunpack.c.l.b16 %v1009
        %v1677 = vunpack.c.h.b16 %v1009
        %v1678 = vunpack.c.l.b16 %v1010
        %v1679 = vunpack.c.h.b16 %v1010
        %v1680 = vunpack.c.l.b16 %v1011
        %v1681 = vunpack.c.h.b16 %v1011
        %v1682 = vunpack.c.l.b16 %v1012
        %v1683 = vunpack.c.h.b16 %v1012
        %v1684 = vunpack.c.l.b16 %v1013
        %v1685 = vunpack.c.h.b16 %v1013
        %v1686 = vunpack.c.l.b16 %v1014
        %v1687 = vunpack.c.h.b16 %v1014
        %v1688 = vunpack.c.l.b16 %v1015
        %v1689 = vunpack.c.h.b16 %v1015
        %v1690 = vunpack.c.l.b16 %v1016
        %v1691 = vunpack.c.h.b16 %v1016
        %v1692 = vunpack.c.l.b16 %v1017
        %v1693 = vunpack.c.h.b16 %v1017
        %v1694 = vunpack.c.l.b16 %v1018
        %v1695 = vunpack.c.h.b16 %v1018
        %v1696 = vunpack.c.l.b16 %v1019
        %v1697 = vunpack.c.h.b16 %v1019
        %v1698 = vunpack.c.l.b16 %v1020
        %v1699 = vunpack.c.h.b16 %v1020
        %v1700 = vunpack.c.l.b16 %v1021
        %v1701 = vunpack.c.h.b16 %v1021
        %v1702 = vunpack.c.l.b16 %v1022
        %v1703 = vunpack.c.h.b16 %v1022
        %v1704 = vunpack.c.l.b16 %v1023
        %v1705 = vunpack.c.h.b16 %v1023
        %v1706 = vunpack.c.l.b16 %v1024
        %v1707 = vunpack.c.h.b16 %v1024
        %v1708 = vunpack.c.l.b16 %v1025
        %v1709 = vunpack.c.h.b16 %v1025
        %v1710 = vunpack.c.l.b16 %v1026
        %v1711 = vunpack.c.h.b16 %v1026
        %v1712 = vunpack.c.l.b16 %v1027
        %v1713 = vunpack.c.h.b16 %v1027
        %v1714 = vunpack.c.l.b16 %v1028
        %v1715 = vunpack.c.h.b16 %v1028
        %v1716 = vunpack.c.l.b16 %v1029
        %v1717 = vunpack.c.h.b16 %v1029
        %v1718 = vunpack.c.l.b16 %v1030
        %v1719 = vunpack.c.h.b16 %v1030
        %v1720 = vunpack.c.l.b16 %v1031
        %v1721 = vunpack.c.h.b16 %v1031
        %v1722 = vunpack.c.l.b16 %v1032
        %v1723 = vunpack.c.h.b16 %v1032
        %v1724 = vunpack.c.l.b16 %v1033
        %v1725 = vunpack.c.h.b16 %v1033
        %v1726 = vunpack.c.l.b16 %v1034
        %v1727 = vunpack.c.h.b16 %v1034
        %v1728 = vunpack.c.l.b16 %v1035
        %v1729 = vunpack.c.h.b16 %v1035
        %v1730 = vunpack.c.l.b16 %v1036
        %v1731 = vunpack.c.h.b16 %v1036
        %v1732 = vunpack.c.l.b16 %v1037
        %v1733 = vunpack.c.h.b16 %v1037
        %v1734 = vunpack.c.l.b16 %v1038
        %v1735 = vunpack.c.h.b16 %v1038
        %v1736 = vunpack.c.l.b16 %v1039
        %v1737 = vunpack.c.h.b16 %v1039
        %v1738 = vunpack.c.l.b16 %v1040
        %v1739 = vunpack.c.h.b16 %v1040
        %v1740 = vunpack.c.l.b16 %v1041
        %v1741 = vunpack.c.h.b16 %v1041
        %v1742 = vunpack.c.l.b16 %v1042
        %v1743 = vunpack.c.h.b16 %v1042
        %v1744 = vunpack.c.l.b16 %v1043
        %v1745 = vunpack.c.h.b16 %v1043
        %v1746 = vunpack.c.l.b16 %v1044
        %v1747 = vunpack.c.h.b16 %v1044
        %v1748 = vunpack.c.l.b16 %v1045
        %v1749 = vunpack.c.h.b16 %v1045
        %v1750 = vunpack.c.l.b16 %v1046
        %v1751 = vunpack.c.h.b16 %v1046
        %v1752 = vunpack.c.l.b16 %v1047
        %v1753 = vunpack.c.h.b16 %v1047
        %v1754 = vunpack.c.l.b16 %v1048
        %v1755 = vunpack.c.h.b16 %v1048
        %v1756 = vunpack.c.l.b16 %v1049
        %v1757 = vunpack.c.h.b16 %v1049
        %v1758 = vunpack.c.l.b16 %v1050
        %v1759 = vunpack.c.h.b16 %v1050
        %v1760 = vunpack.c.l.b16 %v1051
        %v1761 = vunpack.c.h.b16 %v1051
        %v1762 = vunpack.c.l.b16 %v1052
        %v1763 = vunpack.c.h.b16 %v1052
        %v1764 = vunpack.c.l.b16 %v1053
        %v1765 = vunpack.c.h.b16 %v1053
        %v1766 = vunpack.c.l.b16 %v1054
        %v1767 = vunpack.c.h.b16 %v1054
        %v1768 = vunpack.c.l.b16 %v1055
        %v1769 = vunpack.c.h.b16 %v1055
        %v1770 = vunpack.c.l.b16 %v1056
        %v1771 = vunpack.c.h.b16 %v1056
        %v1772 = vunpack.c.l.b16 %v1057
        %v1773 = vunpack.c.h.b16 %v1057
        %v1774 = vunpack.c.l.b16 %v1058
        %v1775 = vunpack.c.h.b16 %v1058
        %v1776 = vunpack.c.l.b16 %v1059
        %v1777 = vunpack.c.h.b16 %v1059
        %v1778 = vunpack.c.l.b16 %v1060
        %v1779 = vunpack.c.h.b16 %v1060
        %v1780 = vunpack.c.l.b16 %v1061
        %v1781 = vunpack.c.h.b16 %v1061
        %v1782 = vunpack.c.l.b16 %v1062
        %v1783 = vunpack.c.h.b16 %v1062
        %v1784 = vunpack.c.l.b16 %v1063
        %v1785 = vunpack.c.h.b16 %v1063
        %v1786 = vunpack.c.l.b16 %v1064
        %v1787 = vunpack.c.h.b16 %v1064
        %v1788 = vunpack.c.l.b16 %v1065
        %v1789 = vunpack.c.h.b16 %v1065
        %v1790 = vunpack.c.l.b16 %v1066
        %v1791 = vunpack.c.h.b16 %v1066
        %v1792 = vunpack.c.l.b16 %v1067
        %v1793 = vunpack.c.h.b16 %v1067
        %v1794 = vunpack.c.l.b16 %v1068
        %v1795 = vunpack.c.h.b16 %v1068
        %v1796 = vunpack.c.l.b16 %v1069
        %v1797 = vunpack.c.h.b16 %v1069
        %v1798 = vunpack.c.l.b16 %v1070
        %v1799 = vunpack.c.h.b16 %v1070
        %v1800 = vunpack.c.l.b16 %v1071
        %v1801 = vunpack.c.h.b16 %v1071
        %v1802 = vunpack.c.l.b16 %v1072
        %v1803 = vunpack.c.h.b16 %v1072
        %v1804 = vunpack.c.l.b16 %v1073
        %v1805 = vunpack.c.h.b16 %v1073
        %v1806 = vunpack.c.l.b16 %v1074
        %v1807 = vunpack.c.h.b16 %v1074
        %v1808 = vunpack.c.l.b16 %v1075
        %v1809 = vunpack.c.h.b16 %v1075
        %v1810 = vunpack.c.l.b16 %v1076
        %v1811 = vunpack.c.h.b16 %v1076
        %v1812 = vunpack.c.l.b16 %v1077
        %v1813 = vunpack.c.h.b16 %v1077
        %v1814 = vunpack.c.l.b16 %v1078
        %v1815 = vunpack.c.h.b16 %v1078
        %v1816 = vunpack.c.l.b16 %v1079
        %v1817 = vunpack.c.h.b16 %v1079
        %v1818 = vunpack.c.l.b16 %v1080
        %v1819 = vunpack.c.h.b16 %v1080
        %v1820 = vunpack.c.l.b16 %v1081
        %v1821 = vunpack.c.h.b16 %v1081
        %v1822 = vunpack.c.l.b16 %v1082
        %v1823 = vunpack.c.h.b16 %v1082
        %v1824 = vunpack.c.l.b16 %v1083
        %v1825 = vunpack.c.h.b16 %v1083
        %v1826 = vunpack.c.l.b16 %v1084
        %v1827 = vunpack.c.h.b16 %v1084
        %v1828 = vunpack.c.l.b16 %v1085
        %v1829 = vunpack.c.h.b16 %v1085
        %v1830 = vunpack.c.l.b16 %v1086
        %v1831 = vunpack.c.h.b16 %v1086
        %v1832 = vunpack.c.l.b16 %v1087
        %v1833 = vunpack.c.h.b16 %v1087
        %v1834 = vunpack.c.l.b16 %v1088
        %v1835 = vunpack.c.h.b16 %v1088
        %v1836 = vunpack.c.l.b16 %v1089
        %v1837 = vunpack.c.h.b16 %v1089
        %v1838 = vunpack.c.l.b16 %v1090
        %v1839 = vunpack.c.h.b16 %v1090
        %v1840 = vunpack.c.l.b16 %v1091
        %v1841 = vunpack.c.h.b16 %v1091
        %v1842 = vunpack.c.l.b16 %v1092
        %v1843 = vunpack.c.h.b16 %v1092
        %v1844 = vunpack.c.l.b16 %v1093
        %v1845 = vunpack.c.h.b16 %v1093
        %v1846 = vunpack.c.l.b16 %v1094
        %v1847 = vunpack.c.h.b16 %v1094
        %v1848 = vunpack.c.l.b16 %v1095
        %v1849 = vunpack.c.h.b16 %v1095
        %v1850 = vunpack.c.l.b16 %v1096
        %v1851 = vunpack.c.h.b16 %v1096
        %v1852 = vunpack.c.l.b16 %v1097
        %v1853 = vunpack.c.h.b16 %v1097
        %v1854 = vunpack.c.l.b16 %v1098
        %v1855 = vunpack.c.h.b16 %v1098
        %v1856 = vunpack.c.l.b16 %v1099
        %v1857 = vunpack.c.h.b16 %v1099
        %v1858 = vunpack.c.l.b16 %v1100
        %v1859 = vunpack.c.h.b16 %v1100
        %v1860 = vunpack.c.l.b16 %v1101
        %v1861 = vunpack.c.h.b16 %v1101
        %v1862 = vunpack.c.l.b16 %v1102
        %v1863 = vunpack.c.h.b16 %v1102
        %v1864 = vunpack.c.l.b16 %v1103
        %v1865 = vunpack.c.h.b16 %v1103
        %v1866 = vunpack.c.l.b16 %v1104
        %v1867 = vunpack.c.h.b16 %v1104
        %v1868 = vunpack.c.l.b16 %v1105
        %v1869 = vunpack.c.h.b16 %v1105
        %v1870 = vunpack.c.l.b16 %v1106
        %v1871 = vunpack.c.h.b16 %v1106
        %v1872 = vunpack.c.l.b16 %v1107
        %v1873 = vunpack.c.h.b16 %v1107
        %v1874 = vunpack.c.l.b16 %v1108
        %v1875 = vunpack.c.h.b16 %v1108
        %v1876 = vunpack.c.l.b16 %v1109
        %v1877 = vunpack.c.h.b16 %v1109
        %v1878 = vunpack.c.l.b16 %v1110
        %v1879 = vunpack.c.h.b16 %v1110
        %v1880 = vunpack.c.l.b16 %v1111
        %v1881 = vunpack.c.h.b16 %v1111
        %v1882 = vunpack.c.l.b16 %v1112
        %v1883 = vunpack.c.h.b16 %v1112
        %v1884 = vunpack.c.l.b16 %v1113
        %v1885 = vunpack.c.h.b16 %v1113
        %v1886 = vunpack.c.l.b16 %v1114
        %v1887 = vunpack.c.h.b16 %v1114
        %v1888 = vunpack.c.l.b16 %v1115
        %v1889 = vunpack.c.h.b16 %v1115
        %v1890 = vunpack.c.l.b16 %v1116
        %v1891 = vunpack.c.h.b16 %v1116
        %v1892 = vunpack.c.l.b16 %v1117
        %v1893 = vunpack.c.h.b16 %v1117
        %v1894 = vunpack.c.l.b16 %v1118
        %v1895 = vunpack.c.h.b16 %v1118
        %v1896 = vunpack.c.l.b16 %v1119
        %v1897 = vunpack.c.h.b16 %v1119
        %v1898 = vunpack.c.l.b16 %v1120
        %v1899 = vunpack.c.h.b16 %v1120
        %v1900 = vunpack.c.l.b16 %v1121
        %v1901 = vunpack.c.h.b16 %v1121
        %v1902 = vunpack.c.l.b16 %v1122
        %v1903 = vunpack.c.h.b16 %v1122
        %v1904 = vunpack.c.l.b16 %v1123
        %v1905 = vunpack.c.h.b16 %v1123
        %v1906 = vunpack.c.l.b16 %v1124
        %v1907 = vunpack.c.h.b16 %v1124
        %v1908 = vunpack.c.l.b16 %v1125
        %v1909 = vunpack.c.h.b16 %v1125
        %v1910 = vunpack.c.l.b16 %v1126
        %v1911 = vunpack.c.h.b16 %v1126
        %v1912 = vunpack.c.l.b16 %v1127
        %v1913 = vunpack.c.h.b16 %v1127
        %v1914 = vunpack.c.l.b16 %v1128
        %v1915 = vunpack.c.h.b16 %v1128
        %v1916 = vunpack.c.l.b16 %v1129
        %v1917 = vunpack.c.h.b16 %v1129
        %v1918 = vunpack.c.l.b16 %v1130
        %v1919 = vunpack.c.h.b16 %v1130
        %v1920 = vunpack.c.l.b16 %v1131
        %v1921 = vunpack.c.h.b16 %v1131
        %v1922 = vunpack.c.l.b16 %v1132
        %v1923 = vunpack.c.h.b16 %v1132
        %v1924 = vunpack.c.l.b16 %v1133
        %v1925 = vunpack.c.h.b16 %v1133
        %v1926 = vunpack.c.l.b16 %v1134
        %v1927 = vunpack.c.h.b16 %v1134
        %v1928 = vunpack.c.l.b16 %v1135
        %v1929 = vunpack.c.h.b16 %v1135
        %v1930 = vunpack.c.l.b16 %v1136
        %v1931 = vunpack.c.h.b16 %v1136
        %v1932 = vunpack.c.l.b16 %v1137
        %v1933 = vunpack.c.h.b16 %v1137
        %v1934 = vunpack.c.l.b16 %v1138
        %v1935 = vunpack.c.h.b16 %v1138
        %v1936 = vunpack.c.l.b16 %v1139
        %v1937 = vunpack.c.h.b16 %v1139
        %v1938 = vunpack.c.l.b16 %v1140
        %v1939 = vunpack.c.h.b16 %v1140
        %v1940 = vunpack.c.l.b16 %v1141
        %v1941 = vunpack.c.h.b16 %v1141
        %v1942 = vunpack.c.l.b16 %v1142
        %v1943 = vunpack.c.h.b16 %v1142
        %v1944 = vunpack.c.l.b16 %v1143
        %v1945 = vunpack.c.h.b16 %v1143
        %v1946 = vunpack.c.l.b16 %v1144
        %v1947 = vunpack.c.h.b16 %v1144
        %v1948 = vunpack.c.l.b16 %v1145
        %v1949 = vunpack.c.h.b16 %v1145
        %v1950 = vunpack.c.l.b16 %v1146
        %v1951 = vunpack.c.h.b16 %v1146
        %v1952 = vunpack.c.l.b16 %v1147
        %v1953 = vunpack.c.h.b16 %v1147
        %v1954 = vunpack.c.l.b16 %v1148
        %v1955 = vunpack.c.h.b16 %v1148
        %v1956 = vunpack.c.l.b16 %v1149
        %v1957 = vunpack.c.h.b16 %v1149
        %v1958 = vunpack.c.l.b16 %v1150
        %v1959 = vunpack.c.h.b16 %v1150
        %v1960 = vunpack.c.l.b16 %v1151
        %v1961 = vunpack.c.h.b16 %v1151
        %v1962 = vunpack.c.l.b16 %v1152
        %v1963 = vunpack.c.h.b16 %v1152
        %v1964 = vunpack.c.l.b16 %v1153
        %v1965 = vunpack.c.h.b16 %v1153
        %v1966 = vunpack.c.l.b16 %v1154
        %v1967 = vunpack.c.h.b16 %v1154
        %v1968 = vunpack.c.l.b16 %v1155
        %v1969 = vunpack.c.h.b16 %v1155
        %v1970 = vunpack.c.l.b16 %v1156
        %v1971 = vunpack.c.h.b16 %v1156
        %v1972 = vunpack.c.l.b16 %v1157
        %v1973 = vunpack.c.h.b16 %v1157
        %v1974 = vunpack.c.l.b16 %v1158
        %v1975 = vunpack.c.h.b16 %v1158
        %v1976 = vunpack.c.l.b16 %v1159
        %v1977 = vunpack.c.h.b16 %v1159
        %v1978 = vunpack.c.l.b16 %v1160
        %v1979 = vunpack.c.h.b16 %v1160
        %v1980 = vunpack.c.l.b16 %v1161
        %v1981 = vunpack.c.h.b16 %v1161
        %v1982 = vunpack.c.l.b16 %v1162
        %v1983 = vunpack.c.h.b16 %v1162
        %v1984 = vunpack.c.l.b16 %v1163
        %v1985 = vunpack.c.h.b16 %v1163
        %v1986 = vunpack.c.l.b16 %v1164
        %v1987 = vunpack.c.h.b16 %v1164
        %v1988 = vunpack.c.l.b16 %v1165
        %v1989 = vunpack.c.h.b16 %v1165
        %v1990 = vunpack.c.l.b16 %v1166
        %v1991 = vunpack.c.h.b16 %v1166
        %v1992 = vunpack.c.l.b16 %v1167
        %v1993 = vunpack.c.h.b16 %v1167
        %v1994 = vunpack.c.l.b16 %v1168
        %v1995 = vunpack.c.h.b16 %v1168
        %v1996 = vunpack.c.l.b16 %v1169
        %v1997 = vunpack.c.h.b16 %v1169
        %v1998 = vunpack.c.l.b16 %v1170
        %v1999 = vunpack.c.h.b16 %v1170
        %v2000 = vunpack.c.l.b16 %v1171
        %v2001 = vunpack.c.h.b16 %v1171
        %v2002 = vunpack.c.l.b16 %v1172
        %v2003 = vunpack.c.h.b16 %v1172
        %v2004 = vunpack.c.l.b16 %v1173
        %v2005 = vunpack.c.h.b16 %v1173
        %v2006 = vunpack.c.l.b16 %v1174
        %v2007 = vunpack.c.h.b16 %v1174
        %v2008 = vunpack.c.l.b16 %v1175
        %v2009 = vunpack.c.h.b16 %v1175
        %v2010 = vunpack.c.l.b16 %v1176
        %v2011 = vunpack.c.h.b16 %v1176
        %v2012 = vunpack.c.l.b16 %v1177
        %v2013 = vunpack.c.h.b16 %v1177
        %v2014 = vunpack.c.l.b16 %v1178
        %v2015 = vunpack.c.h.b16 %v1178
        %v2016 = vunpack.c.l.b16 %v1179
        %v2017 = vunpack.c.h.b16 %v1179
        %v2018 = vunpack.c.l.b16 %v1180
        %v2019 = vunpack.c.h.b16 %v1180
        %v2020 = vunpack.c.l.b16 %v1181
        %v2021 = vunpack.c.h.b16 %v1181
        %v2022 = vunpack.c.l.b16 %v1182
        %v2023 = vunpack.c.h.b16 %v1182
        %v2024 = vunpack.c.l.b16 %v1183
        %v2025 = vunpack.c.h.b16 %v1183
        %v2026 = vunpack.c.l.b16 %v1184
        %v2027 = vunpack.c.h.b16 %v1184
        %v2028 = vunpack.c.l.b16 %v1185
        %v2029 = vunpack.c.h.b16 %v1185
        %v2030 = vunpack.c.l.b16 %v1186
        %v2031 = vunpack.c.h.b16 %v1186
        %v2032 = vunpack.c.l.b16 %v1187
        %v2033 = vunpack.c.h.b16 %v1187
        %v2034 = vunpack.c.l.b16 %v1188
        %v2035 = vunpack.c.h.b16 %v1188
        %v2036 = vunpack.c.l.b16 %v1189
        %v2037 = vunpack.c.h.b16 %v1189
        %v2038 = vunpack.c.l.b16 %v1190
        %v2039 = vunpack.c.h.b16 %v1190
        %v2040 = vunpack.c.l.b16 %v1191
        %v2041 = vunpack.c.h.b16 %v1191
        %v2042 = vunpack.c.l.b16 %v1192
        %v2043 = vunpack.c.h.b16 %v1192
        %v2044 = vunpack.c.l.b16 %v1193
        %v2045 = vunpack.c.h.b16 %v1193
        %v2046 = vunpack.c.l.b16 %v1194
        %v2047 = vunpack.c.h.b16 %v1194
        %v2048 = vunpack.c.l.b16 %v1195
        %v2049 = vunpack.c.h.b16 %v1195
        %v2050 = vunpack.c.l.b16 %v1196
        %v2051 = vunpack.c.h.b16 %v1196
        %v2052 = vunpack.c.l.b16 %v1197
        %v2053 = vunpack.c.h.b16 %v1197
        %v2054 = vunpack.c.l.b16 %v1198
        %v2055 = vunpack.c.h.b16 %v1198
        %v2056 = vunpack.c.l.b16 %v1199
        %v2057 = vunpack.c.h.b16 %v1199
        %v2058 = vunpack.c.l.b16 %v1200
        %v2059 = vunpack.c.h.b16 %v1200
        %v2060 = vunpack.c.l.b16 %v1201
        %v2061 = vunpack.c.h.b16 %v1201
        %v2062 = vunpack.c.l.b16 %v1202
        %v2063 = vunpack.c.h.b16 %v1202
        %v2064 = vunpack.c.l.b16 %v1203
        %v2065 = vunpack.c.h.b16 %v1203
        %v2066 = vunpack.c.l.b16 %v1204
        %v2067 = vunpack.c.h.b16 %v1204
        %v2068 = vunpack.c.l.b16 %v1205
        %v2069 = vunpack.c.h.b16 %v1205
        %v2070 = vunpack.c.l.b16 %v1206
        %v2071 = vunpack.c.h.b16 %v1206
        %v2072 = vunpack.c.l.b16 %v1207
        %v2073 = vunpack.c.h.b16 %v1207
        %v2074 = vunpack.c.l.b16 %v1208
        %v2075 = vunpack.c.h.b16 %v1208
        %v2076 = vunpack.c.l.b16 %v1209
        %v2077 = vunpack.c.h.b16 %v1209
        %v2078 = vunpack.c.l.b16 %v1210
        %v2079 = vunpack.c.h.b16 %v1210
        %v2080 = vunpack.c.l.b16 %v1211
        %v2081 = vunpack.c.h.b16 %v1211
        %v2082 = vunpack.c.l.b16 %v1212
        %v2083 = vunpack.c.h.b16 %v1212
        %v2084 = vunpack.c.l.b16 %v1213
        %v2085 = vunpack.c.h.b16 %v1213
        %v2086 = vunpack.c.l.b16 %v1214
        %v2087 = vunpack.c.h.b16 %v1214
        %v2088 = vunpack.c.l.b16 %v1215
        %v2089 = vunpack.c.h.b16 %v1215
        %v2090 = vunpack.c.l.b16 %v1216
        %v2091 = vunpack.c.h.b16 %v1216
        %v2092 = vunpack.c.l.b16 %v1217
        %v2093 = vunpack.c.h.b16 %v1217
        %v2094 = vunpack.c.l.b16 %v1218
        %v2095 = vunpack.c.h.b16 %v1218
        %v2096 = vunpack.c.l.b16 %v1219
        %v2097 = vunpack.c.h.b16 %v1219
        %v2098 = vunpack.c.l.b16 %v1220
        %v2099 = vunpack.c.h.b16 %v1220
        %v2100 = vunpack.c.l.b16 %v1221
        %v2101 = vunpack.c.h.b16 %v1221
        %v2102 = vunpack.c.l.b16 %v1222
        %v2103 = vunpack.c.h.b16 %v1222
        %v2104 = vunpack.c.l.b16 %v1223
        %v2105 = vunpack.c.h.b16 %v1223
        %v2106 = vunpack.c.l.b16 %v1224
        %v2107 = vunpack.c.h.b16 %v1224
        %v2108 = vunpack.c.l.b16 %v1225
        %v2109 = vunpack.c.h.b16 %v1225
        %v2110 = vunpack.c.l.b16 %v1226
        %v2111 = vunpack.c.h.b16 %v1226
        %v2112 = vunpack.c.l.b16 %v1227
        %v2113 = vunpack.c.h.b16 %v1227
        %v2114 = vunpack.c.l.b16 %v1228
        %v2115 = vunpack.c.h.b16 %v1228
        %v2116 = vunpack.c.l.b16 %v1229
        %v2117 = vunpack.c.h.b16 %v1229
        %v2118 = vunpack.c.l.b16 %v1230
        %v2119 = vunpack.c.h.b16 %v1230
        %v2120 = vunpack.c.l.b16 %v1231
        %v2121 = vunpack.c.h.b16 %v1231
        %v2122 = vunpack.c.l.b16 %v1232
        %v2123 = vunpack.c.h.b16 %v1232
        %v2124 = vunpack.c.l.b16 %v1233
        %v2125 = vunpack.c.h.b16 %v1233
        %v2126 = vunpack.c.l.b16 %v1234
        %v2127 = vunpack.c.h.b16 %v1234
        %v2128 = vunpack.c.l.b16 %v1235
        %v2129 = vunpack.c.h.b16 %v1235
        %v2130 = vunpack.c.l.b16 %v1236
        %v2131 = vunpack.c.h.b16 %v1236
        %v2132 = vunpack.c.l.b16 %v1237
        %v2133 = vunpack.c.h.b16 %v1237
        %v2134 = vpack.c.b16 %v1564, %v1558
        %v2135 = vpack.c.b16 %v1565, %v1559
        %v2136 = vpack.c.b16 %v1566, %v1560
        %v2137 = vpack.c.b16 %v1567, %v1561
        %v2138 = vpack.c.b16 %v1568, %v1562
        %v2139 = vpack.c.b16 %v1569, %v1563
        %v2140 = vpack.c.b16 %v1576, %v1570
        %v2141 = vpack.c.b16 %v1577, %v1571
        %v2142 = vpack.c.b16 %v1578, %v1572
        %v2143 = vpack.c.b16 %v1579, %v1573
        %v2144 = vpack.c.b16 %v1580, %v1574
        %v2145 = vpack.c.b16 %v1581, %v1575
        %v2146 = vpack.c.b16 %v1588, %v1582
        %v2147 = vpack.c.b16 %v1589, %v1583
        %v2148 = vpack.c.b16 %v1590, %v1584
        %v2149 = vpack.c.b16 %v1591, %v1585
        %v2150 = vpack.c.b16 %v1592, %v1586
        %v2151 = vpack.c.b16 %v1593, %v1587
        %v2152 = vpack.c.b16 %v1600, %v1594
        %v2153 = vpack.c.b16 %v1601, %v1595
        %v2154 = vpack.c.b16 %v1602, %v1596
        %v2155 = vpack.c.b16 %v1603, %v1597
        %v2156 = vpack.c.b16 %v1604, %v1598
        %v2157 = vpack.c.b16 %v1605, %v1599
        %v2158 = vpack.c.b16 %v1612, %v1606
        %v2159 = vpack.c.b16 %v1613, %v1607
        %v2160 = vpack.c.b16 %v1614, %v1608
        %v2161 = vpack.c.b16 %v1615, %v1609
        %v2162 = vpack.c.b16 %v1616, %v1610
        %v2163 = vpack.c.b16 %v1617, %v1611
        %v2164 = vpack.c.b16 %v1624, %v1618
        %v2165 = vpack.c.b16 %v1625, %v1619
        %v2166 = vpack.c.b16 %v1626, %v1620
        %v2167 = vpack.c.b16 %v1627, %v1621
        %v2168 = vpack.c.b16 %v1628, %v1622
        %v2169 = vpack.c.b16 %v1629, %v1623
        %v2170 = vpack.c.b16 %v1636, %v1630
        %v2171 = vpack.c.b16 %v1637, %v1631
        %v2172 = vpack.c.b16 %v1638, %v1632
        %v2173 = vpack.c.b16 %v1639, %v1633
        %v2174 = vpack.c.b16 %v1640, %v1634
        %v2175 = vpack.c.b16 %v1641, %v1635
        %v2176 = vpack.c.b16 %v1648, %v1642
        %v2177 = vpack.c.b16 %v1649, %v1643
        %v2178 = vpack.c.b16 %v1650, %v1644
        %v2179 = vpack.c.b16 %v1651, %v1645
        %v2180 = vpack.c.b16 %v1652, %v1646
        %v2181 = vpack.c.b16 %v1653, %v1647
        %v2182 = vpack.c.b16 %v1660, %v1654
        %v2183 = vpack.c.b16 %v1661, %v1655
        %v2184 = vpack.c.b16 %v1662, %v1656
        %v2185 = vpack.c.b16 %v1663, %v1657
        %v2186 = vpack.c.b16 %v1664, %v1658
        %v2187 = vpack.c.b16 %v1665, %v1659
        %v2188 = vpack.c.b16 %v1672, %v1666
        %v2189 = vpack.c.b16 %v1673, %v1667
        %v2190 = vpack.c.b16 %v1674, %v1668
        %v2191 = vpack.c.b16 %v1675, %v1669
        %v2192 = vpack.c.b16 %v1676, %v1670
        %v2193 = vpack.c.b16 %v1677, %v1671
        %v2194 = vpack.c.b16 %v1684, %v1678
        %v2195 = vpack.c.b16 %v1685, %v1679
        %v2196 = vpack.c.b16 %v1686, %v1680
        %v2197 = vpack.c.b16 %v1687, %v1681
        %v2198 = vpack.c.b16 %v1688, %v1682
        %v2199 = vpack.c.b16 %v1689, %v1683
        %v2200 = vpack.c.b16 %v1696, %v1690
        %v2201 = vpack.c.b16 %v1697, %v1691
        %v2202 = vpack.c.b16 %v1698, %v1692
        %v2203 = vpack.c.b16 %v1699, %v1693
        %v2204 = vpack.c.b16 %v1700, %v1694
        %v2205 = vpack.c.b16 %v1701, %v1695
        %v2206 = vpack.c.b16 %v1708, %v1702
        %v2207 = vpack.c.b16 %v1709, %v1703
        %v2208 = vpack.c.b16 %v1710, %v1704
        %v2209 = vpack.c.b16 %v1711, %v1705
        %v2210 = vpack.c.b16 %v1712, %v1706
        %v2211 = vpack.c.b16 %v1713, %v1707
        %v2212 = vpack.c.b16 %v1720, %v1714
        %v2213 = vpack.c.b16 %v1721, %v1715
        %v2214 = vpack.c.b16 %v1722, %v1716
        %v2215 = vpack.c.b16 %v1723, %v1717
        %v2216 = vpack.c.b16 %v1724, %v1718
        %v2217 = vpack.c.b16 %v1725, %v1719
        %v2218 = vpack.c.b16 %v1732, %v1726
        %v2219 = vpack.c.b16 %v1733, %v1727
        %v2220 = vpack.c.b16 %v1734, %v1728
        %v2221 = vpack.c.b16 %v1735, %v1729
        %v2222 = vpack.c.b16 %v1736, %v1730
        %v2223 = vpack.c.b16 %v1737, %v1731
        %v2224 = vpack.c.b16 %v1744, %v1738
        %v2225 = vpack.c.b16 %v1745, %v1739
        %v2226 = vpack.c.b16 %v1746, %v1740
        %v2227 = vpack.c.b16 %v1747, %v1741
        %v2228 = vpack.c.b16 %v1748, %v1742
        %v2229 = vpack.c.b16 %v1749, %v1743
        %v2230 = vpack.c.b16 %v1756, %v1750
        %v2231 = vpack.c.b16 %v1757, %v1751
        %v2232 = vpack.c.b16 %v1758, %v1752
        %v2233 = vpack.c.b16 %v1759, %v1753
        %v2234 = vpack.c.b16 %v1760, %v1754
        %v2235 = vpack.c.b16 %v1761, %v1755
        %v2236 = vpack.c.b16 %v1768, %v1762
        %v2237 = vpack.c.b16 %v1769, %v1763
        %v2238 = vpack.c.b16 %v1770, %v1764
        %v2239 = vpack.c.b16 %v1771, %v1765
        %v2240 = vpack.c.b16 %v1772, %v1766
        %v2241 = vpack.c.b16 %v1773, %v1767
        %v2242 = vpack.c.b16 %v1780, %v1774
        %v2243 = vpack.c.b16 %v1781, %v1775
        %v2244 = vpack.c.b16 %v1782, %v1776
        %v2245 = vpack.c.b16 %v1783, %v1777
        %v2246 = vpack.c.b16 %v1784, %v1778
        %v2247 = vpack.c.b16 %v1785, %v1779
        %v2248 = vpack.c.b16 %v1792, %v1786
        %v2249 = vpack.c.b16 %v1793, %v1787
        %v2250 = vpack.c.b16 %v1794, %v1788
        %v2251 = vpack.c.b16 %v1795, %v1789
        %v2252 = vpack.c.b16 %v1796, %v1790
        %v2253 = vpack.c.b16 %v1797, %v1791
        %v2254 = vpack.c.b16 %v1804, %v1798
        %v2255 = vpack.c.b16 %v1805, %v1799
        %v2256 = vpack.c.b16 %v1806, %v1800
        %v2257 = vpack.c.b16 %v1807, %v1801
        %v2258 = vpack.c.b16 %v1808, %v1802
        %v2259 = vpack.c.b16 %v1809, %v1803
        %v2260 = vpack.c.b16 %v1816, %v1810
        %v2261 = vpack.c.b16 %v1817, %v1811
        %v2262 = vpack.c.b16 %v1818, %v1812
        %v2263 = vpack.c.b16 %v1819, %v1813
        %v2264 = vpack.c.b16 %v1820, %v1814
        %v2265 = vpack.c.b16 %v1821, %v1815
        %v2266 = vpack.c.b16 %v1828, %v1822
        %v2267 = vpack.c.b16 %v1829, %v1823
        %v2268 = vpack.c.b16 %v1830, %v1824
        %v2269 = vpack.c.b16 %v1831, %v1825
        %v2270 = vpack.c.b16 %v1832, %v1826
        %v2271 = vpack.c.b16 %v1833, %v1827
        %v2272 = vpack.c.b16 %v1840, %v1834
        %v2273 = vpack.c.b16 %v1841, %v1835
        %v2274 = vpack.c.b16 %v1842, %v1836
        %v2275 = vpack.c.b16 %v1843, %v1837
        %v2276 = vpack.c.b16 %v1844, %v1838
        %v2277 = vpack.c.b16 %v1845, %v1839
        %v2278 = vpack.c.b16 %v1852, %v1846
        %v2279 = vpack.c.b16 %v1853, %v1847
        %v2280 = vpack.c.b16 %v1854, %v1848
        %v2281 = vpack.c.b16 %v1855, %v1849
        %v2282 = vpack.c.b16 %v1856, %v1850
        %v2283 = vpack.c.b16 %v1857, %v1851
        %v2284 = vpack.c.b16 %v1864, %v1858
        %v2285 = vpack.c.b16 %v1865, %v1859
        %v2286 = vpack.c.b16 %v1866, %v1860
        %v2287 = vpack.c.b16 %v1867, %v1861
        %v2288 = vpack.c.b16 %v1868, %v1862
        %v2289 = vpack.c.b16 %v1869, %v1863
        %v2290 = vpack.c.b16 %v1876, %v1870
        %v2291 = vpack.c.b16 %v1877, %v1871
        %v2292 = vpack.c.b16 %v1878, %v1872
        %v2293 = vpack.c.b16 %v1879, %v1873
        %v2294 = vpack.c.b16 %v1880, %v1874
        %v2295 = vpack.c.b16 %v1881, %v1875
        %v2296 = vpack.c.b16 %v1888, %v1882
        %v2297 = vpack.c.b16 %v1889, %v1883
        %v2298 = vpack.c.b16 %v1890, %v1884
        %v2299 = vpack.c.b16 %v1891, %v1885
        %v2300 = vpack.c.b16 %v1892, %v1886
        %v2301 = vpack.c.b16 %v1893, %v1887
        %v2302 = vpack.c.b16 %v1900, %v1894
        %v2303 = vpack.c.b16 %v1901, %v1895
        %v2304 = vpack.c.b16 %v1902, %v1896
        %v2305 = vpack.c.b16 %v1903, %v1897
        %v2306 = vpack.c.b16 %v1904, %v1898
        %v2307 = vpack.c.b16 %v1905, %v1899
        %v2308 = vpack.c.b16 %v1912, %v1906
        %v2309 = vpack.c.b16 %v1913, %v1907
        %v2310 = vpack.c.b16 %v1914, %v1908
        %v2311 = vpack.c.b16 %v1915, %v1909
        %v2312 = vpack.c.b16 %v1916, %v1910
        %v2313 = vpack.c.b16 %v1917, %v1911
        %v2314 = vpack.c.b16 %v1924, %v1918
        %v2315 = vpack.c.b16 %v1925, %v1919
        %v2316 = vpack.c.b16 %v1926, %v1920
        %v2317 = vpack.c.b16 %v1927, %v1921
        %v2318 = vpack.c.b16 %v1928, %v1922
        %v2319 = vpack.c.b16 %v1929, %v1923
        %v2320 = vpack.c.b16 %v1936, %v1930
        %v2321 = vpack.c.b16 %v1937, %v1931
        %v2322 = vpack.c.b16 %v1938, %v1932
        %v2323 = vpack.c.b16 %v1939, %v1933
        %v2324 = vpack.c.b16 %v1940, %v1934
        %v2325 = vpack.c.b16 %v1941, %v1935
        %v2326 = vpack.c.b16 %v1948, %v1942
        %v2327 = vpack.c.b16 %v1949, %v1943
        %v2328 = vpack.c.b16 %v1950, %v1944
        %v2329 = vpack.c.b16 %v1951, %v1945
        %v2330 = vpack.c.b16 %v1952, %v1946
        %v2331 = vpack.c.b16 %v1953, %v1947
        %v2332 = vpack.c.b16 %v1960, %v1954
        %v2333 = vpack.c.b16 %v1961, %v1955
        %v2334 = vpack.c.b16 %v1962, %v1956
        %v2335 = vpack.c.b16 %v1963, %v1957
        %v2336 = vpack.c.b16 %v1964, %v1958
        %v2337 = vpack.c.b16 %v1965, %v1959
        %v2338 = vpack.c.b16 %v1972, %v1966
        %v2339 = vpack.c.b16 %v1973, %v1967
        %v2340 = vpack.c.b16 %v1974, %v1968
        %v2341 = vpack.c.b16 %v1975, %v1969
        %v2342 = vpack.c.b16 %v1976, %v1970
        %v2343 = vpack.c.b16 %v1977, %v1971
        %v2344 = vpack.c.b16 %v1984, %v1978
        %v2345 = vpack.c.b16 %v1985, %v1979
        %v2346 = vpack.c.b16 %v1986, %v1980
        %v2347 = vpack.c.b16 %v1987, %v1981
        %v2348 = vpack.c.b16 %v1988, %v1982
        %v2349 = vpack.c.b16 %v1989, %v1983
        %v2350 = vpack.c.b16 %v1996, %v1990
        %v2351 = vpack.c.b16 %v1997, %v1991
        %v2352 = vpack.c.b16 %v1998, %v1992
        %v2353 = vpack.c.b16 %v1999, %v1993
        %v2354 = vpack.c.b16 %v2000, %v1994
        %v2355 = vpack.c.b16 %v2001, %v1995
        %v2356 = vpack.c.b16 %v2008, %v2002
        %v2357 = vpack.c.b16 %v2009, %v2003
        %v2358 = vpack.c.b16 %v2010, %v2004
        %v2359 = vpack.c.b16 %v2011, %v2005
        %v2360 = vpack.c.b16 %v2012, %v2006
        %v2361 = vpack.c.b16 %v2013, %v2007
        %v2362 = vpack.c.b16 %v2020, %v2014
        %v2363 = vpack.c.b16 %v2021, %v2015
        %v2364 = vpack.c.b16 %v2022, %v2016
        %v2365 = vpack.c.b16 %v2023, %v2017
        %v2366 = vpack.c.b16 %v2024, %v2018
        %v2367 = vpack.c.b16 %v2025, %v2019
        %v2368 = vpack.c.b16 %v2032, %v2026
        %v2369 = vpack.c.b16 %v2033, %v2027
        %v2370 = vpack.c.b16 %v2034, %v2028
        %v2371 = vpack.c.b16 %v2035, %v2029
        %v2372 = vpack.c.b16 %v2036, %v2030
        %v2373 = vpack.c.b16 %v2037, %v2031
        %v2374 = vpack.c.b16 %v2044, %v2038
        %v2375 = vpack.c.b16 %v2045, %v2039
        %v2376 = vpack.c.b16 %v2046, %v2040
        %v2377 = vpack.c.b16 %v2047, %v2041
        %v2378 = vpack.c.b16 %v2048, %v2042
        %v2379 = vpack.c.b16 %v2049, %v2043
        %v2380 = vpack.c.b16 %v2056, %v2050
        %v2381 = vpack.c.b16 %v2057, %v2051
        %v2382 = vpack.c.b16 %v2058, %v2052
        %v2383 = vpack.c.b16 %v2059, %v2053
        %v2384 = vpack.c.b16 %v2060, %v2054
        %v2385 = vpack.c.b16 %v2061, %v2055
        %v2386 = vpack.c.b16 %v2068, %v2062
        %v2387 = vpack.c.b16 %v2069, %v2063
        %v2388 = vpack.c.b16 %v2070, %v2064
        %v2389 = vpack.c.b16 %v2071, %v2065
        %v2390 = vpack.c.b16 %v2072, %v2066
        %v2391 = vpack.c.b16 %v2073, %v2067
        %v2392 = vpack.c.b16 %v2080, %v2074
        %v2393 = vpack.c.b16 %v2081, %v2075
        %v2394 = vpack.c.b16 %v2082, %v2076
        %v2395 = vpack.c.b16 %v2083, %v2077
        %v2396 = vpack.c.b16 %v2084, %v2078
        %v2397 = vpack.c.b16 %v2085, %v2079
        %v2398 = vpack.c.b16 %v2092, %v2086
        %v2399 = vpack.c.b16 %v2093, %v2087
        %v2400 = vpack.c.b16 %v2094, %v2088
        %v2401 = vpack.c.b16 %v2095, %v2089
        %v2402 = vpack.c.b16 %v2096, %v2090
        %v2403 = vpack.c.b16 %v2097, %v2091
        %v2404 = vpack.c.b16 %v2104, %v2098
        %v2405 = vpack.c.b16 %v2105, %v2099
        %v2406 = vpack.c.b16 %v2106, %v2100
        %v2407 = vpack.c.b16 %v2107, %v2101
        %v2408 = vpack.c.b16 %v2108, %v2102
        %v2409 = vpack.c.b16 %v2109, %v2103
        %v2410 = vpack.c.b16 %v2116, %v2110
        %v2411 = vpack.c.b16 %v2117, %v2111
        %v2412 = vpack.c.b16 %v2118, %v2112
        %v2413 = vpack.c.b16 %v2119, %v2113
        %v2414 = vpack.c.b16 %v2120, %v2114
        %v2415 = vpack.c.b16 %v2121, %v2115
        %v2416 = vpack.c.b16 %v2128, %v2122
        %v2417 = vpack.c.b16 %v2129, %v2123
        %v2418 = vpack.c.b16 %v2130, %v2124
        %v2419 = vpack.c.b16 %v2131, %v2125
        %v2420 = vpack.c.b16 %v2132, %v2126
        %v2421 = vpack.c.b16 %v2133, %v2127
        %2710 = vmatprep.subr.bf16.mxu0 %v2177
        %2711 = vmatpush1.bf16.msra.mxu0 %v2176
        %2712 = vmatprep.subr.bf16.mxu0 %v2171
        %2713 = vmatpush1.bf16.msra.mxu0 %v2170
        %2714 = vmatprep.subr.bf16.mxu0 %v2165
        %2715 = vmatpush1.bf16.msra.mxu0 %v2164
        %2716 = vmatprep.subr.bf16.mxu0 %v2159
        %2717 = vmatpush1.bf16.msra.mxu0 %v2158
        %2718 = vmatprep.subr.bf16.mxu0 %v2153
        %2719 = vmatpush1.bf16.msra.mxu0 %v2152
        %2720 = vmatprep.subr.bf16.mxu0 %v2147
        %2721 = vmatpush1.bf16.msra.mxu0 %v2146
        %2722 = vmatprep.subr.bf16.mxu0 %v2141
        %2723 = vmatpush1.bf16.msra.mxu0 %v2140
        %2724 = vmatprep.subr.bf16.mxu0 %v2135
        %2725 = vmatpush1.bf16.msra.mxu0 %v2134
        %2726 = vmatprep.subr.bf16.mxu0 %v2225
        %2727 = vmatpush2.bf16.msra.mxu0 %v2224
        %2728 = vmatprep.subr.bf16.mxu0 %v2219
        %2729 = vmatpush2.bf16.msra.mxu0 %v2218
        %2730 = vmatprep.subr.bf16.mxu0 %v2213
        %2731 = vmatpush2.bf16.msra.mxu0 %v2212
        %2732 = vmatprep.subr.bf16.mxu0 %v2207
        %2733 = vmatpush2.bf16.msra.mxu0 %v2206
        %2734 = vmatprep.subr.bf16.mxu0 %v2201
        %2735 = vmatpush2.bf16.msra.mxu0 %v2200
        %2736 = vmatprep.subr.bf16.mxu0 %v2195
        %2737 = vmatpush2.bf16.msra.mxu0 %v2194
        %2738 = vmatprep.subr.bf16.mxu0 %v2189
        %2739 = vmatpush2.bf16.msra.mxu0 %v2188
        %2740 = vmatprep.subr.bf16.mxu0 %v2183
        %2741 = vmatpush2.bf16.msra.mxu0 %v2182
        %2742 = vmatprep.mubr.bf16.mxu0 %v945
        %2743 = vmatmul.mubr.bf16.gmra.mxu0 %v944
        %v2744 = vpop.f32.mrf.mxu0
        %v2745 = vadd.f32 %v1243, %v2744
        %v2746 = vpop.f32.mrf.mxu0
        %v2747 = vadd.f32 %v1247, %v2746
        %v2748 = vpop.f32.mrf.mxu0
        %v2749 = vpop.f32.mrf.mxu0
        %2750 = vdwg.mxu0
        %2751 = vmatprep.subr.bf16.mxu0 %v2273
        %2752 = vmatpush1.bf16.msra.mxu0 %v2272
        %2753 = vmatprep.subr.bf16.mxu0 %v2267
        %2754 = vmatpush1.bf16.msra.mxu0 %v2266
        %2755 = vmatprep.subr.bf16.mxu0 %v2261
        %2756 = vmatpush1.bf16.msra.mxu0 %v2260
        %2757 = vmatprep.subr.bf16.mxu0 %v2255
        %2758 = vmatpush1.bf16.msra.mxu0 %v2254
        %2759 = vmatprep.subr.bf16.mxu0 %v2249
        %2760 = vmatpush1.bf16.msra.mxu0 %v2248
        %2761 = vmatprep.subr.bf16.mxu0 %v2243
        %2762 = vmatpush1.bf16.msra.mxu0 %v2242
        %2763 = vmatprep.subr.bf16.mxu0 %v2237
        %2764 = vmatpush1.bf16.msra.mxu0 %v2236
        %2765 = vmatprep.subr.bf16.mxu0 %v2231
        %2766 = vmatpush1.bf16.msra.mxu0 %v2230
        %2767 = vmatprep.subr.bf16.mxu0 %v2321
        %2768 = vmatpush2.bf16.msra.mxu0 %v2320
        %2769 = vmatprep.subr.bf16.mxu0 %v2315
        %2770 = vmatpush2.bf16.msra.mxu0 %v2314
        %2771 = vmatprep.subr.bf16.mxu0 %v2309
        %2772 = vmatpush2.bf16.msra.mxu0 %v2308
        %2773 = vmatprep.subr.bf16.mxu0 %v2303
        %2774 = vmatpush2.bf16.msra.mxu0 %v2302
        %2775 = vmatprep.subr.bf16.mxu0 %v2297
        %2776 = vmatpush2.bf16.msra.mxu0 %v2296
        %2777 = vmatprep.subr.bf16.mxu0 %v2291
        %2778 = vmatpush2.bf16.msra.mxu0 %v2290
        %2779 = vmatprep.subr.bf16.mxu0 %v2285
        %2780 = vmatpush2.bf16.msra.mxu0 %v2284
        %2781 = vmatprep.subr.bf16.mxu0 %v2279
        %2782 = vmatpush2.bf16.msra.mxu0 %v2278
        %2783 = vmatprep.mubr.bf16.mxu0 %v947
        %2784 = vmatmul.mubr.bf16.gmra.mxu0 %v946
        %v2785 = vpop.f32.mrf.mxu0
        %v2786 = vadd.f32 %v2745, %v2785
        %v2787 = vpop.f32.mrf.mxu0
        %v2788 = vadd.f32 %v2747, %v2787
        %v2789 = vpop.f32.mrf.mxu0
        %v2790 = vpop.f32.mrf.mxu0
        %2791 = vdwg.mxu0
        %2792 = vmatprep.subr.bf16.mxu0 %v2369
        %2793 = vmatpush1.bf16.msra.mxu0 %v2368
        %2794 = vmatprep.subr.bf16.mxu0 %v2363
        %2795 = vmatpush1.bf16.msra.mxu0 %v2362
        %2796 = vmatprep.subr.bf16.mxu0 %v2357
        %2797 = vmatpush1.bf16.msra.mxu0 %v2356
        %2798 = vmatprep.subr.bf16.mxu0 %v2351
        %2799 = vmatpush1.bf16.msra.mxu0 %v2350
        %2800 = vmatprep.subr.bf16.mxu0 %v2345
        %2801 = vmatpush1.bf16.msra.mxu0 %v2344
        %2802 = vmatprep.subr.bf16.mxu0 %v2339
        %2803 = vmatpush1.bf16.msra.mxu0 %v2338
        %2804 = vmatprep.subr.bf16.mxu0 %v2333
        %2805 = vmatpush1.bf16.msra.mxu0 %v2332
        %2806 = vmatprep.subr.bf16.mxu0 %v2327
        %2807 = vmatpush1.bf16.msra.mxu0 %v2326
        %2808 = vmatprep.subr.bf16.mxu0 %v2417
        %2809 = vmatpush2.bf16.msra.mxu0 %v2416
        %2810 = vmatprep.subr.bf16.mxu0 %v2411
        %2811 = vmatpush2.bf16.msra.mxu0 %v2410
        %2812 = vmatprep.subr.bf16.mxu0 %v2405
        %2813 = vmatpush2.bf16.msra.mxu0 %v2404
        %2814 = vmatprep.subr.bf16.mxu0 %v2399
        %2815 = vmatpush2.bf16.msra.mxu0 %v2398
        %2816 = vmatprep.subr.bf16.mxu0 %v2393
        %2817 = vmatpush2.bf16.msra.mxu0 %v2392
        %2818 = vmatprep.subr.bf16.mxu0 %v2387
        %2819 = vmatpush2.bf16.msra.mxu0 %v2386
        %2820 = vmatprep.subr.bf16.mxu0 %v2381
        %2821 = vmatpush2.bf16.msra.mxu0 %v2380
        %2822 = vmatprep.subr.bf16.mxu0 %v2375
        %2823 = vmatpush2.bf16.msra.mxu0 %v2374
        %2824 = vmatprep.mubr.bf16.mxu0 %v949
        %2825 = vmatmul.mubr.bf16.gmra.mxu0 %v948
        %v2826 = vpop.f32.mrf.mxu0
        %v2827 = vadd.f32 %v2786, %v2826
        %v2828 = vpop.f32.mrf.mxu0
        %v2829 = vadd.f32 %v2788, %v2828
        %v2830 = vpop.f32.mrf.mxu0
        %v2831 = vpop.f32.mrf.mxu0
        %2832 = vdwg.mxu0
        %2833 = vmatprep.subr.bf16.mxu0 %v2179
        %2834 = vmatpush1.bf16.msra.mxu0 %v2178
        %2835 = vmatprep.subr.bf16.mxu0 %v2173
        %2836 = vmatpush1.bf16.msra.mxu0 %v2172
        %2837 = vmatprep.subr.bf16.mxu0 %v2167
        %2838 = vmatpush1.bf16.msra.mxu0 %v2166
        %2839 = vmatprep.subr.bf16.mxu0 %v2161
        %2840 = vmatpush1.bf16.msra.mxu0 %v2160
        %2841 = vmatprep.subr.bf16.mxu0 %v2155
        %2842 = vmatpush1.bf16.msra.mxu0 %v2154
        %2843 = vmatprep.subr.bf16.mxu0 %v2149
        %2844 = vmatpush1.bf16.msra.mxu0 %v2148
        %2845 = vmatprep.subr.bf16.mxu0 %v2143
        %2846 = vmatpush1.bf16.msra.mxu0 %v2142
        %2847 = vmatprep.subr.bf16.mxu0 %v2137
        %2848 = vmatpush1.bf16.msra.mxu0 %v2136
        %2849 = vmatprep.subr.bf16.mxu0 %v2227
        %2850 = vmatpush2.bf16.msra.mxu0 %v2226
        %2851 = vmatprep.subr.bf16.mxu0 %v2221
        %2852 = vmatpush2.bf16.msra.mxu0 %v2220
        %2853 = vmatprep.subr.bf16.mxu0 %v2215
        %2854 = vmatpush2.bf16.msra.mxu0 %v2214
        %2855 = vmatprep.subr.bf16.mxu0 %v2209
        %2856 = vmatpush2.bf16.msra.mxu0 %v2208
        %2857 = vmatprep.subr.bf16.mxu0 %v2203
        %2858 = vmatpush2.bf16.msra.mxu0 %v2202
        %2859 = vmatprep.subr.bf16.mxu0 %v2197
        %2860 = vmatpush2.bf16.msra.mxu0 %v2196
        %2861 = vmatprep.subr.bf16.mxu0 %v2191
        %2862 = vmatpush2.bf16.msra.mxu0 %v2190
        %2863 = vmatprep.subr.bf16.mxu0 %v2185
        %2864 = vmatpush2.bf16.msra.mxu0 %v2184
        %2865 = vmatprep.mubr.bf16.mxu0 %v945
        %2866 = vmatmul.mubr.bf16.gmra.mxu0 %v944
        %v2867 = vpop.f32.mrf.mxu0
        %v2868 = vadd.f32 %v1251, %v2867
        %v2869 = vpop.f32.mrf.mxu0
        %v2870 = vadd.f32 %v1255, %v2869
        %v2871 = vpop.f32.mrf.mxu0
        %v2872 = vpop.f32.mrf.mxu0
        %2873 = vdwg.mxu0
        %2874 = vmatprep.subr.bf16.mxu0 %v2275
        %2875 = vmatpush1.bf16.msra.mxu0 %v2274
        %2876 = vmatprep.subr.bf16.mxu0 %v2269
        %2877 = vmatpush1.bf16.msra.mxu0 %v2268
        %2878 = vmatprep.subr.bf16.mxu0 %v2263
        %2879 = vmatpush1.bf16.msra.mxu0 %v2262
        %2880 = vmatprep.subr.bf16.mxu0 %v2257
        %2881 = vmatpush1.bf16.msra.mxu0 %v2256
        %2882 = vmatprep.subr.bf16.mxu0 %v2251
        %2883 = vmatpush1.bf16.msra.mxu0 %v2250
        %2884 = vmatprep.subr.bf16.mxu0 %v2245
        %2885 = vmatpush1.bf16.msra.mxu0 %v2244
        %2886 = vmatprep.subr.bf16.mxu0 %v2239
        %2887 = vmatpush1.bf16.msra.mxu0 %v2238
        %2888 = vmatprep.subr.bf16.mxu0 %v2233
        %2889 = vmatpush1.bf16.msra.mxu0 %v2232
        %2890 = vmatprep.subr.bf16.mxu0 %v2323
        %2891 = vmatpush2.bf16.msra.mxu0 %v2322
        %2892 = vmatprep.subr.bf16.mxu0 %v2317
        %2893 = vmatpush2.bf16.msra.mxu0 %v2316
        %2894 = vmatprep.subr.bf16.mxu0 %v2311
        %2895 = vmatpush2.bf16.msra.mxu0 %v2310
        %2896 = vmatprep.subr.bf16.mxu0 %v2305
        %2897 = vmatpush2.bf16.msra.mxu0 %v2304
        %2898 = vmatprep.subr.bf16.mxu0 %v2299
        %2899 = vmatpush2.bf16.msra.mxu0 %v2298
        %2900 = vmatprep.subr.bf16.mxu0 %v2293
        %2901 = vmatpush2.bf16.msra.mxu0 %v2292
        %2902 = vmatprep.subr.bf16.mxu0 %v2287
        %2903 = vmatpush2.bf16.msra.mxu0 %v2286
        %2904 = vmatprep.subr.bf16.mxu0 %v2281
        %2905 = vmatpush2.bf16.msra.mxu0 %v2280
        %2906 = vmatprep.mubr.bf16.mxu0 %v947
        %2907 = vmatmul.mubr.bf16.gmra.mxu0 %v946
        %v2908 = vpop.f32.mrf.mxu0
        %v2909 = vadd.f32 %v2868, %v2908
        %v2910 = vpop.f32.mrf.mxu0
        %v2911 = vadd.f32 %v2870, %v2910
        %v2912 = vpop.f32.mrf.mxu0
        %v2913 = vpop.f32.mrf.mxu0
        %2914 = vdwg.mxu0
        %2915 = vmatprep.subr.bf16.mxu0 %v2371
        %2916 = vmatpush1.bf16.msra.mxu0 %v2370
        %2917 = vmatprep.subr.bf16.mxu0 %v2365
        %2918 = vmatpush1.bf16.msra.mxu0 %v2364
        %2919 = vmatprep.subr.bf16.mxu0 %v2359
        %2920 = vmatpush1.bf16.msra.mxu0 %v2358
        %2921 = vmatprep.subr.bf16.mxu0 %v2353
        %2922 = vmatpush1.bf16.msra.mxu0 %v2352
        %2923 = vmatprep.subr.bf16.mxu0 %v2347
        %2924 = vmatpush1.bf16.msra.mxu0 %v2346
        %2925 = vmatprep.subr.bf16.mxu0 %v2341
        %2926 = vmatpush1.bf16.msra.mxu0 %v2340
        %2927 = vmatprep.subr.bf16.mxu0 %v2335
        %2928 = vmatpush1.bf16.msra.mxu0 %v2334
        %2929 = vmatprep.subr.bf16.mxu0 %v2329
        %2930 = vmatpush1.bf16.msra.mxu0 %v2328
        %2931 = vmatprep.subr.bf16.mxu0 %v2419
        %2932 = vmatpush2.bf16.msra.mxu0 %v2418
        %2933 = vmatprep.subr.bf16.mxu0 %v2413
        %2934 = vmatpush2.bf16.msra.mxu0 %v2412
        %2935 = vmatprep.subr.bf16.mxu0 %v2407
        %2936 = vmatpush2.bf16.msra.mxu0 %v2406
        %2937 = vmatprep.subr.bf16.mxu0 %v2401
        %2938 = vmatpush2.bf16.msra.mxu0 %v2400
        %2939 = vmatprep.subr.bf16.mxu0 %v2395
        %2940 = vmatpush2.bf16.msra.mxu0 %v2394
        %2941 = vmatprep.subr.bf16.mxu0 %v2389
        %2942 = vmatpush2.bf16.msra.mxu0 %v2388
        %2943 = vmatprep.subr.bf16.mxu0 %v2383
        %2944 = vmatpush2.bf16.msra.mxu0 %v2382
        %2945 = vmatprep.subr.bf16.mxu0 %v2377
        %2946 = vmatpush2.bf16.msra.mxu0 %v2376
        %2947 = vmatprep.mubr.bf16.mxu0 %v949
        %2948 = vmatmul.mubr.bf16.gmra.mxu0 %v948
        %v2949 = vpop.f32.mrf.mxu0
        %v2950 = vadd.f32 %v2909, %v2949
        %v2951 = vpop.f32.mrf.mxu0
        %v2952 = vadd.f32 %v2911, %v2951
        %v2953 = vpop.f32.mrf.mxu0
        %v2954 = vpop.f32.mrf.mxu0
        %2955 = vdwg.mxu0
        %2956 = vmatprep.subr.bf16.mxu0 %v2181
        %2957 = vmatpush1.bf16.msra.mxu0 %v2180
        %2958 = vmatprep.subr.bf16.mxu0 %v2175
        %2959 = vmatpush1.bf16.msra.mxu0 %v2174
        %2960 = vmatprep.subr.bf16.mxu0 %v2169
        %2961 = vmatpush1.bf16.msra.mxu0 %v2168
        %2962 = vmatprep.subr.bf16.mxu0 %v2163
        %2963 = vmatpush1.bf16.msra.mxu0 %v2162
        %2964 = vmatprep.subr.bf16.mxu0 %v2157
        %2965 = vmatpush1.bf16.msra.mxu0 %v2156
        %2966 = vmatprep.subr.bf16.mxu0 %v2151
        %2967 = vmatpush1.bf16.msra.mxu0 %v2150
        %2968 = vmatprep.subr.bf16.mxu0 %v2145
        %2969 = vmatpush1.bf16.msra.mxu0 %v2144
        %2970 = vmatprep.subr.bf16.mxu0 %v2139
        %2971 = vmatpush1.bf16.msra.mxu0 %v2138
        %2972 = vmatprep.subr.bf16.mxu0 %v2229
        %2973 = vmatpush2.bf16.msra.mxu0 %v2228
        %2974 = vmatprep.subr.bf16.mxu0 %v2223
        %2975 = vmatpush2.bf16.msra.mxu0 %v2222
        %2976 = vmatprep.subr.bf16.mxu0 %v2217
        %2977 = vmatpush2.bf16.msra.mxu0 %v2216
        %2978 = vmatprep.subr.bf16.mxu0 %v2211
        %2979 = vmatpush2.bf16.msra.mxu0 %v2210
        %2980 = vmatprep.subr.bf16.mxu0 %v2205
        %2981 = vmatpush2.bf16.msra.mxu0 %v2204
        %2982 = vmatprep.subr.bf16.mxu0 %v2199
        %2983 = vmatpush2.bf16.msra.mxu0 %v2198
        %2984 = vmatprep.subr.bf16.mxu0 %v2193
        %2985 = vmatpush2.bf16.msra.mxu0 %v2192
        %2986 = vmatprep.subr.bf16.mxu0 %v2187
        %2987 = vmatpush2.bf16.msra.mxu0 %v2186
        %2988 = vmatprep.mubr.bf16.mxu0 %v945
        %2989 = vmatmul.mubr.bf16.gmra.mxu0 %v944
        %v2990 = vpop.f32.mrf.mxu0
        %v2991 = vadd.f32 %v1259, %v2990
        %v2992 = vpop.f32.mrf.mxu0
        %v2993 = vadd.f32 %v1263, %v2992
        %v2994 = vpop.f32.mrf.mxu0
        %v2995 = vpop.f32.mrf.mxu0
        %2996 = vdwg.mxu0
        %2997 = vmatprep.subr.bf16.mxu0 %v2277
        %2998 = vmatpush1.bf16.msra.mxu0 %v2276
        %2999 = vmatprep.subr.bf16.mxu0 %v2271
        %3000 = vmatpush1.bf16.msra.mxu0 %v2270
        %3001 = vmatprep.subr.bf16.mxu0 %v2265
        %3002 = vmatpush1.bf16.msra.mxu0 %v2264
        %3003 = vmatprep.subr.bf16.mxu0 %v2259
        %3004 = vmatpush1.bf16.msra.mxu0 %v2258
        %3005 = vmatprep.subr.bf16.mxu0 %v2253
        %3006 = vmatpush1.bf16.msra.mxu0 %v2252
        %3007 = vmatprep.subr.bf16.mxu0 %v2247
        %3008 = vmatpush1.bf16.msra.mxu0 %v2246
        %3009 = vmatprep.subr.bf16.mxu0 %v2241
        %3010 = vmatpush1.bf16.msra.mxu0 %v2240
        %3011 = vmatprep.subr.bf16.mxu0 %v2235
        %3012 = vmatpush1.bf16.msra.mxu0 %v2234
        %3013 = vmatprep.subr.bf16.mxu0 %v2325
        %3014 = vmatpush2.bf16.msra.mxu0 %v2324
        %3015 = vmatprep.subr.bf16.mxu0 %v2319
        %3016 = vmatpush2.bf16.msra.mxu0 %v2318
        %3017 = vmatprep.subr.bf16.mxu0 %v2313
        %3018 = vmatpush2.bf16.msra.mxu0 %v2312
        %3019 = vmatprep.subr.bf16.mxu0 %v2307
        %3020 = vmatpush2.bf16.msra.mxu0 %v2306
        %3021 = vmatprep.subr.bf16.mxu0 %v2301
        %3022 = vmatpush2.bf16.msra.mxu0 %v2300
        %3023 = vmatprep.subr.bf16.mxu0 %v2295
        %3024 = vmatpush2.bf16.msra.mxu0 %v2294
        %3025 = vmatprep.subr.bf16.mxu0 %v2289
        %3026 = vmatpush2.bf16.msra.mxu0 %v2288
        %3027 = vmatprep.subr.bf16.mxu0 %v2283
        %3028 = vmatpush2.bf16.msra.mxu0 %v2282
        %3029 = vmatprep.mubr.bf16.mxu0 %v947
        %3030 = vmatmul.mubr.bf16.gmra.mxu0 %v946
        %v3031 = vpop.f32.mrf.mxu0
        %v3032 = vadd.f32 %v2991, %v3031
        %v3033 = vpop.f32.mrf.mxu0
        %v3034 = vadd.f32 %v2993, %v3033
        %v3035 = vpop.f32.mrf.mxu0
        %v3036 = vpop.f32.mrf.mxu0
        %3037 = vdwg.mxu0
        %3038 = vmatprep.subr.bf16.mxu0 %v2373
        %3039 = vmatpush1.bf16.msra.mxu0 %v2372
        %3040 = vmatprep.subr.bf16.mxu0 %v2367
        %3041 = vmatpush1.bf16.msra.mxu0 %v2366
        %3042 = vmatprep.subr.bf16.mxu0 %v2361
        %3043 = vmatpush1.bf16.msra.mxu0 %v2360
        %3044 = vmatprep.subr.bf16.mxu0 %v2355
        %3045 = vmatpush1.bf16.msra.mxu0 %v2354
        %3046 = vmatprep.subr.bf16.mxu0 %v2349
        %3047 = vmatpush1.bf16.msra.mxu0 %v2348
        %3048 = vmatprep.subr.bf16.mxu0 %v2343
        %3049 = vmatpush1.bf16.msra.mxu0 %v2342
        %3050 = vmatprep.subr.bf16.mxu0 %v2337
        %3051 = vmatpush1.bf16.msra.mxu0 %v2336
        %3052 = vmatprep.subr.bf16.mxu0 %v2331
        %3053 = vmatpush1.bf16.msra.mxu0 %v2330
        %3054 = vmatprep.subr.bf16.mxu0 %v2421
        %3055 = vmatpush2.bf16.msra.mxu0 %v2420
        %3056 = vmatprep.subr.bf16.mxu0 %v2415
        %3057 = vmatpush2.bf16.msra.mxu0 %v2414
        %3058 = vmatprep.subr.bf16.mxu0 %v2409
        %3059 = vmatpush2.bf16.msra.mxu0 %v2408
        %3060 = vmatprep.subr.bf16.mxu0 %v2403
        %3061 = vmatpush2.bf16.msra.mxu0 %v2402
        %3062 = vmatprep.subr.bf16.mxu0 %v2397
        %3063 = vmatpush2.bf16.msra.mxu0 %v2396
        %3064 = vmatprep.subr.bf16.mxu0 %v2391
        %3065 = vmatpush2.bf16.msra.mxu0 %v2390
        %3066 = vmatprep.subr.bf16.mxu0 %v2385
        %3067 = vmatpush2.bf16.msra.mxu0 %v2384
        %3068 = vmatprep.subr.bf16.mxu0 %v2379
        %3069 = vmatpush2.bf16.msra.mxu0 %v2378
        %3070 = vmatprep.mubr.bf16.mxu0 %v949
        %3071 = vmatmul.mubr.bf16.gmra.mxu0 %v948
        %v3072 = vpop.f32.mrf.mxu0
        %v3073 = vadd.f32 %v3032, %v3072
        %v3074 = vpop.f32.mrf.mxu0
        %v3075 = vadd.f32 %v3034, %v3074
        %v3076 = vpop.f32.mrf.mxu0
        %v3077 = vpop.f32.mrf.mxu0
        %3078 = vdwg.mxu0
        %v3079 = vmax.f32 %v2827, 0.0
        %v3080 = vmax.f32 %v2829, 0.0
        %v3081 = vmax.f32 %v2950, 0.0
        %v3082 = vmax.f32 %v2952, 0.0
        %v3083 = vmax.f32 %v3073, 0.0
        %v3084 = vmax.f32 %v3075, 0.0
        %v3085 = vpack.c.bf16 %v3079, %v3079
        %v3086 = vpack.c.bf16 %v3080, %v3080
        %v3087 = vpack.c.bf16 %v3081, %v3081
        %v3088 = vpack.c.bf16 %v3082, %v3082
        %v3089 = vpack.c.bf16 %v3083, %v3083
        %v3090 = vpack.c.bf16 %v3084, %v3084
        %v3091 = vld [vmem:[%s6] sm:$0xf]
        %v3092 = vld [vmem:[%s6 + $0x4] sm:$0xf]
        %v3093 = vld [vmem:[%s6 + $0x8] sm:$0xf]
        %v3094 = vld [vmem:[%s6 + $0xc] sm:$0xf]
        %v3095 = vld [vmem:[%s6 + $0x10] sm:$0xf]
        %v3096 = vld [vmem:[%s6 + $0x14] sm:$0xf]
        %v3097 = vld [vmem:[%s6 + $0x18] sm:$0xf]
        %v3098 = vld [vmem:[%s6 + $0x1c] sm:$0xf]
        %v3099 = vld [vmem:[%s6 + $0x20] sm:$0xf]
        %v3100 = vld [vmem:[%s6 + $0x24] sm:$0xf]
        %v3101 = vld [vmem:[%s6 + $0x28] sm:$0xf]
        %v3102 = vld [vmem:[%s6 + $0x2c] sm:$0xf]
        %v3103 = vld [vmem:[%s6 + $0x30] sm:$0xf]
        %v3104 = vld [vmem:[%s6 + $0x34] sm:$0xf]
        %v3105 = vld [vmem:[%s6 + $0x38] sm:$0xf]
        %v3106 = vld [vmem:[%s6 + $0x3c] sm:$0xf]
        %v3107 = vld [vmem:[%s6 + $0x40] sm:$0xf]
        %v3108 = vld [vmem:[%s6 + $0x44] sm:$0xf]
        %v3109 = vld [vmem:[%s6 + $0x48] sm:$0xf]
        %v3110 = vld [vmem:[%s6 + $0x4c] sm:$0xf]
        %v3111 = vld [vmem:[%s6 + $0x50] sm:$0xf]
        %v3112 = vld [vmem:[%s6 + $0x54] sm:$0xf]
        %v3113 = vld [vmem:[%s6 + $0x58] sm:$0xf]
        %v3114 = vld [vmem:[%s6 + $0x5c] sm:$0xf]
        %v3115 = vld [vmem:[%s6 + $0x60] sm:$0xf]
        %v3116 = vld [vmem:[%s6 + $0x64] sm:$0xf]
        %v3117 = vld [vmem:[%s6 + $0x68] sm:$0xf]
        %v3118 = vld [vmem:[%s6 + $0x6c] sm:$0xf]
        %v3119 = vld [vmem:[%s6 + $0x70] sm:$0xf]
        %v3120 = vld [vmem:[%s6 + $0x74] sm:$0xf]
        %v3121 = vld [vmem:[%s6 + $0x78] sm:$0xf]
        %v3122 = vld [vmem:[%s6 + $0x7c] sm:$0xf]
        %v3123 = vld [vmem:[%s6 + $0x80] sm:$0xf]
        %v3124 = vld [vmem:[%s6 + $0x84] sm:$0xf]
        %v3125 = vld [vmem:[%s6 + $0x88] sm:$0xf]
        %v3126 = vld [vmem:[%s6 + $0x8c] sm:$0xf]
        %v3127 = vld [vmem:[%s6 + $0x90] sm:$0xf]
        %v3128 = vld [vmem:[%s6 + $0x94] sm:$0xf]
        %v3129 = vld [vmem:[%s6 + $0x98] sm:$0xf]
        %v3130 = vld [vmem:[%s6 + $0x9c] sm:$0xf]
        %v3131 = vld [vmem:[%s6 + $0xa0] sm:$0xf]
        %v3132 = vld [vmem:[%s6 + $0xa4] sm:$0xf]
        %v3133 = vld [vmem:[%s6 + $0xa8] sm:$0xf]
        %v3134 = vld [vmem:[%s6 + $0xac] sm:$0xf]
        %v3135 = vld [vmem:[%s6 + $0xb0] sm:$0xf]
        %v3136 = vld [vmem:[%s6 + $0xb4] sm:$0xf]
        %v3137 = vld [vmem:[%s6 + $0xb8] sm:$0xf]
        %v3138 = vld [vmem:[%s6 + $0xbc] sm:$0xf]
        %v3139 = vld [vmem:[%s6 + $0xc0] sm:$0xf]
        %v3140 = vld [vmem:[%s6 + $0xc4] sm:$0xf]
        %v3141 = vld [vmem:[%s6 + $0xc8] sm:$0xf]
        %v3142 = vld [vmem:[%s6 + $0xcc] sm:$0xf]
        %v3143 = vld [vmem:[%s6 + $0xd0] sm:$0xf]
        %v3144 = vld [vmem:[%s6 + $0xd4] sm:$0xf]
        %v3145 = vld [vmem:[%s6 + $0xd8] sm:$0xf]
        %v3146 = vld [vmem:[%s6 + $0xdc] sm:$0xf]
        %v3147 = vld [vmem:[%s6 + $0xe0] sm:$0xf]
        %v3148 = vld [vmem:[%s6 + $0xe4] sm:$0xf]
        %v3149 = vld [vmem:[%s6 + $0xe8] sm:$0xf]
        %v3150 = vld [vmem:[%s6 + $0xec] sm:$0xf]
        %v3151 = vld [vmem:[%s6 + $0xf0] sm:$0xf]
        %v3152 = vld [vmem:[%s6 + $0xf4] sm:$0xf]
        %v3153 = vld [vmem:[%s6 + $0xf8] sm:$0xf]
        %v3154 = vld [vmem:[%s6 + $0xfc] sm:$0xf]
        %v3155 = vld [vmem:[%s6 + $0x100] sm:$0xf]
        %v3156 = vld [vmem:[%s6 + $0x104] sm:$0xf]
        %v3157 = vld [vmem:[%s6 + $0x108] sm:$0xf]
        %v3158 = vld [vmem:[%s6 + $0x10c] sm:$0xf]
        %v3159 = vld [vmem:[%s6 + $0x110] sm:$0xf]
        %v3160 = vld [vmem:[%s6 + $0x114] sm:$0xf]
        %v3161 = vld [vmem:[%s6 + $0x118] sm:$0xf]
        %v3162 = vld [vmem:[%s6 + $0x11c] sm:$0xf]
        %v3163 = vld [vmem:[%s6 + $0x120] sm:$0xf]
        %v3164 = vld [vmem:[%s6 + $0x124] sm:$0xf]
        %v3165 = vld [vmem:[%s6 + $0x128] sm:$0xf]
        %v3166 = vld [vmem:[%s6 + $0x12c] sm:$0xf]
        %v3167 = vld [vmem:[%s6 + $0x130] sm:$0xf]
        %v3168 = vld [vmem:[%s6 + $0x134] sm:$0xf]
        %v3169 = vld [vmem:[%s6 + $0x138] sm:$0xf]
        %v3170 = vld [vmem:[%s6 + $0x13c] sm:$0xf]
        %v3171 = vld [vmem:[%s6 + $0x140] sm:$0xf]
        %v3172 = vld [vmem:[%s6 + $0x144] sm:$0xf]
        %v3173 = vld [vmem:[%s6 + $0x148] sm:$0xf]
        %v3174 = vld [vmem:[%s6 + $0x14c] sm:$0xf]
        %v3175 = vld [vmem:[%s6 + $0x150] sm:$0xf]
        %v3176 = vld [vmem:[%s6 + $0x154] sm:$0xf]
        %v3177 = vld [vmem:[%s6 + $0x158] sm:$0xf]
        %v3178 = vld [vmem:[%s6 + $0x15c] sm:$0xf]
        %v3179 = vld [vmem:[%s6 + $0x160] sm:$0xf]
        %v3180 = vld [vmem:[%s6 + $0x164] sm:$0xf]
        %v3181 = vld [vmem:[%s6 + $0x168] sm:$0xf]
        %v3182 = vld [vmem:[%s6 + $0x16c] sm:$0xf]
        %v3183 = vld [vmem:[%s6 + $0x170] sm:$0xf]
        %v3184 = vld [vmem:[%s6 + $0x174] sm:$0xf]
        %v3185 = vld [vmem:[%s6 + $0x178] sm:$0xf]
        %v3186 = vld [vmem:[%s6 + $0x17c] sm:$0xf]
        %v3187 = vld [vmem:[#allocation9] sm:$0x1]
        %v3189 = vlaneseq
        %v3190 = vshrl.u32 %v3189, 7
        %v3191 = vsub.s32 0, %v3190
        %v3192 = vrot.slane %v3187, %v3191
        %v3290 = vunpack.c.l.b16 %v3091
        %v3291 = vunpack.c.l.b16 %v3092
        %v3292 = vunpack.c.l.b16 %v3093
        %v3293 = vunpack.c.l.b16 %v3094
        %v3294 = vunpack.c.l.b16 %v3095
        %v3295 = vunpack.c.l.b16 %v3096
        %v3296 = vunpack.c.l.b16 %v3097
        %v3297 = vunpack.c.l.b16 %v3098
        %v3298 = vunpack.c.l.b16 %v3099
        %v3299 = vunpack.c.l.b16 %v3100
        %v3300 = vunpack.c.l.b16 %v3101
        %v3301 = vunpack.c.l.b16 %v3102
        %v3302 = vunpack.c.l.b16 %v3103
        %v3303 = vunpack.c.l.b16 %v3104
        %v3304 = vunpack.c.l.b16 %v3105
        %v3305 = vunpack.c.l.b16 %v3106
        %v3306 = vunpack.c.l.b16 %v3107
        %v3307 = vunpack.c.l.b16 %v3108
        %v3308 = vunpack.c.l.b16 %v3109
        %v3309 = vunpack.c.l.b16 %v3110
        %v3310 = vunpack.c.l.b16 %v3111
        %v3311 = vunpack.c.l.b16 %v3112
        %v3312 = vunpack.c.l.b16 %v3113
        %v3313 = vunpack.c.l.b16 %v3114
        %v3314 = vunpack.c.l.b16 %v3115
        %v3315 = vunpack.c.l.b16 %v3116
        %v3316 = vunpack.c.l.b16 %v3117
        %v3317 = vunpack.c.l.b16 %v3118
        %v3318 = vunpack.c.l.b16 %v3119
        %v3319 = vunpack.c.l.b16 %v3120
        %v3320 = vunpack.c.l.b16 %v3121
        %v3321 = vunpack.c.l.b16 %v3122
        %v3322 = vunpack.c.l.b16 %v3123
        %v3323 = vunpack.c.l.b16 %v3124
        %v3324 = vunpack.c.l.b16 %v3125
        %v3325 = vunpack.c.l.b16 %v3126
        %v3326 = vunpack.c.l.b16 %v3127
        %v3327 = vunpack.c.l.b16 %v3128
        %v3328 = vunpack.c.l.b16 %v3129
        %v3329 = vunpack.c.l.b16 %v3130
        %v3330 = vunpack.c.l.b16 %v3131
        %v3331 = vunpack.c.l.b16 %v3132
        %v3332 = vunpack.c.l.b16 %v3133
        %v3333 = vunpack.c.l.b16 %v3134
        %v3334 = vunpack.c.l.b16 %v3135
        %v3335 = vunpack.c.l.b16 %v3136
        %v3336 = vunpack.c.l.b16 %v3137
        %v3337 = vunpack.c.l.b16 %v3138
        %v3338 = vunpack.c.l.b16 %v3139
        %v3339 = vunpack.c.l.b16 %v3140
        %v3340 = vunpack.c.l.b16 %v3141
        %v3341 = vunpack.c.l.b16 %v3142
        %v3342 = vunpack.c.l.b16 %v3143
        %v3343 = vunpack.c.l.b16 %v3144
        %v3344 = vunpack.c.l.b16 %v3145
        %v3345 = vunpack.c.l.b16 %v3146
        %v3346 = vunpack.c.l.b16 %v3147
        %v3347 = vunpack.c.l.b16 %v3148
        %v3348 = vunpack.c.l.b16 %v3149
        %v3349 = vunpack.c.l.b16 %v3150
        %v3350 = vunpack.c.l.b16 %v3151
        %v3351 = vunpack.c.l.b16 %v3152
        %v3352 = vunpack.c.l.b16 %v3153
        %v3353 = vunpack.c.l.b16 %v3154
        %v3354 = vunpack.c.l.b16 %v3155
        %v3355 = vunpack.c.l.b16 %v3156
        %v3356 = vunpack.c.l.b16 %v3157
        %v3357 = vunpack.c.l.b16 %v3158
        %v3358 = vunpack.c.l.b16 %v3159
        %v3359 = vunpack.c.l.b16 %v3160
        %v3360 = vunpack.c.l.b16 %v3161
        %v3361 = vunpack.c.l.b16 %v3162
        %v3362 = vunpack.c.l.b16 %v3163
        %v3363 = vunpack.c.l.b16 %v3164
        %v3364 = vunpack.c.l.b16 %v3165
        %v3365 = vunpack.c.l.b16 %v3166
        %v3366 = vunpack.c.l.b16 %v3167
        %v3367 = vunpack.c.l.b16 %v3168
        %v3368 = vunpack.c.l.b16 %v3169
        %v3369 = vunpack.c.l.b16 %v3170
        %v3370 = vunpack.c.l.b16 %v3171
        %v3371 = vunpack.c.l.b16 %v3172
        %v3372 = vunpack.c.l.b16 %v3173
        %v3373 = vunpack.c.l.b16 %v3174
        %v3374 = vunpack.c.l.b16 %v3175
        %v3375 = vunpack.c.l.b16 %v3176
        %v3376 = vunpack.c.l.b16 %v3177
        %v3377 = vunpack.c.l.b16 %v3178
        %v3378 = vunpack.c.l.b16 %v3179
        %v3379 = vunpack.c.l.b16 %v3180
        %v3380 = vunpack.c.l.b16 %v3181
        %v3381 = vunpack.c.l.b16 %v3182
        %v3382 = vunpack.c.l.b16 %v3183
        %v3383 = vunpack.c.l.b16 %v3184
        %v3384 = vunpack.c.l.b16 %v3185
        %v3385 = vunpack.c.l.b16 %v3186
        %v3386 = vpack.c.b16 %v3291, %v3290
        %v3387 = vpack.c.b16 %v3293, %v3292
        %v3388 = vpack.c.b16 %v3295, %v3294
        %v3389 = vpack.c.b16 %v3297, %v3296
        %v3390 = vpack.c.b16 %v3299, %v3298
        %v3391 = vpack.c.b16 %v3301, %v3300
        %v3392 = vpack.c.b16 %v3303, %v3302
        %v3393 = vpack.c.b16 %v3305, %v3304
        %v3394 = vpack.c.b16 %v3307, %v3306
        %v3395 = vpack.c.b16 %v3309, %v3308
        %v3396 = vpack.c.b16 %v3311, %v3310
        %v3397 = vpack.c.b16 %v3313, %v3312
        %v3398 = vpack.c.b16 %v3315, %v3314
        %v3399 = vpack.c.b16 %v3317, %v3316
        %v3400 = vpack.c.b16 %v3319, %v3318
        %v3401 = vpack.c.b16 %v3321, %v3320
        %v3402 = vpack.c.b16 %v3323, %v3322
        %v3403 = vpack.c.b16 %v3325, %v3324
        %v3404 = vpack.c.b16 %v3327, %v3326
        %v3405 = vpack.c.b16 %v3329, %v3328
        %v3406 = vpack.c.b16 %v3331, %v3330
        %v3407 = vpack.c.b16 %v3333, %v3332
        %v3408 = vpack.c.b16 %v3335, %v3334
        %v3409 = vpack.c.b16 %v3337, %v3336
        %v3410 = vpack.c.b16 %v3339, %v3338
        %v3411 = vpack.c.b16 %v3341, %v3340
        %v3412 = vpack.c.b16 %v3343, %v3342
        %v3413 = vpack.c.b16 %v3345, %v3344
        %v3414 = vpack.c.b16 %v3347, %v3346
        %v3415 = vpack.c.b16 %v3349, %v3348
        %v3416 = vpack.c.b16 %v3351, %v3350
        %v3417 = vpack.c.b16 %v3353, %v3352
        %v3418 = vpack.c.b16 %v3355, %v3354
        %v3419 = vpack.c.b16 %v3357, %v3356
        %v3420 = vpack.c.b16 %v3359, %v3358
        %v3421 = vpack.c.b16 %v3361, %v3360
        %v3422 = vpack.c.b16 %v3363, %v3362
        %v3423 = vpack.c.b16 %v3365, %v3364
        %v3424 = vpack.c.b16 %v3367, %v3366
        %v3425 = vpack.c.b16 %v3369, %v3368
        %v3426 = vpack.c.b16 %v3371, %v3370
        %v3427 = vpack.c.b16 %v3373, %v3372
        %v3428 = vpack.c.b16 %v3375, %v3374
        %v3429 = vpack.c.b16 %v3377, %v3376
        %v3430 = vpack.c.b16 %v3379, %v3378
        %v3431 = vpack.c.b16 %v3381, %v3380
        %v3432 = vpack.c.b16 %v3383, %v3382
        %v3433 = vpack.c.b16 %v3385, %v3384
        %3482 = vmatprep.subr.bf16.mxu0 0
        %3483 = vmatpush1.bf16.msra.mxu0 %v3393
        %3484 = vmatprep.subr.bf16.mxu0 0
        %3485 = vmatpush1.bf16.msra.mxu0 %v3392
        %3486 = vmatprep.subr.bf16.mxu0 0
        %3487 = vmatpush1.bf16.msra.mxu0 %v3391
        %3488 = vmatprep.subr.bf16.mxu0 0
        %3489 = vmatpush1.bf16.msra.mxu0 %v3390
        %3490 = vmatprep.subr.bf16.mxu0 0
        %3491 = vmatpush1.bf16.msra.mxu0 %v3389
        %3492 = vmatprep.subr.bf16.mxu0 0
        %3493 = vmatpush1.bf16.msra.mxu0 %v3388
        %3494 = vmatprep.subr.bf16.mxu0 0
        %3495 = vmatpush1.bf16.msra.mxu0 %v3387
        %3496 = vmatprep.subr.bf16.mxu0 0
        %3497 = vmatpush1.bf16.msra.mxu0 %v3386
        %3498 = vmatprep.subr.bf16.mxu0 0
        %3499 = vmatpush2.bf16.msra.mxu0 %v3401
        %3500 = vmatprep.subr.bf16.mxu0 0
        %3501 = vmatpush2.bf16.msra.mxu0 %v3400
        %3502 = vmatprep.subr.bf16.mxu0 0
        %3503 = vmatpush2.bf16.msra.mxu0 %v3399
        %3504 = vmatprep.subr.bf16.mxu0 0
        %3505 = vmatpush2.bf16.msra.mxu0 %v3398
        %3506 = vmatprep.subr.bf16.mxu0 0
        %3507 = vmatpush2.bf16.msra.mxu0 %v3397
        %3508 = vmatprep.subr.bf16.mxu0 0
        %3509 = vmatpush2.bf16.msra.mxu0 %v3396
        %3510 = vmatprep.subr.bf16.mxu0 0
        %3511 = vmatpush2.bf16.msra.mxu0 %v3395
        %3512 = vmatprep.subr.bf16.mxu0 0
        %3513 = vmatpush2.bf16.msra.mxu0 %v3394
        %3514 = vmatprep.mubr.bf16.mxu0 %v3086
        %3515 = vmatmul.mubr.bf16.gmra.mxu0 %v3085
        %v3516 = vpop.f32.mrf.mxu0
        %v3517 = vadd.f32 %v3192, %v3516
        %v3518 = vpop.f32.mrf.mxu0
        %v3519 = vpop.f32.mrf.mxu0
        %v3520 = vpop.f32.mrf.mxu0
        %3521 = vdwg.mxu0
        %3522 = vmatprep.subr.bf16.mxu0 0
        %3523 = vmatpush1.bf16.msra.mxu0 %v3409
        %3524 = vmatprep.subr.bf16.mxu0 0
        %3525 = vmatpush1.bf16.msra.mxu0 %v3408
        %3526 = vmatprep.subr.bf16.mxu0 0
        %3527 = vmatpush1.bf16.msra.mxu0 %v3407
        %3528 = vmatprep.subr.bf16.mxu0 0
        %3529 = vmatpush1.bf16.msra.mxu0 %v3406
        %3530 = vmatprep.subr.bf16.mxu0 0
        %3531 = vmatpush1.bf16.msra.mxu0 %v3405
        %3532 = vmatprep.subr.bf16.mxu0 0
        %3533 = vmatpush1.bf16.msra.mxu0 %v3404
        %3534 = vmatprep.subr.bf16.mxu0 0
        %3535 = vmatpush1.bf16.msra.mxu0 %v3403
        %3536 = vmatprep.subr.bf16.mxu0 0
        %3537 = vmatpush1.bf16.msra.mxu0 %v3402
        %3538 = vmatprep.subr.bf16.mxu0 0
        %3539 = vmatpush2.bf16.msra.mxu0 %v3417
        %3540 = vmatprep.subr.bf16.mxu0 0
        %3541 = vmatpush2.bf16.msra.mxu0 %v3416
        %3542 = vmatprep.subr.bf16.mxu0 0
        %3543 = vmatpush2.bf16.msra.mxu0 %v3415
        %3544 = vmatprep.subr.bf16.mxu0 0
        %3545 = vmatpush2.bf16.msra.mxu0 %v3414
        %3546 = vmatprep.subr.bf16.mxu0 0
        %3547 = vmatpush2.bf16.msra.mxu0 %v3413
        %3548 = vmatprep.subr.bf16.mxu0 0
        %3549 = vmatpush2.bf16.msra.mxu0 %v3412
        %3550 = vmatprep.subr.bf16.mxu0 0
        %3551 = vmatpush2.bf16.msra.mxu0 %v3411
        %3552 = vmatprep.subr.bf16.mxu0 0
        %3553 = vmatpush2.bf16.msra.mxu0 %v3410
        %3554 = vmatprep.mubr.bf16.mxu0 %v3088
        %3555 = vmatmul.mubr.bf16.gmra.mxu0 %v3087
        %v3556 = vpop.f32.mrf.mxu0
        %v3557 = vadd.f32 %v3517, %v3556
        %v3558 = vpop.f32.mrf.mxu0
        %v3559 = vpop.f32.mrf.mxu0
        %v3560 = vpop.f32.mrf.mxu0
        %3561 = vdwg.mxu0
        %3562 = vmatprep.subr.bf16.mxu0 0
        %3563 = vmatpush1.bf16.msra.mxu0 %v3425
        %3564 = vmatprep.subr.bf16.mxu0 0
        %3565 = vmatpush1.bf16.msra.mxu0 %v3424
        %3566 = vmatprep.subr.bf16.mxu0 0
        %3567 = vmatpush1.bf16.msra.mxu0 %v3423
        %3568 = vmatprep.subr.bf16.mxu0 0
        %3569 = vmatpush1.bf16.msra.mxu0 %v3422
        %3570 = vmatprep.subr.bf16.mxu0 0
        %3571 = vmatpush1.bf16.msra.mxu0 %v3421
        %3572 = vmatprep.subr.bf16.mxu0 0
        %3573 = vmatpush1.bf16.msra.mxu0 %v3420
        %3574 = vmatprep.subr.bf16.mxu0 0
        %3575 = vmatpush1.bf16.msra.mxu0 %v3419
        %3576 = vmatprep.subr.bf16.mxu0 0
        %3577 = vmatpush1.bf16.msra.mxu0 %v3418
        %3578 = vmatprep.subr.bf16.mxu0 0
        %3579 = vmatpush2.bf16.msra.mxu0 %v3433
        %3580 = vmatprep.subr.bf16.mxu0 0
        %3581 = vmatpush2.bf16.msra.mxu0 %v3432
        %3582 = vmatprep.subr.bf16.mxu0 0
        %3583 = vmatpush2.bf16.msra.mxu0 %v3431
        %3584 = vmatprep.subr.bf16.mxu0 0
        %3585 = vmatpush2.bf16.msra.mxu0 %v3430
        %3586 = vmatprep.subr.bf16.mxu0 0
        %3587 = vmatpush2.bf16.msra.mxu0 %v3429
        %3588 = vmatprep.subr.bf16.mxu0 0
        %3589 = vmatpush2.bf16.msra.mxu0 %v3428
        %3590 = vmatprep.subr.bf16.mxu0 0
        %3591 = vmatpush2.bf16.msra.mxu0 %v3427
        %3592 = vmatprep.subr.bf16.mxu0 0
        %3593 = vmatpush2.bf16.msra.mxu0 %v3426
        %3594 = vmatprep.mubr.bf16.mxu0 %v3090
        %3595 = vmatmul.mubr.bf16.gmra.mxu0 %v3089
        %v3596 = vpop.f32.mrf.mxu0
        %v3597 = vadd.f32 %v3557, %v3596
        %v3598 = vpop.f32.mrf.mxu0
        %v3599 = vpop.f32.mrf.mxu0
        %v3600 = vpop.f32.mrf.mxu0
        %3601 = vdwg.mxu0
        %v3602 = vmax.f32 %v3597, -4.0
        %v3603 = vmin.f32 %v3602, 15.0
        %v3604 = vmul.f32 %v3603, 1.442695
        %v3605 = vpow.pop %v3604
        %v3606 = vld [vmem:[%s672] sm:$0xff]
        %3608 = vrot.lane.b32.xlu0 %v3606, 6
        %v3609 = vpop.permute.xlu0 %3608
        %v3611 = vmul.f32 %v3605, %v3609
        %3613 = vrot.lane.b32.xlu0 %v3611, 122
        %v3614 = vpop.permute.xlu0 %3613
        %v3616 = vadd.f32 %v3597, %v3614
        %v3617 = vpack.c.bf16 %v3616, %v3616
        %v3618 = vld [vmem:[#allocation10] sm:$0x77]
        %v3619 = vld [vmem:[#allocation10 + $0x8] sm:$0x77]
        %v3620 = vld [vmem:[#allocation10 + $0x10] sm:$0x77]
        %v3621 = vld [vmem:[#allocation12] sm:$0x3f]
        %v3623 = vlaneseq
        %v3624 = vshrl.u32 %v3623, 7
        %v3625 = vsub.s32 0, %v3624
        %v3626 = vrot.slane %v3621, %v3625
        %v3627 = vlaneseq
        %v3628 = vshrl.u32 %v3627, 7
        %v3629 = vsub.s32 1, %v3628
        %v3630 = vrot.slane %v3621, %v3629
        %v3631 = vlaneseq
        %v3632 = vshrl.u32 %v3631, 7
        %v3633 = vsub.s32 2, %v3632
        %v3634 = vrot.slane %v3621, %v3633
        %v3635 = vlaneseq
        %v3636 = vshrl.u32 %v3635, 7
        %v3637 = vsub.s32 3, %v3636
        %v3638 = vrot.slane %v3621, %v3637
        %v3639 = vlaneseq
        %v3640 = vshrl.u32 %v3639, 7
        %v3641 = vsub.s32 4, %v3640
        %v3642 = vrot.slane %v3621, %v3641
        %v3643 = vlaneseq
        %v3644 = vshrl.u32 %v3643, 7
        %v3645 = vsub.s32 5, %v3644
        %v3646 = vrot.slane %v3621, %v3645
        %v3656 = vunpack.c.l.b16 %v3618
        %v3657 = vunpack.c.h.b16 %v3618
        %v3658 = vunpack.c.l.b16 %v3619
        %v3659 = vunpack.c.h.b16 %v3619
        %v3660 = vunpack.c.l.b16 %v3620
        %v3661 = vunpack.c.h.b16 %v3620
        %v3662 = vpack.c.b16 %v3656, %v3656
        %v3663 = vpack.c.b16 %v3657, %v3657
        %v3664 = vpack.c.b16 %v3658, %v3658
        %v3665 = vpack.c.b16 %v3659, %v3659
        %v3666 = vpack.c.b16 %v3660, %v3660
        %v3667 = vpack.c.b16 %v3661, %v3661
        %vm3668 = vcmask 48128
        %v3670 = vsel %vm3668, %v3617, 0
        %vm3672 = vcmask 1042432
        %v3674 = vsel %vm3672, %v3662, 0
        %v3677 = vsel %vm3672, %v3663, 0
        %v3680 = vsel %vm3672, %v3664, 0
        %v3683 = vsel %vm3672, %v3665, 0
        %v3686 = vsel %vm3672, %v3666, 0
        %v3689 = vsel %vm3672, %v3667, 0
        %3691 = vmatprep.subr.bf16.mxu0 0
        %3692 = vmatpush1.bf16.msra.mxu0 0
        %3693 = vmatprep.subr.bf16.mxu0 0
        %3694 = vmatpush1.bf16.msra.mxu0 0
        %3695 = vmatprep.subr.bf16.mxu0 0
        %3696 = vmatpush1.bf16.msra.mxu0 0
        %3697 = vmatprep.subr.bf16.mxu0 0
        %3698 = vmatpush1.bf16.msra.mxu0 0
        %3699 = vmatprep.subr.bf16.mxu0 0
        %3700 = vmatpush1.bf16.msra.mxu0 0
        %3701 = vmatprep.subr.bf16.mxu0 0
        %3702 = vmatpush1.bf16.msra.mxu0 0
        %3703 = vmatprep.subr.bf16.mxu0 0
        %3704 = vmatpush1.bf16.msra.mxu0 0
        %3705 = vmatprep.subr.bf16.mxu0 %v3677
        %3706 = vmatpush1.bf16.msra.mxu0 %v3674
        %3707 = vmatprep.subr.bf16.mxu0 0
        %3708 = vmatpush2.bf16.msra.mxu0 0
        %3709 = vmatprep.subr.bf16.mxu0 0
        %3710 = vmatpush2.bf16.msra.mxu0 0
        %3711 = vmatprep.subr.bf16.mxu0 0
        %3712 = vmatpush2.bf16.msra.mxu0 0
        %3713 = vmatprep.subr.bf16.mxu0 0
        %3714 = vmatpush2.bf16.msra.mxu0 0
        %3715 = vmatprep.subr.bf16.mxu0 0
        %3716 = vmatpush2.bf16.msra.mxu0 0
        %3717 = vmatprep.subr.bf16.mxu0 0
        %3718 = vmatpush2.bf16.msra.mxu0 0
        %3719 = vmatprep.subr.bf16.mxu0 0
        %3720 = vmatpush2.bf16.msra.mxu0 0
        %3721 = vmatprep.subr.bf16.mxu0 0
        %3722 = vmatpush2.bf16.msra.mxu0 0
        %3723 = vmatprep.mubr.bf16.mxu0 0
        %3724 = vmatmul.mubr.bf16.gmra.mxu0 %v3670
        %v3725 = vpop.f32.mrf.mxu0
        %v3726 = vadd.f32 %v3626, %v3725
        %v3727 = vpop.f32.mrf.mxu0
        %v3728 = vadd.f32 %v3630, %v3727
        %v3729 = vpop.f32.mrf.mxu0
        %v3730 = vpop.f32.mrf.mxu0
        %3731 = vdwg.mxu0
        %3732 = vmatprep.subr.bf16.mxu0 0
        %3733 = vmatpush1.bf16.msra.mxu0 0
        %3734 = vmatprep.subr.bf16.mxu0 0
        %3735 = vmatpush1.bf16.msra.mxu0 0
        %3736 = vmatprep.subr.bf16.mxu0 0
        %3737 = vmatpush1.bf16.msra.mxu0 0
        %3738 = vmatprep.subr.bf16.mxu0 0
        %3739 = vmatpush1.bf16.msra.mxu0 0
        %3740 = vmatprep.subr.bf16.mxu0 0
        %3741 = vmatpush1.bf16.msra.mxu0 0
        %3742 = vmatprep.subr.bf16.mxu0 0
        %3743 = vmatpush1.bf16.msra.mxu0 0
        %3744 = vmatprep.subr.bf16.mxu0 0
        %3745 = vmatpush1.bf16.msra.mxu0 0
        %3746 = vmatprep.subr.bf16.mxu0 %v3683
        %3747 = vmatpush1.bf16.msra.mxu0 %v3680
        %3748 = vmatprep.subr.bf16.mxu0 0
        %3749 = vmatpush2.bf16.msra.mxu0 0
        %3750 = vmatprep.subr.bf16.mxu0 0
        %3751 = vmatpush2.bf16.msra.mxu0 0
        %3752 = vmatprep.subr.bf16.mxu0 0
        %3753 = vmatpush2.bf16.msra.mxu0 0
        %3754 = vmatprep.subr.bf16.mxu0 0
        %3755 = vmatpush2.bf16.msra.mxu0 0
        %3756 = vmatprep.subr.bf16.mxu0 0
        %3757 = vmatpush2.bf16.msra.mxu0 0
        %3758 = vmatprep.subr.bf16.mxu0 0
        %3759 = vmatpush2.bf16.msra.mxu0 0
        %3760 = vmatprep.subr.bf16.mxu0 0
        %3761 = vmatpush2.bf16.msra.mxu0 0
        %3762 = vmatprep.subr.bf16.mxu0 0
        %3763 = vmatpush2.bf16.msra.mxu0 0
        %3764 = vmatprep.mubr.bf16.mxu0 0
        %3765 = vmatmul.mubr.bf16.gmra.mxu0 %v3670
        %v3766 = vpop.f32.mrf.mxu0
        %v3767 = vadd.f32 %v3634, %v3766
        %v3768 = vpop.f32.mrf.mxu0
        %v3769 = vadd.f32 %v3638, %v3768
        %v3770 = vpop.f32.mrf.mxu0
        %v3771 = vpop.f32.mrf.mxu0
        %3772 = vdwg.mxu0
        %3773 = vmatprep.subr.bf16.mxu0 0
        %3774 = vmatpush1.bf16.msra.mxu0 0
        %3775 = vmatprep.subr.bf16.mxu0 0
        %3776 = vmatpush1.bf16.msra.mxu0 0
        %3777 = vmatprep.subr.bf16.mxu0 0
        %3778 = vmatpush1.bf16.msra.mxu0 0
        %3779 = vmatprep.subr.bf16.mxu0 0
        %3780 = vmatpush1.bf16.msra.mxu0 0
        %3781 = vmatprep.subr.bf16.mxu0 0
        %3782 = vmatpush1.bf16.msra.mxu0 0
        %3783 = vmatprep.subr.bf16.mxu0 0
        %3784 = vmatpush1.bf16.msra.mxu0 0
        %3785 = vmatprep.subr.bf16.mxu0 0
        %3786 = vmatpush1.bf16.msra.mxu0 0
        %3787 = vmatprep.subr.bf16.mxu0 %v3689
        %3788 = vmatpush1.bf16.msra.mxu0 %v3686
        %3789 = vmatprep.subr.bf16.mxu0 0
        %3790 = vmatpush2.bf16.msra.mxu0 0
        %3791 = vmatprep.subr.bf16.mxu0 0
        %3792 = vmatpush2.bf16.msra.mxu0 0
        %3793 = vmatprep.subr.bf16.mxu0 0
        %3794 = vmatpush2.bf16.msra.mxu0 0
        %3795 = vmatprep.subr.bf16.mxu0 0
        %3796 = vmatpush2.bf16.msra.mxu0 0
        %3797 = vmatprep.subr.bf16.mxu0 0
        %3798 = vmatpush2.bf16.msra.mxu0 0
        %3799 = vmatprep.subr.bf16.mxu0 0
        %3800 = vmatpush2.bf16.msra.mxu0 0
        %3801 = vmatprep.subr.bf16.mxu0 0
        %3802 = vmatpush2.bf16.msra.mxu0 0
        %3803 = vmatprep.subr.bf16.mxu0 0
        %3804 = vmatpush2.bf16.msra.mxu0 0
        %3805 = vmatprep.mubr.bf16.mxu0 0
        %3806 = vmatmul.mubr.bf16.gmra.mxu0 %v3670
        %v3807 = vpop.f32.mrf.mxu0
        %v3808 = vadd.f32 %v3642, %v3807
        %v3809 = vpop.f32.mrf.mxu0
        %v3810 = vadd.f32 %v3646, %v3809
        %v3811 = vpop.f32.mrf.mxu0
        %v3812 = vpop.f32.mrf.mxu0
        %3813 = vdwg.mxu0
        %v3814 = vmax.f32 %v3726, 0.0
        %v3815 = vmax.f32 %v3728, 0.0
        %v3816 = vmax.f32 %v3767, 0.0
        %v3817 = vmax.f32 %v3769, 0.0
        %v3818 = vmax.f32 %v3808, 0.0
        %v3819 = vmax.f32 %v3810, 0.0
        %v3820 = vpack.c.bf16 %v3814, %v3814
        %v3821 = vpack.c.bf16 %v3815, %v3815
        %v3822 = vpack.c.bf16 %v3816, %v3816
        %v3823 = vpack.c.bf16 %v3817, %v3817
        %v3824 = vpack.c.bf16 %v3818, %v3818
        %v3825 = vpack.c.bf16 %v3819, %v3819
        %v3826 = vld [vmem:[#allocation13] sm:$0xff]
        %v3827 = vld [vmem:[#allocation13 + $0x8] sm:$0xff]
        %v3828 = vld [vmem:[#allocation13 + $0x10] sm:$0xff]
        %v3829 = vld [vmem:[#allocation13 + $0x18] sm:$0xff]
        %v3830 = vld [vmem:[#allocation13 + $0x20] sm:$0xff]
        %v3831 = vld [vmem:[#allocation13 + $0x28] sm:$0xff]
        %v3832 = vld [vmem:[#allocation13 + $0x30] sm:$0xff]
        %v3833 = vld [vmem:[#allocation13 + $0x38] sm:$0xff]
        %v3834 = vld [vmem:[#allocation13 + $0x40] sm:$0xff]
        %v3835 = vld [vmem:[#allocation13 + $0x48] sm:$0xff]
        %v3836 = vld [vmem:[#allocation13 + $0x50] sm:$0xff]
        %v3837 = vld [vmem:[#allocation13 + $0x58] sm:$0xff]
        %v3838 = vld [vmem:[#allocation13 + $0x60] sm:$0xff]
        %v3839 = vld [vmem:[#allocation13 + $0x68] sm:$0xff]
        %v3840 = vld [vmem:[#allocation13 + $0x70] sm:$0xff]
        %v3841 = vld [vmem:[#allocation13 + $0x78] sm:$0xff]
        %v3842 = vld [vmem:[#allocation13 + $0x80] sm:$0xff]
        %v3843 = vld [vmem:[#allocation13 + $0x88] sm:$0xff]
        %v3844 = vld [vmem:[#allocation13 + $0x90] sm:$0xff]
        %v3845 = vld [vmem:[#allocation13 + $0x98] sm:$0xff]
        %v3846 = vld [vmem:[#allocation13 + $0xa0] sm:$0xff]
        %v3847 = vld [vmem:[#allocation13 + $0xa8] sm:$0xff]
        %v3848 = vld [vmem:[#allocation13 + $0xb0] sm:$0xff]
        %v3849 = vld [vmem:[#allocation13 + $0xb8] sm:$0xff]
        %v3850 = vld [vmem:[#allocation13 + $0xc0] sm:$0xff]
        %v3851 = vld [vmem:[#allocation13 + $0xc8] sm:$0xff]
        %v3852 = vld [vmem:[#allocation13 + $0xd0] sm:$0xff]
        %v3853 = vld [vmem:[#allocation13 + $0xd8] sm:$0xff]
        %v3854 = vld [vmem:[#allocation13 + $0xe0] sm:$0xff]
        %v3855 = vld [vmem:[#allocation13 + $0xe8] sm:$0xff]
        %v3856 = vld [vmem:[#allocation13 + $0xf0] sm:$0xff]
        %v3857 = vld [vmem:[#allocation13 + $0xf8] sm:$0xff]
        %v3858 = vld [vmem:[#allocation13 + $0x100] sm:$0xff]
        %v3859 = vld [vmem:[#allocation13 + $0x108] sm:$0xff]
        %v3860 = vld [vmem:[#allocation13 + $0x110] sm:$0xff]
        %v3861 = vld [vmem:[#allocation13 + $0x118] sm:$0xff]
        %v3862 = vld [vmem:[#allocation13 + $0x120] sm:$0xff]
        %v3863 = vld [vmem:[#allocation13 + $0x128] sm:$0xff]
        %v3864 = vld [vmem:[#allocation13 + $0x130] sm:$0xff]
        %v3865 = vld [vmem:[#allocation13 + $0x138] sm:$0xff]
        %v3866 = vld [vmem:[#allocation13 + $0x140] sm:$0xff]
        %v3867 = vld [vmem:[#allocation13 + $0x148] sm:$0xff]
        %v3868 = vld [vmem:[#allocation13 + $0x150] sm:$0xff]
        %v3869 = vld [vmem:[#allocation13 + $0x158] sm:$0xff]
        %v3870 = vld [vmem:[#allocation13 + $0x160] sm:$0xff]
        %v3871 = vld [vmem:[#allocation13 + $0x168] sm:$0xff]
        %v3872 = vld [vmem:[#allocation13 + $0x170] sm:$0xff]
        %v3873 = vld [vmem:[#allocation13 + $0x178] sm:$0xff]
        %v3874 = vld [vmem:[#allocation13 + $0x180] sm:$0xff]
        %v3875 = vld [vmem:[#allocation13 + $0x188] sm:$0xff]
        %v3876 = vld [vmem:[#allocation13 + $0x190] sm:$0xff]
        %v3877 = vld [vmem:[#allocation13 + $0x198] sm:$0xff]
        %v3878 = vld [vmem:[#allocation13 + $0x1a0] sm:$0xff]
        %v3879 = vld [vmem:[#allocation13 + $0x1a8] sm:$0xff]
        %v3880 = vld [vmem:[#allocation13 + $0x1b0] sm:$0xff]
        %v3881 = vld [vmem:[#allocation13 + $0x1b8] sm:$0xff]
        %v3882 = vld [vmem:[#allocation13 + $0x1c0] sm:$0xff]
        %v3883 = vld [vmem:[#allocation13 + $0x1c8] sm:$0xff]
        %v3884 = vld [vmem:[#allocation13 + $0x1d0] sm:$0xff]
        %v3885 = vld [vmem:[#allocation13 + $0x1d8] sm:$0xff]
        %v3886 = vld [vmem:[#allocation13 + $0x1e0] sm:$0xff]
        %v3887 = vld [vmem:[#allocation13 + $0x1e8] sm:$0xff]
        %v3888 = vld [vmem:[#allocation13 + $0x1f0] sm:$0xff]
        %v3889 = vld [vmem:[#allocation13 + $0x1f8] sm:$0xff]
        %v3890 = vld [vmem:[#allocation13 + $0x200] sm:$0xff]
        %v3891 = vld [vmem:[#allocation13 + $0x208] sm:$0xff]
        %v3892 = vld [vmem:[#allocation13 + $0x210] sm:$0xff]
        %v3893 = vld [vmem:[#allocation13 + $0x218] sm:$0xff]
        %v3894 = vld [vmem:[#allocation13 + $0x220] sm:$0xff]
        %v3895 = vld [vmem:[#allocation13 + $0x228] sm:$0xff]
        %v3896 = vld [vmem:[#allocation13 + $0x230] sm:$0xff]
        %v3897 = vld [vmem:[#allocation13 + $0x238] sm:$0xff]
        %v3898 = vld [vmem:[#allocation13 + $0x240] sm:$0xff]
        %v3899 = vld [vmem:[#allocation13 + $0x248] sm:$0xff]
        %v3900 = vld [vmem:[#allocation13 + $0x250] sm:$0xff]
        %v3901 = vld [vmem:[#allocation13 + $0x258] sm:$0xff]
        %v3902 = vld [vmem:[#allocation13 + $0x260] sm:$0xff]
        %v3903 = vld [vmem:[#allocation13 + $0x268] sm:$0xff]
        %v3904 = vld [vmem:[#allocation13 + $0x270] sm:$0xff]
        %v3905 = vld [vmem:[#allocation13 + $0x278] sm:$0xff]
        %v3906 = vld [vmem:[#allocation13 + $0x280] sm:$0xff]
        %v3907 = vld [vmem:[#allocation13 + $0x288] sm:$0xff]
        %v3908 = vld [vmem:[#allocation13 + $0x290] sm:$0xff]
        %v3909 = vld [vmem:[#allocation13 + $0x298] sm:$0xff]
        %v3910 = vld [vmem:[#allocation13 + $0x2a0] sm:$0xff]
        %v3911 = vld [vmem:[#allocation13 + $0x2a8] sm:$0xff]
        %v3912 = vld [vmem:[#allocation13 + $0x2b0] sm:$0xff]
        %v3913 = vld [vmem:[#allocation13 + $0x2b8] sm:$0xff]
        %v3914 = vld [vmem:[#allocation13 + $0x2c0] sm:$0xff]
        %v3915 = vld [vmem:[#allocation13 + $0x2c8] sm:$0xff]
        %v3916 = vld [vmem:[#allocation13 + $0x2d0] sm:$0xff]
        %v3917 = vld [vmem:[#allocation13 + $0x2d8] sm:$0xff]
        %v3918 = vld [vmem:[#allocation13 + $0x2e0] sm:$0xff]
        %v3919 = vld [vmem:[#allocation13 + $0x2e8] sm:$0xff]
        %v3920 = vld [vmem:[#allocation13 + $0x2f0] sm:$0xff]
        %v3921 = vld [vmem:[#allocation13 + $0x2f8] sm:$0xff]
        %v3922 = vld [vmem:[#allocation13 + $0x300] sm:$0xff]
        %v3923 = vld [vmem:[#allocation13 + $0x308] sm:$0xff]
        %v3924 = vld [vmem:[#allocation13 + $0x310] sm:$0xff]
        %v3925 = vld [vmem:[#allocation13 + $0x318] sm:$0xff]
        %v3926 = vld [vmem:[#allocation13 + $0x320] sm:$0xff]
        %v3927 = vld [vmem:[#allocation13 + $0x328] sm:$0xff]
        %v3928 = vld [vmem:[#allocation13 + $0x330] sm:$0xff]
        %v3929 = vld [vmem:[#allocation13 + $0x338] sm:$0xff]
        %v3930 = vld [vmem:[#allocation13 + $0x340] sm:$0xff]
        %v3931 = vld [vmem:[#allocation13 + $0x348] sm:$0xff]
        %v3932 = vld [vmem:[#allocation13 + $0x350] sm:$0xff]
        %v3933 = vld [vmem:[#allocation13 + $0x358] sm:$0xff]
        %v3934 = vld [vmem:[#allocation13 + $0x360] sm:$0xff]
        %v3935 = vld [vmem:[#allocation13 + $0x368] sm:$0xff]
        %v3936 = vld [vmem:[#allocation13 + $0x370] sm:$0xff]
        %v3937 = vld [vmem:[#allocation13 + $0x378] sm:$0xff]
        %v3938 = vld [vmem:[#allocation13 + $0x380] sm:$0xff]
        %v3939 = vld [vmem:[#allocation13 + $0x388] sm:$0xff]
        %v3940 = vld [vmem:[#allocation13 + $0x390] sm:$0xff]
        %v3941 = vld [vmem:[#allocation13 + $0x398] sm:$0xff]
        %v3942 = vld [vmem:[#allocation13 + $0x3a0] sm:$0xff]
        %v3943 = vld [vmem:[#allocation13 + $0x3a8] sm:$0xff]
        %v3944 = vld [vmem:[#allocation13 + $0x3b0] sm:$0xff]
        %v3945 = vld [vmem:[#allocation13 + $0x3b8] sm:$0xff]
        %v3946 = vld [vmem:[#allocation13 + $0x3c0] sm:$0xff]
        %v3947 = vld [vmem:[#allocation13 + $0x3c8] sm:$0xff]
        %v3948 = vld [vmem:[#allocation13 + $0x3d0] sm:$0xff]
        %v3949 = vld [vmem:[#allocation13 + $0x3d8] sm:$0xff]
        %v3950 = vld [vmem:[#allocation13 + $0x3e0] sm:$0xff]
        %v3951 = vld [vmem:[#allocation13 + $0x3e8] sm:$0xff]
        %v3952 = vld [vmem:[#allocation13 + $0x3f0] sm:$0xff]
        %v3953 = vld [vmem:[#allocation13 + $0x3f8] sm:$0xff]
        %v3954 = vld [vmem:[#allocation13 + $0x400] sm:$0xff]
        %v3955 = vld [vmem:[#allocation13 + $0x408] sm:$0xff]
        %v3956 = vld [vmem:[#allocation13 + $0x410] sm:$0xff]
        %v3957 = vld [vmem:[#allocation13 + $0x418] sm:$0xff]
        %v3958 = vld [vmem:[#allocation13 + $0x420] sm:$0xff]
        %v3959 = vld [vmem:[#allocation13 + $0x428] sm:$0xff]
        %v3960 = vld [vmem:[#allocation13 + $0x430] sm:$0xff]
        %v3961 = vld [vmem:[#allocation13 + $0x438] sm:$0xff]
        %v3962 = vld [vmem:[#allocation13 + $0x440] sm:$0xff]
        %v3963 = vld [vmem:[#allocation13 + $0x448] sm:$0xff]
        %v3964 = vld [vmem:[#allocation13 + $0x450] sm:$0xff]
        %v3965 = vld [vmem:[#allocation13 + $0x458] sm:$0xff]
        %v3966 = vld [vmem:[#allocation13 + $0x460] sm:$0xff]
        %v3967 = vld [vmem:[#allocation13 + $0x468] sm:$0xff]
        %v3968 = vld [vmem:[#allocation13 + $0x470] sm:$0xff]
        %v3969 = vld [vmem:[#allocation13 + $0x478] sm:$0xff]
        %v3970 = vld [vmem:[#allocation13 + $0x480] sm:$0xff]
        %v3971 = vld [vmem:[#allocation13 + $0x488] sm:$0xff]
        %v3972 = vld [vmem:[#allocation13 + $0x490] sm:$0xff]
        %v3973 = vld [vmem:[#allocation13 + $0x498] sm:$0xff]
        %v3974 = vld [vmem:[#allocation13 + $0x4a0] sm:$0xff]
        %v3975 = vld [vmem:[#allocation13 + $0x4a8] sm:$0xff]
        %v3976 = vld [vmem:[#allocation13 + $0x4b0] sm:$0xff]
        %v3977 = vld [vmem:[#allocation13 + $0x4b8] sm:$0xff]
        %v3978 = vld [vmem:[#allocation13 + $0x4c0] sm:$0xff]
        %v3979 = vld [vmem:[#allocation13 + $0x4c8] sm:$0xff]
        %v3980 = vld [vmem:[#allocation13 + $0x4d0] sm:$0xff]
        %v3981 = vld [vmem:[#allocation13 + $0x4d8] sm:$0xff]
        %v3982 = vld [vmem:[#allocation13 + $0x4e0] sm:$0xff]
        %v3983 = vld [vmem:[#allocation13 + $0x4e8] sm:$0xff]
        %v3984 = vld [vmem:[#allocation13 + $0x4f0] sm:$0xff]
        %v3985 = vld [vmem:[#allocation13 + $0x4f8] sm:$0xff]
        %v3986 = vld [vmem:[#allocation13 + $0x500] sm:$0xff]
        %v3987 = vld [vmem:[#allocation13 + $0x508] sm:$0xff]
        %v3988 = vld [vmem:[#allocation13 + $0x510] sm:$0xff]
        %v3989 = vld [vmem:[#allocation13 + $0x518] sm:$0xff]
        %v3990 = vld [vmem:[#allocation13 + $0x520] sm:$0xff]
        %v3991 = vld [vmem:[#allocation13 + $0x528] sm:$0xff]
        %v3992 = vld [vmem:[#allocation13 + $0x530] sm:$0xff]
        %v3993 = vld [vmem:[#allocation13 + $0x538] sm:$0xff]
        %v3994 = vld [vmem:[#allocation13 + $0x540] sm:$0xff]
        %v3995 = vld [vmem:[#allocation13 + $0x548] sm:$0xff]
        %v3996 = vld [vmem:[#allocation13 + $0x550] sm:$0xff]
        %v3997 = vld [vmem:[#allocation13 + $0x558] sm:$0xff]
        %v3998 = vld [vmem:[#allocation13 + $0x560] sm:$0xff]
        %v3999 = vld [vmem:[#allocation13 + $0x568] sm:$0xff]
        %v4000 = vld [vmem:[#allocation13 + $0x570] sm:$0xff]
        %v4001 = vld [vmem:[#allocation13 + $0x578] sm:$0xff]
        %v4002 = vld [vmem:[#allocation13 + $0x580] sm:$0xff]
        %v4003 = vld [vmem:[#allocation13 + $0x588] sm:$0xff]
        %v4004 = vld [vmem:[#allocation13 + $0x590] sm:$0xff]
        %v4005 = vld [vmem:[#allocation13 + $0x598] sm:$0xff]
        %v4006 = vld [vmem:[#allocation13 + $0x5a0] sm:$0xff]
        %v4007 = vld [vmem:[#allocation13 + $0x5a8] sm:$0xff]
        %v4008 = vld [vmem:[#allocation13 + $0x5b0] sm:$0xff]
        %v4009 = vld [vmem:[#allocation13 + $0x5b8] sm:$0xff]
        %v4010 = vld [vmem:[#allocation13 + $0x5c0] sm:$0xff]
        %v4011 = vld [vmem:[#allocation13 + $0x5c8] sm:$0xff]
        %v4012 = vld [vmem:[#allocation13 + $0x5d0] sm:$0xff]
        %v4013 = vld [vmem:[#allocation13 + $0x5d8] sm:$0xff]
        %v4014 = vld [vmem:[#allocation13 + $0x5e0] sm:$0xff]
        %v4015 = vld [vmem:[#allocation13 + $0x5e8] sm:$0xff]
        %v4016 = vld [vmem:[#allocation13 + $0x5f0] sm:$0xff]
        %v4017 = vld [vmem:[#allocation13 + $0x5f8] sm:$0xff]
        %v4018 = vld [vmem:[#allocation13 + $0x600] sm:$0xff]
        %v4019 = vld [vmem:[#allocation13 + $0x608] sm:$0xff]
        %v4020 = vld [vmem:[#allocation13 + $0x610] sm:$0xff]
        %v4021 = vld [vmem:[#allocation13 + $0x618] sm:$0xff]
        %v4022 = vld [vmem:[#allocation13 + $0x620] sm:$0xff]
        %v4023 = vld [vmem:[#allocation13 + $0x628] sm:$0xff]
        %v4024 = vld [vmem:[#allocation13 + $0x630] sm:$0xff]
        %v4025 = vld [vmem:[#allocation13 + $0x638] sm:$0xff]
        %v4026 = vld [vmem:[#allocation13 + $0x640] sm:$0xff]
        %v4027 = vld [vmem:[#allocation13 + $0x648] sm:$0xff]
        %v4028 = vld [vmem:[#allocation13 + $0x650] sm:$0xff]
        %v4029 = vld [vmem:[#allocation13 + $0x658] sm:$0xff]
        %v4030 = vld [vmem:[#allocation13 + $0x660] sm:$0xff]
        %v4031 = vld [vmem:[#allocation13 + $0x668] sm:$0xff]
        %v4032 = vld [vmem:[#allocation13 + $0x670] sm:$0xff]
        %v4033 = vld [vmem:[#allocation13 + $0x678] sm:$0xff]
        %v4034 = vld [vmem:[#allocation13 + $0x680] sm:$0xff]
        %v4035 = vld [vmem:[#allocation13 + $0x688] sm:$0xff]
        %v4036 = vld [vmem:[#allocation13 + $0x690] sm:$0xff]
        %v4037 = vld [vmem:[#allocation13 + $0x698] sm:$0xff]
        %v4038 = vld [vmem:[#allocation13 + $0x6a0] sm:$0xff]
        %v4039 = vld [vmem:[#allocation13 + $0x6a8] sm:$0xff]
        %v4040 = vld [vmem:[#allocation13 + $0x6b0] sm:$0xff]
        %v4041 = vld [vmem:[#allocation13 + $0x6b8] sm:$0xff]
        %v4042 = vld [vmem:[#allocation13 + $0x6c0] sm:$0xff]
        %v4043 = vld [vmem:[#allocation13 + $0x6c8] sm:$0xff]
        %v4044 = vld [vmem:[#allocation13 + $0x6d0] sm:$0xff]
        %v4045 = vld [vmem:[#allocation13 + $0x6d8] sm:$0xff]
        %v4046 = vld [vmem:[#allocation13 + $0x6e0] sm:$0xff]
        %v4047 = vld [vmem:[#allocation13 + $0x6e8] sm:$0xff]
        %v4048 = vld [vmem:[#allocation13 + $0x6f0] sm:$0xff]
        %v4049 = vld [vmem:[#allocation13 + $0x6f8] sm:$0xff]
        %v4050 = vld [vmem:[#allocation13 + $0x700] sm:$0xff]
        %v4051 = vld [vmem:[#allocation13 + $0x708] sm:$0xff]
        %v4052 = vld [vmem:[#allocation13 + $0x710] sm:$0xff]
        %v4053 = vld [vmem:[#allocation13 + $0x718] sm:$0xff]
        %v4054 = vld [vmem:[#allocation13 + $0x720] sm:$0xff]
        %v4055 = vld [vmem:[#allocation13 + $0x728] sm:$0xff]
        %v4056 = vld [vmem:[#allocation13 + $0x730] sm:$0xff]
        %v4057 = vld [vmem:[#allocation13 + $0x738] sm:$0xff]
        %v4058 = vld [vmem:[#allocation13 + $0x740] sm:$0xff]
        %v4059 = vld [vmem:[#allocation13 + $0x748] sm:$0xff]
        %v4060 = vld [vmem:[#allocation13 + $0x750] sm:$0xff]
        %v4061 = vld [vmem:[#allocation13 + $0x758] sm:$0xff]
        %v4062 = vld [vmem:[#allocation13 + $0x760] sm:$0xff]
        %v4063 = vld [vmem:[#allocation13 + $0x768] sm:$0xff]
        %v4064 = vld [vmem:[#allocation13 + $0x770] sm:$0xff]
        %v4065 = vld [vmem:[#allocation13 + $0x778] sm:$0xff]
        %v4066 = vld [vmem:[#allocation13 + $0x780] sm:$0xff]
        %v4067 = vld [vmem:[#allocation13 + $0x788] sm:$0xff]
        %v4068 = vld [vmem:[#allocation13 + $0x790] sm:$0xff]
        %v4069 = vld [vmem:[#allocation13 + $0x798] sm:$0xff]
        %v4070 = vld [vmem:[#allocation13 + $0x7a0] sm:$0xff]
        %v4071 = vld [vmem:[#allocation13 + $0x7a8] sm:$0xff]
        %v4072 = vld [vmem:[#allocation13 + $0x7b0] sm:$0xff]
        %v4073 = vld [vmem:[#allocation13 + $0x7b8] sm:$0xff]
        %v4074 = vld [vmem:[#allocation13 + $0x7c0] sm:$0xff]
        %v4075 = vld [vmem:[#allocation13 + $0x7c8] sm:$0xff]
        %v4076 = vld [vmem:[#allocation13 + $0x7d0] sm:$0xff]
        %v4077 = vld [vmem:[#allocation13 + $0x7d8] sm:$0xff]
        %v4078 = vld [vmem:[#allocation13 + $0x7e0] sm:$0xff]
        %v4079 = vld [vmem:[#allocation13 + $0x7e8] sm:$0xff]
        %v4080 = vld [vmem:[#allocation13 + $0x7f0] sm:$0xff]
        %v4081 = vld [vmem:[#allocation13 + $0x7f8] sm:$0xff]
        %v4082 = vld [vmem:[#allocation13 + $0x800] sm:$0xff]
        %v4083 = vld [vmem:[#allocation13 + $0x808] sm:$0xff]
        %v4084 = vld [vmem:[#allocation13 + $0x810] sm:$0xff]
        %v4085 = vld [vmem:[#allocation13 + $0x818] sm:$0xff]
        %v4086 = vld [vmem:[#allocation13 + $0x820] sm:$0xff]
        %v4087 = vld [vmem:[#allocation13 + $0x828] sm:$0xff]
        %v4088 = vld [vmem:[#allocation13 + $0x830] sm:$0xff]
        %v4089 = vld [vmem:[#allocation13 + $0x838] sm:$0xff]
        %v4090 = vld [vmem:[#allocation13 + $0x840] sm:$0xff]
        %v4091 = vld [vmem:[#allocation13 + $0x848] sm:$0xff]
        %v4092 = vld [vmem:[#allocation13 + $0x850] sm:$0xff]
        %v4093 = vld [vmem:[#allocation13 + $0x858] sm:$0xff]
        %v4094 = vld [vmem:[#allocation13 + $0x860] sm:$0xff]
        %v4095 = vld [vmem:[#allocation13 + $0x868] sm:$0xff]
        %v4096 = vld [vmem:[#allocation13 + $0x870] sm:$0xff]
        %v4097 = vld [vmem:[#allocation13 + $0x878] sm:$0xff]
        %v4098 = vld [vmem:[#allocation13 + $0x880] sm:$0xff]
        %v4099 = vld [vmem:[#allocation13 + $0x888] sm:$0xff]
        %v4100 = vld [vmem:[#allocation13 + $0x890] sm:$0xff]
        %v4101 = vld [vmem:[#allocation13 + $0x898] sm:$0xff]
        %v4102 = vld [vmem:[#allocation13 + $0x8a0] sm:$0xff]
        %v4103 = vld [vmem:[#allocation13 + $0x8a8] sm:$0xff]
        %v4104 = vld [vmem:[#allocation13 + $0x8b0] sm:$0xff]
        %v4105 = vld [vmem:[#allocation13 + $0x8b8] sm:$0xff]
        %v4106 = vld [vmem:[#allocation13 + $0x8c0] sm:$0xff]
        %v4107 = vld [vmem:[#allocation13 + $0x8c8] sm:$0xff]
        %v4108 = vld [vmem:[#allocation13 + $0x8d0] sm:$0xff]
        %v4109 = vld [vmem:[#allocation13 + $0x8d8] sm:$0xff]
        %v4110 = vld [vmem:[#allocation13 + $0x8e0] sm:$0xff]
        %v4111 = vld [vmem:[#allocation13 + $0x8e8] sm:$0xff]
        %v4112 = vld [vmem:[#allocation13 + $0x8f0] sm:$0xff]
        %v4113 = vld [vmem:[#allocation13 + $0x8f8] sm:$0xff]
        %v4114 = vld [vmem:[#allocation15] sm:$0x3f]
        %v4116 = vlaneseq
        %v4117 = vshrl.u32 %v4116, 7
        %v4118 = vsub.s32 0, %v4117
        %v4119 = vrot.slane %v4114, %v4118
        %v4120 = vlaneseq
        %v4121 = vshrl.u32 %v4120, 7
        %v4122 = vsub.s32 1, %v4121
        %v4123 = vrot.slane %v4114, %v4122
        %v4124 = vlaneseq
        %v4125 = vshrl.u32 %v4124, 7
        %v4126 = vsub.s32 2, %v4125
        %v4127 = vrot.slane %v4114, %v4126
        %v4128 = vlaneseq
        %v4129 = vshrl.u32 %v4128, 7
        %v4130 = vsub.s32 3, %v4129
        %v4131 = vrot.slane %v4114, %v4130
        %v4132 = vlaneseq
        %v4133 = vshrl.u32 %v4132, 7
        %v4134 = vsub.s32 4, %v4133
        %v4135 = vrot.slane %v4114, %v4134
        %v4136 = vlaneseq
        %v4137 = vshrl.u32 %v4136, 7
        %v4138 = vsub.s32 5, %v4137
        %v4139 = vrot.slane %v4114, %v4138
        %v4434 = vunpack.c.l.b16 %v3826
        %v4435 = vunpack.c.h.b16 %v3826
        %v4436 = vunpack.c.l.b16 %v3827
        %v4437 = vunpack.c.h.b16 %v3827
        %v4438 = vunpack.c.l.b16 %v3828
        %v4439 = vunpack.c.h.b16 %v3828
        %v4440 = vunpack.c.l.b16 %v3829
        %v4441 = vunpack.c.h.b16 %v3829
        %v4442 = vunpack.c.l.b16 %v3830
        %v4443 = vunpack.c.h.b16 %v3830
        %v4444 = vunpack.c.l.b16 %v3831
        %v4445 = vunpack.c.h.b16 %v3831
        %v4446 = vunpack.c.l.b16 %v3832
        %v4447 = vunpack.c.h.b16 %v3832
        %v4448 = vunpack.c.l.b16 %v3833
        %v4449 = vunpack.c.h.b16 %v3833
        %v4450 = vunpack.c.l.b16 %v3834
        %v4451 = vunpack.c.h.b16 %v3834
        %v4452 = vunpack.c.l.b16 %v3835
        %v4453 = vunpack.c.h.b16 %v3835
        %v4454 = vunpack.c.l.b16 %v3836
        %v4455 = vunpack.c.h.b16 %v3836
        %v4456 = vunpack.c.l.b16 %v3837
        %v4457 = vunpack.c.h.b16 %v3837
        %v4458 = vunpack.c.l.b16 %v3838
        %v4459 = vunpack.c.h.b16 %v3838
        %v4460 = vunpack.c.l.b16 %v3839
        %v4461 = vunpack.c.h.b16 %v3839
        %v4462 = vunpack.c.l.b16 %v3840
        %v4463 = vunpack.c.h.b16 %v3840
        %v4464 = vunpack.c.l.b16 %v3841
        %v4465 = vunpack.c.h.b16 %v3841
        %v4466 = vunpack.c.l.b16 %v3842
        %v4467 = vunpack.c.h.b16 %v3842
        %v4468 = vunpack.c.l.b16 %v3843
        %v4469 = vunpack.c.h.b16 %v3843
        %v4470 = vunpack.c.l.b16 %v3844
        %v4471 = vunpack.c.h.b16 %v3844
        %v4472 = vunpack.c.l.b16 %v3845
        %v4473 = vunpack.c.h.b16 %v3845
        %v4474 = vunpack.c.l.b16 %v3846
        %v4475 = vunpack.c.h.b16 %v3846
        %v4476 = vunpack.c.l.b16 %v3847
        %v4477 = vunpack.c.h.b16 %v3847
        %v4478 = vunpack.c.l.b16 %v3848
        %v4479 = vunpack.c.h.b16 %v3848
        %v4480 = vunpack.c.l.b16 %v3849
        %v4481 = vunpack.c.h.b16 %v3849
        %v4482 = vunpack.c.l.b16 %v3850
        %v4483 = vunpack.c.h.b16 %v3850
        %v4484 = vunpack.c.l.b16 %v3851
        %v4485 = vunpack.c.h.b16 %v3851
        %v4486 = vunpack.c.l.b16 %v3852
        %v4487 = vunpack.c.h.b16 %v3852
        %v4488 = vunpack.c.l.b16 %v3853
        %v4489 = vunpack.c.h.b16 %v3853
        %v4490 = vunpack.c.l.b16 %v3854
        %v4491 = vunpack.c.h.b16 %v3854
        %v4492 = vunpack.c.l.b16 %v3855
        %v4493 = vunpack.c.h.b16 %v3855
        %v4494 = vunpack.c.l.b16 %v3856
        %v4495 = vunpack.c.h.b16 %v3856
        %v4496 = vunpack.c.l.b16 %v3857
        %v4497 = vunpack.c.h.b16 %v3857
        %v4498 = vunpack.c.l.b16 %v3858
        %v4499 = vunpack.c.h.b16 %v3858
        %v4500 = vunpack.c.l.b16 %v3859
        %v4501 = vunpack.c.h.b16 %v3859
        %v4502 = vunpack.c.l.b16 %v3860
        %v4503 = vunpack.c.h.b16 %v3860
        %v4504 = vunpack.c.l.b16 %v3861
        %v4505 = vunpack.c.h.b16 %v3861
        %v4506 = vunpack.c.l.b16 %v3862
        %v4507 = vunpack.c.h.b16 %v3862
        %v4508 = vunpack.c.l.b16 %v3863
        %v4509 = vunpack.c.h.b16 %v3863
        %v4510 = vunpack.c.l.b16 %v3864
        %v4511 = vunpack.c.h.b16 %v3864
        %v4512 = vunpack.c.l.b16 %v3865
        %v4513 = vunpack.c.h.b16 %v3865
        %v4514 = vunpack.c.l.b16 %v3866
        %v4515 = vunpack.c.h.b16 %v3866
        %v4516 = vunpack.c.l.b16 %v3867
        %v4517 = vunpack.c.h.b16 %v3867
        %v4518 = vunpack.c.l.b16 %v3868
        %v4519 = vunpack.c.h.b16 %v3868
        %v4520 = vunpack.c.l.b16 %v3869
        %v4521 = vunpack.c.h.b16 %v3869
        %v4522 = vunpack.c.l.b16 %v3870
        %v4523 = vunpack.c.h.b16 %v3870
        %v4524 = vunpack.c.l.b16 %v3871
        %v4525 = vunpack.c.h.b16 %v3871
        %v4526 = vunpack.c.l.b16 %v3872
        %v4527 = vunpack.c.h.b16 %v3872
        %v4528 = vunpack.c.l.b16 %v3873
        %v4529 = vunpack.c.h.b16 %v3873
        %v4530 = vunpack.c.l.b16 %v3874
        %v4531 = vunpack.c.h.b16 %v3874
        %v4532 = vunpack.c.l.b16 %v3875
        %v4533 = vunpack.c.h.b16 %v3875
        %v4534 = vunpack.c.l.b16 %v3876
        %v4535 = vunpack.c.h.b16 %v3876
        %v4536 = vunpack.c.l.b16 %v3877
        %v4537 = vunpack.c.h.b16 %v3877
        %v4538 = vunpack.c.l.b16 %v3878
        %v4539 = vunpack.c.h.b16 %v3878
        %v4540 = vunpack.c.l.b16 %v3879
        %v4541 = vunpack.c.h.b16 %v3879
        %v4542 = vunpack.c.l.b16 %v3880
        %v4543 = vunpack.c.h.b16 %v3880
        %v4544 = vunpack.c.l.b16 %v3881
        %v4545 = vunpack.c.h.b16 %v3881
        %v4546 = vunpack.c.l.b16 %v3882
        %v4547 = vunpack.c.h.b16 %v3882
        %v4548 = vunpack.c.l.b16 %v3883
        %v4549 = vunpack.c.h.b16 %v3883
        %v4550 = vunpack.c.l.b16 %v3884
        %v4551 = vunpack.c.h.b16 %v3884
        %v4552 = vunpack.c.l.b16 %v3885
        %v4553 = vunpack.c.h.b16 %v3885
        %v4554 = vunpack.c.l.b16 %v3886
        %v4555 = vunpack.c.h.b16 %v3886
        %v4556 = vunpack.c.l.b16 %v3887
        %v4557 = vunpack.c.h.b16 %v3887
        %v4558 = vunpack.c.l.b16 %v3888
        %v4559 = vunpack.c.h.b16 %v3888
        %v4560 = vunpack.c.l.b16 %v3889
        %v4561 = vunpack.c.h.b16 %v3889
        %v4562 = vunpack.c.l.b16 %v3890
        %v4563 = vunpack.c.h.b16 %v3890
        %v4564 = vunpack.c.l.b16 %v3891
        %v4565 = vunpack.c.h.b16 %v3891
        %v4566 = vunpack.c.l.b16 %v3892
        %v4567 = vunpack.c.h.b16 %v3892
        %v4568 = vunpack.c.l.b16 %v3893
        %v4569 = vunpack.c.h.b16 %v3893
        %v4570 = vunpack.c.l.b16 %v3894
        %v4571 = vunpack.c.h.b16 %v3894
        %v4572 = vunpack.c.l.b16 %v3895
        %v4573 = vunpack.c.h.b16 %v3895
        %v4574 = vunpack.c.l.b16 %v3896
        %v4575 = vunpack.c.h.b16 %v3896
        %v4576 = vunpack.c.l.b16 %v3897
        %v4577 = vunpack.c.h.b16 %v3897
        %v4578 = vunpack.c.l.b16 %v3898
        %v4579 = vunpack.c.h.b16 %v3898
        %v4580 = vunpack.c.l.b16 %v3899
        %v4581 = vunpack.c.h.b16 %v3899
        %v4582 = vunpack.c.l.b16 %v3900
        %v4583 = vunpack.c.h.b16 %v3900
        %v4584 = vunpack.c.l.b16 %v3901
        %v4585 = vunpack.c.h.b16 %v3901
        %v4586 = vunpack.c.l.b16 %v3902
        %v4587 = vunpack.c.h.b16 %v3902
        %v4588 = vunpack.c.l.b16 %v3903
        %v4589 = vunpack.c.h.b16 %v3903
        %v4590 = vunpack.c.l.b16 %v3904
        %v4591 = vunpack.c.h.b16 %v3904
        %v4592 = vunpack.c.l.b16 %v3905
        %v4593 = vunpack.c.h.b16 %v3905
        %v4594 = vunpack.c.l.b16 %v3906
        %v4595 = vunpack.c.h.b16 %v3906
        %v4596 = vunpack.c.l.b16 %v3907
        %v4597 = vunpack.c.h.b16 %v3907
        %v4598 = vunpack.c.l.b16 %v3908
        %v4599 = vunpack.c.h.b16 %v3908
        %v4600 = vunpack.c.l.b16 %v3909
        %v4601 = vunpack.c.h.b16 %v3909
        %v4602 = vunpack.c.l.b16 %v3910
        %v4603 = vunpack.c.h.b16 %v3910
        %v4604 = vunpack.c.l.b16 %v3911
        %v4605 = vunpack.c.h.b16 %v3911
        %v4606 = vunpack.c.l.b16 %v3912
        %v4607 = vunpack.c.h.b16 %v3912
        %v4608 = vunpack.c.l.b16 %v3913
        %v4609 = vunpack.c.h.b16 %v3913
        %v4610 = vunpack.c.l.b16 %v3914
        %v4611 = vunpack.c.h.b16 %v3914
        %v4612 = vunpack.c.l.b16 %v3915
        %v4613 = vunpack.c.h.b16 %v3915
        %v4614 = vunpack.c.l.b16 %v3916
        %v4615 = vunpack.c.h.b16 %v3916
        %v4616 = vunpack.c.l.b16 %v3917
        %v4617 = vunpack.c.h.b16 %v3917
        %v4618 = vunpack.c.l.b16 %v3918
        %v4619 = vunpack.c.h.b16 %v3918
        %v4620 = vunpack.c.l.b16 %v3919
        %v4621 = vunpack.c.h.b16 %v3919
        %v4622 = vunpack.c.l.b16 %v3920
        %v4623 = vunpack.c.h.b16 %v3920
        %v4624 = vunpack.c.l.b16 %v3921
        %v4625 = vunpack.c.h.b16 %v3921
        %v4626 = vunpack.c.l.b16 %v3922
        %v4627 = vunpack.c.h.b16 %v3922
        %v4628 = vunpack.c.l.b16 %v3923
        %v4629 = vunpack.c.h.b16 %v3923
        %v4630 = vunpack.c.l.b16 %v3924
        %v4631 = vunpack.c.h.b16 %v3924
        %v4632 = vunpack.c.l.b16 %v3925
        %v4633 = vunpack.c.h.b16 %v3925
        %v4634 = vunpack.c.l.b16 %v3926
        %v4635 = vunpack.c.h.b16 %v3926
        %v4636 = vunpack.c.l.b16 %v3927
        %v4637 = vunpack.c.h.b16 %v3927
        %v4638 = vunpack.c.l.b16 %v3928
        %v4639 = vunpack.c.h.b16 %v3928
        %v4640 = vunpack.c.l.b16 %v3929
        %v4641 = vunpack.c.h.b16 %v3929
        %v4642 = vunpack.c.l.b16 %v3930
        %v4643 = vunpack.c.h.b16 %v3930
        %v4644 = vunpack.c.l.b16 %v3931
        %v4645 = vunpack.c.h.b16 %v3931
        %v4646 = vunpack.c.l.b16 %v3932
        %v4647 = vunpack.c.h.b16 %v3932
        %v4648 = vunpack.c.l.b16 %v3933
        %v4649 = vunpack.c.h.b16 %v3933
        %v4650 = vunpack.c.l.b16 %v3934
        %v4651 = vunpack.c.h.b16 %v3934
        %v4652 = vunpack.c.l.b16 %v3935
        %v4653 = vunpack.c.h.b16 %v3935
        %v4654 = vunpack.c.l.b16 %v3936
        %v4655 = vunpack.c.h.b16 %v3936
        %v4656 = vunpack.c.l.b16 %v3937
        %v4657 = vunpack.c.h.b16 %v3937
        %v4658 = vunpack.c.l.b16 %v3938
        %v4659 = vunpack.c.h.b16 %v3938
        %v4660 = vunpack.c.l.b16 %v3939
        %v4661 = vunpack.c.h.b16 %v3939
        %v4662 = vunpack.c.l.b16 %v3940
        %v4663 = vunpack.c.h.b16 %v3940
        %v4664 = vunpack.c.l.b16 %v3941
        %v4665 = vunpack.c.h.b16 %v3941
        %v4666 = vunpack.c.l.b16 %v3942
        %v4667 = vunpack.c.h.b16 %v3942
        %v4668 = vunpack.c.l.b16 %v3943
        %v4669 = vunpack.c.h.b16 %v3943
        %v4670 = vunpack.c.l.b16 %v3944
        %v4671 = vunpack.c.h.b16 %v3944
        %v4672 = vunpack.c.l.b16 %v3945
        %v4673 = vunpack.c.h.b16 %v3945
        %v4674 = vunpack.c.l.b16 %v3946
        %v4675 = vunpack.c.h.b16 %v3946
        %v4676 = vunpack.c.l.b16 %v3947
        %v4677 = vunpack.c.h.b16 %v3947
        %v4678 = vunpack.c.l.b16 %v3948
        %v4679 = vunpack.c.h.b16 %v3948
        %v4680 = vunpack.c.l.b16 %v3949
        %v4681 = vunpack.c.h.b16 %v3949
        %v4682 = vunpack.c.l.b16 %v3950
        %v4683 = vunpack.c.h.b16 %v3950
        %v4684 = vunpack.c.l.b16 %v3951
        %v4685 = vunpack.c.h.b16 %v3951
        %v4686 = vunpack.c.l.b16 %v3952
        %v4687 = vunpack.c.h.b16 %v3952
        %v4688 = vunpack.c.l.b16 %v3953
        %v4689 = vunpack.c.h.b16 %v3953
        %v4690 = vunpack.c.l.b16 %v3954
        %v4691 = vunpack.c.h.b16 %v3954
        %v4692 = vunpack.c.l.b16 %v3955
        %v4693 = vunpack.c.h.b16 %v3955
        %v4694 = vunpack.c.l.b16 %v3956
        %v4695 = vunpack.c.h.b16 %v3956
        %v4696 = vunpack.c.l.b16 %v3957
        %v4697 = vunpack.c.h.b16 %v3957
        %v4698 = vunpack.c.l.b16 %v3958
        %v4699 = vunpack.c.h.b16 %v3958
        %v4700 = vunpack.c.l.b16 %v3959
        %v4701 = vunpack.c.h.b16 %v3959
        %v4702 = vunpack.c.l.b16 %v3960
        %v4703 = vunpack.c.h.b16 %v3960
        %v4704 = vunpack.c.l.b16 %v3961
        %v4705 = vunpack.c.h.b16 %v3961
        %v4706 = vunpack.c.l.b16 %v3962
        %v4707 = vunpack.c.h.b16 %v3962
        %v4708 = vunpack.c.l.b16 %v3963
        %v4709 = vunpack.c.h.b16 %v3963
        %v4710 = vunpack.c.l.b16 %v3964
        %v4711 = vunpack.c.h.b16 %v3964
        %v4712 = vunpack.c.l.b16 %v3965
        %v4713 = vunpack.c.h.b16 %v3965
        %v4714 = vunpack.c.l.b16 %v3966
        %v4715 = vunpack.c.h.b16 %v3966
        %v4716 = vunpack.c.l.b16 %v3967
        %v4717 = vunpack.c.h.b16 %v3967
        %v4718 = vunpack.c.l.b16 %v3968
        %v4719 = vunpack.c.h.b16 %v3968
        %v4720 = vunpack.c.l.b16 %v3969
        %v4721 = vunpack.c.h.b16 %v3969
        %v4722 = vunpack.c.l.b16 %v3970
        %v4723 = vunpack.c.h.b16 %v3970
        %v4724 = vunpack.c.l.b16 %v3971
        %v4725 = vunpack.c.h.b16 %v3971
        %v4726 = vunpack.c.l.b16 %v3972
        %v4727 = vunpack.c.h.b16 %v3972
        %v4728 = vunpack.c.l.b16 %v3973
        %v4729 = vunpack.c.h.b16 %v3973
        %v4730 = vunpack.c.l.b16 %v3974
        %v4731 = vunpack.c.h.b16 %v3974
        %v4732 = vunpack.c.l.b16 %v3975
        %v4733 = vunpack.c.h.b16 %v3975
        %v4734 = vunpack.c.l.b16 %v3976
        %v4735 = vunpack.c.h.b16 %v3976
        %v4736 = vunpack.c.l.b16 %v3977
        %v4737 = vunpack.c.h.b16 %v3977
        %v4738 = vunpack.c.l.b16 %v3978
        %v4739 = vunpack.c.h.b16 %v3978
        %v4740 = vunpack.c.l.b16 %v3979
        %v4741 = vunpack.c.h.b16 %v3979
        %v4742 = vunpack.c.l.b16 %v3980
        %v4743 = vunpack.c.h.b16 %v3980
        %v4744 = vunpack.c.l.b16 %v3981
        %v4745 = vunpack.c.h.b16 %v3981
        %v4746 = vunpack.c.l.b16 %v3982
        %v4747 = vunpack.c.h.b16 %v3982
        %v4748 = vunpack.c.l.b16 %v3983
        %v4749 = vunpack.c.h.b16 %v3983
        %v4750 = vunpack.c.l.b16 %v3984
        %v4751 = vunpack.c.h.b16 %v3984
        %v4752 = vunpack.c.l.b16 %v3985
        %v4753 = vunpack.c.h.b16 %v3985
        %v4754 = vunpack.c.l.b16 %v3986
        %v4755 = vunpack.c.h.b16 %v3986
        %v4756 = vunpack.c.l.b16 %v3987
        %v4757 = vunpack.c.h.b16 %v3987
        %v4758 = vunpack.c.l.b16 %v3988
        %v4759 = vunpack.c.h.b16 %v3988
        %v4760 = vunpack.c.l.b16 %v3989
        %v4761 = vunpack.c.h.b16 %v3989
        %v4762 = vunpack.c.l.b16 %v3990
        %v4763 = vunpack.c.h.b16 %v3990
        %v4764 = vunpack.c.l.b16 %v3991
        %v4765 = vunpack.c.h.b16 %v3991
        %v4766 = vunpack.c.l.b16 %v3992
        %v4767 = vunpack.c.h.b16 %v3992
        %v4768 = vunpack.c.l.b16 %v3993
        %v4769 = vunpack.c.h.b16 %v3993
        %v4770 = vunpack.c.l.b16 %v3994
        %v4771 = vunpack.c.h.b16 %v3994
        %v4772 = vunpack.c.l.b16 %v3995
        %v4773 = vunpack.c.h.b16 %v3995
        %v4774 = vunpack.c.l.b16 %v3996
        %v4775 = vunpack.c.h.b16 %v3996
        %v4776 = vunpack.c.l.b16 %v3997
        %v4777 = vunpack.c.h.b16 %v3997
        %v4778 = vunpack.c.l.b16 %v3998
        %v4779 = vunpack.c.h.b16 %v3998
        %v4780 = vunpack.c.l.b16 %v3999
        %v4781 = vunpack.c.h.b16 %v3999
        %v4782 = vunpack.c.l.b16 %v4000
        %v4783 = vunpack.c.h.b16 %v4000
        %v4784 = vunpack.c.l.b16 %v4001
        %v4785 = vunpack.c.h.b16 %v4001
        %v4786 = vunpack.c.l.b16 %v4002
        %v4787 = vunpack.c.h.b16 %v4002
        %v4788 = vunpack.c.l.b16 %v4003
        %v4789 = vunpack.c.h.b16 %v4003
        %v4790 = vunpack.c.l.b16 %v4004
        %v4791 = vunpack.c.h.b16 %v4004
        %v4792 = vunpack.c.l.b16 %v4005
        %v4793 = vunpack.c.h.b16 %v4005
        %v4794 = vunpack.c.l.b16 %v4006
        %v4795 = vunpack.c.h.b16 %v4006
        %v4796 = vunpack.c.l.b16 %v4007
        %v4797 = vunpack.c.h.b16 %v4007
        %v4798 = vunpack.c.l.b16 %v4008
        %v4799 = vunpack.c.h.b16 %v4008
        %v4800 = vunpack.c.l.b16 %v4009
        %v4801 = vunpack.c.h.b16 %v4009
        %v4802 = vunpack.c.l.b16 %v4010
        %v4803 = vunpack.c.h.b16 %v4010
        %v4804 = vunpack.c.l.b16 %v4011
        %v4805 = vunpack.c.h.b16 %v4011
        %v4806 = vunpack.c.l.b16 %v4012
        %v4807 = vunpack.c.h.b16 %v4012
        %v4808 = vunpack.c.l.b16 %v4013
        %v4809 = vunpack.c.h.b16 %v4013
        %v4810 = vunpack.c.l.b16 %v4014
        %v4811 = vunpack.c.h.b16 %v4014
        %v4812 = vunpack.c.l.b16 %v4015
        %v4813 = vunpack.c.h.b16 %v4015
        %v4814 = vunpack.c.l.b16 %v4016
        %v4815 = vunpack.c.h.b16 %v4016
        %v4816 = vunpack.c.l.b16 %v4017
        %v4817 = vunpack.c.h.b16 %v4017
        %v4818 = vunpack.c.l.b16 %v4018
        %v4819 = vunpack.c.h.b16 %v4018
        %v4820 = vunpack.c.l.b16 %v4019
        %v4821 = vunpack.c.h.b16 %v4019
        %v4822 = vunpack.c.l.b16 %v4020
        %v4823 = vunpack.c.h.b16 %v4020
        %v4824 = vunpack.c.l.b16 %v4021
        %v4825 = vunpack.c.h.b16 %v4021
        %v4826 = vunpack.c.l.b16 %v4022
        %v4827 = vunpack.c.h.b16 %v4022
        %v4828 = vunpack.c.l.b16 %v4023
        %v4829 = vunpack.c.h.b16 %v4023
        %v4830 = vunpack.c.l.b16 %v4024
        %v4831 = vunpack.c.h.b16 %v4024
        %v4832 = vunpack.c.l.b16 %v4025
        %v4833 = vunpack.c.h.b16 %v4025
        %v4834 = vunpack.c.l.b16 %v4026
        %v4835 = vunpack.c.h.b16 %v4026
        %v4836 = vunpack.c.l.b16 %v4027
        %v4837 = vunpack.c.h.b16 %v4027
        %v4838 = vunpack.c.l.b16 %v4028
        %v4839 = vunpack.c.h.b16 %v4028
        %v4840 = vunpack.c.l.b16 %v4029
        %v4841 = vunpack.c.h.b16 %v4029
        %v4842 = vunpack.c.l.b16 %v4030
        %v4843 = vunpack.c.h.b16 %v4030
        %v4844 = vunpack.c.l.b16 %v4031
        %v4845 = vunpack.c.h.b16 %v4031
        %v4846 = vunpack.c.l.b16 %v4032
        %v4847 = vunpack.c.h.b16 %v4032
        %v4848 = vunpack.c.l.b16 %v4033
        %v4849 = vunpack.c.h.b16 %v4033
        %v4850 = vunpack.c.l.b16 %v4034
        %v4851 = vunpack.c.h.b16 %v4034
        %v4852 = vunpack.c.l.b16 %v4035
        %v4853 = vunpack.c.h.b16 %v4035
        %v4854 = vunpack.c.l.b16 %v4036
        %v4855 = vunpack.c.h.b16 %v4036
        %v4856 = vunpack.c.l.b16 %v4037
        %v4857 = vunpack.c.h.b16 %v4037
        %v4858 = vunpack.c.l.b16 %v4038
        %v4859 = vunpack.c.h.b16 %v4038
        %v4860 = vunpack.c.l.b16 %v4039
        %v4861 = vunpack.c.h.b16 %v4039
        %v4862 = vunpack.c.l.b16 %v4040
        %v4863 = vunpack.c.h.b16 %v4040
        %v4864 = vunpack.c.l.b16 %v4041
        %v4865 = vunpack.c.h.b16 %v4041
        %v4866 = vunpack.c.l.b16 %v4042
        %v4867 = vunpack.c.h.b16 %v4042
        %v4868 = vunpack.c.l.b16 %v4043
        %v4869 = vunpack.c.h.b16 %v4043
        %v4870 = vunpack.c.l.b16 %v4044
        %v4871 = vunpack.c.h.b16 %v4044
        %v4872 = vunpack.c.l.b16 %v4045
        %v4873 = vunpack.c.h.b16 %v4045
        %v4874 = vunpack.c.l.b16 %v4046
        %v4875 = vunpack.c.h.b16 %v4046
        %v4876 = vunpack.c.l.b16 %v4047
        %v4877 = vunpack.c.h.b16 %v4047
        %v4878 = vunpack.c.l.b16 %v4048
        %v4879 = vunpack.c.h.b16 %v4048
        %v4880 = vunpack.c.l.b16 %v4049
        %v4881 = vunpack.c.h.b16 %v4049
        %v4882 = vunpack.c.l.b16 %v4050
        %v4883 = vunpack.c.h.b16 %v4050
        %v4884 = vunpack.c.l.b16 %v4051
        %v4885 = vunpack.c.h.b16 %v4051
        %v4886 = vunpack.c.l.b16 %v4052
        %v4887 = vunpack.c.h.b16 %v4052
        %v4888 = vunpack.c.l.b16 %v4053
        %v4889 = vunpack.c.h.b16 %v4053
        %v4890 = vunpack.c.l.b16 %v4054
        %v4891 = vunpack.c.h.b16 %v4054
        %v4892 = vunpack.c.l.b16 %v4055
        %v4893 = vunpack.c.h.b16 %v4055
        %v4894 = vunpack.c.l.b16 %v4056
        %v4895 = vunpack.c.h.b16 %v4056
        %v4896 = vunpack.c.l.b16 %v4057
        %v4897 = vunpack.c.h.b16 %v4057
        %v4898 = vunpack.c.l.b16 %v4058
        %v4899 = vunpack.c.h.b16 %v4058
        %v4900 = vunpack.c.l.b16 %v4059
        %v4901 = vunpack.c.h.b16 %v4059
        %v4902 = vunpack.c.l.b16 %v4060
        %v4903 = vunpack.c.h.b16 %v4060
        %v4904 = vunpack.c.l.b16 %v4061
        %v4905 = vunpack.c.h.b16 %v4061
        %v4906 = vunpack.c.l.b16 %v4062
        %v4907 = vunpack.c.h.b16 %v4062
        %v4908 = vunpack.c.l.b16 %v4063
        %v4909 = vunpack.c.h.b16 %v4063
        %v4910 = vunpack.c.l.b16 %v4064
        %v4911 = vunpack.c.h.b16 %v4064
        %v4912 = vunpack.c.l.b16 %v4065
        %v4913 = vunpack.c.h.b16 %v4065
        %v4914 = vunpack.c.l.b16 %v4066
        %v4915 = vunpack.c.h.b16 %v4066
        %v4916 = vunpack.c.l.b16 %v4067
        %v4917 = vunpack.c.h.b16 %v4067
        %v4918 = vunpack.c.l.b16 %v4068
        %v4919 = vunpack.c.h.b16 %v4068
        %v4920 = vunpack.c.l.b16 %v4069
        %v4921 = vunpack.c.h.b16 %v4069
        %v4922 = vunpack.c.l.b16 %v4070
        %v4923 = vunpack.c.h.b16 %v4070
        %v4924 = vunpack.c.l.b16 %v4071
        %v4925 = vunpack.c.h.b16 %v4071
        %v4926 = vunpack.c.l.b16 %v4072
        %v4927 = vunpack.c.h.b16 %v4072
        %v4928 = vunpack.c.l.b16 %v4073
        %v4929 = vunpack.c.h.b16 %v4073
        %v4930 = vunpack.c.l.b16 %v4074
        %v4931 = vunpack.c.h.b16 %v4074
        %v4932 = vunpack.c.l.b16 %v4075
        %v4933 = vunpack.c.h.b16 %v4075
        %v4934 = vunpack.c.l.b16 %v4076
        %v4935 = vunpack.c.h.b16 %v4076
        %v4936 = vunpack.c.l.b16 %v4077
        %v4937 = vunpack.c.h.b16 %v4077
        %v4938 = vunpack.c.l.b16 %v4078
        %v4939 = vunpack.c.h.b16 %v4078
        %v4940 = vunpack.c.l.b16 %v4079
        %v4941 = vunpack.c.h.b16 %v4079
        %v4942 = vunpack.c.l.b16 %v4080
        %v4943 = vunpack.c.h.b16 %v4080
        %v4944 = vunpack.c.l.b16 %v4081
        %v4945 = vunpack.c.h.b16 %v4081
        %v4946 = vunpack.c.l.b16 %v4082
        %v4947 = vunpack.c.h.b16 %v4082
        %v4948 = vunpack.c.l.b16 %v4083
        %v4949 = vunpack.c.h.b16 %v4083
        %v4950 = vunpack.c.l.b16 %v4084
        %v4951 = vunpack.c.h.b16 %v4084
        %v4952 = vunpack.c.l.b16 %v4085
        %v4953 = vunpack.c.h.b16 %v4085
        %v4954 = vunpack.c.l.b16 %v4086
        %v4955 = vunpack.c.h.b16 %v4086
        %v4956 = vunpack.c.l.b16 %v4087
        %v4957 = vunpack.c.h.b16 %v4087
        %v4958 = vunpack.c.l.b16 %v4088
        %v4959 = vunpack.c.h.b16 %v4088
        %v4960 = vunpack.c.l.b16 %v4089
        %v4961 = vunpack.c.h.b16 %v4089
        %v4962 = vunpack.c.l.b16 %v4090
        %v4963 = vunpack.c.h.b16 %v4090
        %v4964 = vunpack.c.l.b16 %v4091
        %v4965 = vunpack.c.h.b16 %v4091
        %v4966 = vunpack.c.l.b16 %v4092
        %v4967 = vunpack.c.h.b16 %v4092
        %v4968 = vunpack.c.l.b16 %v4093
        %v4969 = vunpack.c.h.b16 %v4093
        %v4970 = vunpack.c.l.b16 %v4094
        %v4971 = vunpack.c.h.b16 %v4094
        %v4972 = vunpack.c.l.b16 %v4095
        %v4973 = vunpack.c.h.b16 %v4095
        %v4974 = vunpack.c.l.b16 %v4096
        %v4975 = vunpack.c.h.b16 %v4096
        %v4976 = vunpack.c.l.b16 %v4097
        %v4977 = vunpack.c.h.b16 %v4097
        %v4978 = vunpack.c.l.b16 %v4098
        %v4979 = vunpack.c.h.b16 %v4098
        %v4980 = vunpack.c.l.b16 %v4099
        %v4981 = vunpack.c.h.b16 %v4099
        %v4982 = vunpack.c.l.b16 %v4100
        %v4983 = vunpack.c.h.b16 %v4100
        %v4984 = vunpack.c.l.b16 %v4101
        %v4985 = vunpack.c.h.b16 %v4101
        %v4986 = vunpack.c.l.b16 %v4102
        %v4987 = vunpack.c.h.b16 %v4102
        %v4988 = vunpack.c.l.b16 %v4103
        %v4989 = vunpack.c.h.b16 %v4103
        %v4990 = vunpack.c.l.b16 %v4104
        %v4991 = vunpack.c.h.b16 %v4104
        %v4992 = vunpack.c.l.b16 %v4105
        %v4993 = vunpack.c.h.b16 %v4105
        %v4994 = vunpack.c.l.b16 %v4106
        %v4995 = vunpack.c.h.b16 %v4106
        %v4996 = vunpack.c.l.b16 %v4107
        %v4997 = vunpack.c.h.b16 %v4107
        %v4998 = vunpack.c.l.b16 %v4108
        %v4999 = vunpack.c.h.b16 %v4108
        %v5000 = vunpack.c.l.b16 %v4109
        %v5001 = vunpack.c.h.b16 %v4109
        %v5002 = vunpack.c.l.b16 %v4110
        %v5003 = vunpack.c.h.b16 %v4110
        %v5004 = vunpack.c.l.b16 %v4111
        %v5005 = vunpack.c.h.b16 %v4111
        %v5006 = vunpack.c.l.b16 %v4112
        %v5007 = vunpack.c.h.b16 %v4112
        %v5008 = vunpack.c.l.b16 %v4113
        %v5009 = vunpack.c.h.b16 %v4113
        %v5010 = vpack.c.b16 %v4440, %v4434
        %v5011 = vpack.c.b16 %v4441, %v4435
        %v5012 = vpack.c.b16 %v4442, %v4436
        %v5013 = vpack.c.b16 %v4443, %v4437
        %v5014 = vpack.c.b16 %v4444, %v4438
        %v5015 = vpack.c.b16 %v4445, %v4439
        %v5016 = vpack.c.b16 %v4452, %v4446
        %v5017 = vpack.c.b16 %v4453, %v4447
        %v5018 = vpack.c.b16 %v4454, %v4448
        %v5019 = vpack.c.b16 %v4455, %v4449
        %v5020 = vpack.c.b16 %v4456, %v4450
        %v5021 = vpack.c.b16 %v4457, %v4451
        %v5022 = vpack.c.b16 %v4464, %v4458
        %v5023 = vpack.c.b16 %v4465, %v4459
        %v5024 = vpack.c.b16 %v4466, %v4460
        %v5025 = vpack.c.b16 %v4467, %v4461
        %v5026 = vpack.c.b16 %v4468, %v4462
        %v5027 = vpack.c.b16 %v4469, %v4463
        %v5028 = vpack.c.b16 %v4476, %v4470
        %v5029 = vpack.c.b16 %v4477, %v4471
        %v5030 = vpack.c.b16 %v4478, %v4472
        %v5031 = vpack.c.b16 %v4479, %v4473
        %v5032 = vpack.c.b16 %v4480, %v4474
        %v5033 = vpack.c.b16 %v4481, %v4475
        %v5034 = vpack.c.b16 %v4488, %v4482
        %v5035 = vpack.c.b16 %v4489, %v4483
        %v5036 = vpack.c.b16 %v4490, %v4484
        %v5037 = vpack.c.b16 %v4491, %v4485
        %v5038 = vpack.c.b16 %v4492, %v4486
        %v5039 = vpack.c.b16 %v4493, %v4487
        %v5040 = vpack.c.b16 %v4500, %v4494
        %v5041 = vpack.c.b16 %v4501, %v4495
        %v5042 = vpack.c.b16 %v4502, %v4496
        %v5043 = vpack.c.b16 %v4503, %v4497
        %v5044 = vpack.c.b16 %v4504, %v4498
        %v5045 = vpack.c.b16 %v4505, %v4499
        %v5046 = vpack.c.b16 %v4512, %v4506
        %v5047 = vpack.c.b16 %v4513, %v4507
        %v5048 = vpack.c.b16 %v4514, %v4508
        %v5049 = vpack.c.b16 %v4515, %v4509
        %v5050 = vpack.c.b16 %v4516, %v4510
        %v5051 = vpack.c.b16 %v4517, %v4511
        %v5052 = vpack.c.b16 %v4524, %v4518
        %v5053 = vpack.c.b16 %v4525, %v4519
        %v5054 = vpack.c.b16 %v4526, %v4520
        %v5055 = vpack.c.b16 %v4527, %v4521
        %v5056 = vpack.c.b16 %v4528, %v4522
        %v5057 = vpack.c.b16 %v4529, %v4523
        %v5058 = vpack.c.b16 %v4536, %v4530
        %v5059 = vpack.c.b16 %v4537, %v4531
        %v5060 = vpack.c.b16 %v4538, %v4532
        %v5061 = vpack.c.b16 %v4539, %v4533
        %v5062 = vpack.c.b16 %v4540, %v4534
        %v5063 = vpack.c.b16 %v4541, %v4535
        %v5064 = vpack.c.b16 %v4548, %v4542
        %v5065 = vpack.c.b16 %v4549, %v4543
        %v5066 = vpack.c.b16 %v4550, %v4544
        %v5067 = vpack.c.b16 %v4551, %v4545
        %v5068 = vpack.c.b16 %v4552, %v4546
        %v5069 = vpack.c.b16 %v4553, %v4547
        %v5070 = vpack.c.b16 %v4560, %v4554
        %v5071 = vpack.c.b16 %v4561, %v4555
        %v5072 = vpack.c.b16 %v4562, %v4556
        %v5073 = vpack.c.b16 %v4563, %v4557
        %v5074 = vpack.c.b16 %v4564, %v4558
        %v5075 = vpack.c.b16 %v4565, %v4559
        %v5076 = vpack.c.b16 %v4572, %v4566
        %v5077 = vpack.c.b16 %v4573, %v4567
        %v5078 = vpack.c.b16 %v4574, %v4568
        %v5079 = vpack.c.b16 %v4575, %v4569
        %v5080 = vpack.c.b16 %v4576, %v4570
        %v5081 = vpack.c.b16 %v4577, %v4571
        %v5082 = vpack.c.b16 %v4584, %v4578
        %v5083 = vpack.c.b16 %v4585, %v4579
        %v5084 = vpack.c.b16 %v4586, %v4580
        %v5085 = vpack.c.b16 %v4587, %v4581
        %v5086 = vpack.c.b16 %v4588, %v4582
        %v5087 = vpack.c.b16 %v4589, %v4583
        %v5088 = vpack.c.b16 %v4596, %v4590
        %v5089 = vpack.c.b16 %v4597, %v4591
        %v5090 = vpack.c.b16 %v4598, %v4592
        %v5091 = vpack.c.b16 %v4599, %v4593
        %v5092 = vpack.c.b16 %v4600, %v4594
        %v5093 = vpack.c.b16 %v4601, %v4595
        %v5094 = vpack.c.b16 %v4608, %v4602
        %v5095 = vpack.c.b16 %v4609, %v4603
        %v5096 = vpack.c.b16 %v4610, %v4604
        %v5097 = vpack.c.b16 %v4611, %v4605
        %v5098 = vpack.c.b16 %v4612, %v4606
        %v5099 = vpack.c.b16 %v4613, %v4607
        %v5100 = vpack.c.b16 %v4620, %v4614
        %v5101 = vpack.c.b16 %v4621, %v4615
        %v5102 = vpack.c.b16 %v4622, %v4616
        %v5103 = vpack.c.b16 %v4623, %v4617
        %v5104 = vpack.c.b16 %v4624, %v4618
        %v5105 = vpack.c.b16 %v4625, %v4619
        %v5106 = vpack.c.b16 %v4632, %v4626
        %v5107 = vpack.c.b16 %v4633, %v4627
        %v5108 = vpack.c.b16 %v4634, %v4628
        %v5109 = vpack.c.b16 %v4635, %v4629
        %v5110 = vpack.c.b16 %v4636, %v4630
        %v5111 = vpack.c.b16 %v4637, %v4631
        %v5112 = vpack.c.b16 %v4644, %v4638
        %v5113 = vpack.c.b16 %v4645, %v4639
        %v5114 = vpack.c.b16 %v4646, %v4640
        %v5115 = vpack.c.b16 %v4647, %v4641
        %v5116 = vpack.c.b16 %v4648, %v4642
        %v5117 = vpack.c.b16 %v4649, %v4643
        %v5118 = vpack.c.b16 %v4656, %v4650
        %v5119 = vpack.c.b16 %v4657, %v4651
        %v5120 = vpack.c.b16 %v4658, %v4652
        %v5121 = vpack.c.b16 %v4659, %v4653
        %v5122 = vpack.c.b16 %v4660, %v4654
        %v5123 = vpack.c.b16 %v4661, %v4655
        %v5124 = vpack.c.b16 %v4668, %v4662
        %v5125 = vpack.c.b16 %v4669, %v4663
        %v5126 = vpack.c.b16 %v4670, %v4664
        %v5127 = vpack.c.b16 %v4671, %v4665
        %v5128 = vpack.c.b16 %v4672, %v4666
        %v5129 = vpack.c.b16 %v4673, %v4667
        %v5130 = vpack.c.b16 %v4680, %v4674
        %v5131 = vpack.c.b16 %v4681, %v4675
        %v5132 = vpack.c.b16 %v4682, %v4676
        %v5133 = vpack.c.b16 %v4683, %v4677
        %v5134 = vpack.c.b16 %v4684, %v4678
        %v5135 = vpack.c.b16 %v4685, %v4679
        %v5136 = vpack.c.b16 %v4692, %v4686
        %v5137 = vpack.c.b16 %v4693, %v4687
        %v5138 = vpack.c.b16 %v4694, %v4688
        %v5139 = vpack.c.b16 %v4695, %v4689
        %v5140 = vpack.c.b16 %v4696, %v4690
        %v5141 = vpack.c.b16 %v4697, %v4691
        %v5142 = vpack.c.b16 %v4704, %v4698
        %v5143 = vpack.c.b16 %v4705, %v4699
        %v5144 = vpack.c.b16 %v4706, %v4700
        %v5145 = vpack.c.b16 %v4707, %v4701
        %v5146 = vpack.c.b16 %v4708, %v4702
        %v5147 = vpack.c.b16 %v4709, %v4703
        %v5148 = vpack.c.b16 %v4716, %v4710
        %v5149 = vpack.c.b16 %v4717, %v4711
        %v5150 = vpack.c.b16 %v4718, %v4712
        %v5151 = vpack.c.b16 %v4719, %v4713
        %v5152 = vpack.c.b16 %v4720, %v4714
        %v5153 = vpack.c.b16 %v4721, %v4715
        %v5154 = vpack.c.b16 %v4728, %v4722
        %v5155 = vpack.c.b16 %v4729, %v4723
        %v5156 = vpack.c.b16 %v4730, %v4724
        %v5157 = vpack.c.b16 %v4731, %v4725
        %v5158 = vpack.c.b16 %v4732, %v4726
        %v5159 = vpack.c.b16 %v4733, %v4727
        %v5160 = vpack.c.b16 %v4740, %v4734
        %v5161 = vpack.c.b16 %v4741, %v4735
        %v5162 = vpack.c.b16 %v4742, %v4736
        %v5163 = vpack.c.b16 %v4743, %v4737
        %v5164 = vpack.c.b16 %v4744, %v4738
        %v5165 = vpack.c.b16 %v4745, %v4739
        %v5166 = vpack.c.b16 %v4752, %v4746
        %v5167 = vpack.c.b16 %v4753, %v4747
        %v5168 = vpack.c.b16 %v4754, %v4748
        %v5169 = vpack.c.b16 %v4755, %v4749
        %v5170 = vpack.c.b16 %v4756, %v4750
        %v5171 = vpack.c.b16 %v4757, %v4751
        %v5172 = vpack.c.b16 %v4764, %v4758
        %v5173 = vpack.c.b16 %v4765, %v4759
        %v5174 = vpack.c.b16 %v4766, %v4760
        %v5175 = vpack.c.b16 %v4767, %v4761
        %v5176 = vpack.c.b16 %v4768, %v4762
        %v5177 = vpack.c.b16 %v4769, %v4763
        %v5178 = vpack.c.b16 %v4776, %v4770
        %v5179 = vpack.c.b16 %v4777, %v4771
        %v5180 = vpack.c.b16 %v4778, %v4772
        %v5181 = vpack.c.b16 %v4779, %v4773
        %v5182 = vpack.c.b16 %v4780, %v4774
        %v5183 = vpack.c.b16 %v4781, %v4775
        %v5184 = vpack.c.b16 %v4788, %v4782
        %v5185 = vpack.c.b16 %v4789, %v4783
        %v5186 = vpack.c.b16 %v4790, %v4784
        %v5187 = vpack.c.b16 %v4791, %v4785
        %v5188 = vpack.c.b16 %v4792, %v4786
        %v5189 = vpack.c.b16 %v4793, %v4787
        %v5190 = vpack.c.b16 %v4800, %v4794
        %v5191 = vpack.c.b16 %v4801, %v4795
        %v5192 = vpack.c.b16 %v4802, %v4796
        %v5193 = vpack.c.b16 %v4803, %v4797
        %v5194 = vpack.c.b16 %v4804, %v4798
        %v5195 = vpack.c.b16 %v4805, %v4799
        %v5196 = vpack.c.b16 %v4812, %v4806
        %v5197 = vpack.c.b16 %v4813, %v4807
        %v5198 = vpack.c.b16 %v4814, %v4808
        %v5199 = vpack.c.b16 %v4815, %v4809
        %v5200 = vpack.c.b16 %v4816, %v4810
        %v5201 = vpack.c.b16 %v4817, %v4811
        %v5202 = vpack.c.b16 %v4824, %v4818
        %v5203 = vpack.c.b16 %v4825, %v4819
        %v5204 = vpack.c.b16 %v4826, %v4820
        %v5205 = vpack.c.b16 %v4827, %v4821
        %v5206 = vpack.c.b16 %v4828, %v4822
        %v5207 = vpack.c.b16 %v4829, %v4823
        %v5208 = vpack.c.b16 %v4836, %v4830
        %v5209 = vpack.c.b16 %v4837, %v4831
        %v5210 = vpack.c.b16 %v4838, %v4832
        %v5211 = vpack.c.b16 %v4839, %v4833
        %v5212 = vpack.c.b16 %v4840, %v4834
        %v5213 = vpack.c.b16 %v4841, %v4835
        %v5214 = vpack.c.b16 %v4848, %v4842
        %v5215 = vpack.c.b16 %v4849, %v4843
        %v5216 = vpack.c.b16 %v4850, %v4844
        %v5217 = vpack.c.b16 %v4851, %v4845
        %v5218 = vpack.c.b16 %v4852, %v4846
        %v5219 = vpack.c.b16 %v4853, %v4847
        %v5220 = vpack.c.b16 %v4860, %v4854
        %v5221 = vpack.c.b16 %v4861, %v4855
        %v5222 = vpack.c.b16 %v4862, %v4856
        %v5223 = vpack.c.b16 %v4863, %v4857
        %v5224 = vpack.c.b16 %v4864, %v4858
        %v5225 = vpack.c.b16 %v4865, %v4859
        %v5226 = vpack.c.b16 %v4872, %v4866
        %v5227 = vpack.c.b16 %v4873, %v4867
        %v5228 = vpack.c.b16 %v4874, %v4868
        %v5229 = vpack.c.b16 %v4875, %v4869
        %v5230 = vpack.c.b16 %v4876, %v4870
        %v5231 = vpack.c.b16 %v4877, %v4871
        %v5232 = vpack.c.b16 %v4884, %v4878
        %v5233 = vpack.c.b16 %v4885, %v4879
        %v5234 = vpack.c.b16 %v4886, %v4880
        %v5235 = vpack.c.b16 %v4887, %v4881
        %v5236 = vpack.c.b16 %v4888, %v4882
        %v5237 = vpack.c.b16 %v4889, %v4883
        %v5238 = vpack.c.b16 %v4896, %v4890
        %v5239 = vpack.c.b16 %v4897, %v4891
        %v5240 = vpack.c.b16 %v4898, %v4892
        %v5241 = vpack.c.b16 %v4899, %v4893
        %v5242 = vpack.c.b16 %v4900, %v4894
        %v5243 = vpack.c.b16 %v4901, %v4895
        %v5244 = vpack.c.b16 %v4908, %v4902
        %v5245 = vpack.c.b16 %v4909, %v4903
        %v5246 = vpack.c.b16 %v4910, %v4904
        %v5247 = vpack.c.b16 %v4911, %v4905
        %v5248 = vpack.c.b16 %v4912, %v4906
        %v5249 = vpack.c.b16 %v4913, %v4907
        %v5250 = vpack.c.b16 %v4920, %v4914
        %v5251 = vpack.c.b16 %v4921, %v4915
        %v5252 = vpack.c.b16 %v4922, %v4916
        %v5253 = vpack.c.b16 %v4923, %v4917
        %v5254 = vpack.c.b16 %v4924, %v4918
        %v5255 = vpack.c.b16 %v4925, %v4919
        %v5256 = vpack.c.b16 %v4932, %v4926
        %v5257 = vpack.c.b16 %v4933, %v4927
        %v5258 = vpack.c.b16 %v4934, %v4928
        %v5259 = vpack.c.b16 %v4935, %v4929
        %v5260 = vpack.c.b16 %v4936, %v4930
        %v5261 = vpack.c.b16 %v4937, %v4931
        %v5262 = vpack.c.b16 %v4944, %v4938
        %v5263 = vpack.c.b16 %v4945, %v4939
        %v5264 = vpack.c.b16 %v4946, %v4940
        %v5265 = vpack.c.b16 %v4947, %v4941
        %v5266 = vpack.c.b16 %v4948, %v4942
        %v5267 = vpack.c.b16 %v4949, %v4943
        %v5268 = vpack.c.b16 %v4956, %v4950
        %v5269 = vpack.c.b16 %v4957, %v4951
        %v5270 = vpack.c.b16 %v4958, %v4952
        %v5271 = vpack.c.b16 %v4959, %v4953
        %v5272 = vpack.c.b16 %v4960, %v4954
        %v5273 = vpack.c.b16 %v4961, %v4955
        %v5274 = vpack.c.b16 %v4968, %v4962
        %v5275 = vpack.c.b16 %v4969, %v4963
        %v5276 = vpack.c.b16 %v4970, %v4964
        %v5277 = vpack.c.b16 %v4971, %v4965
        %v5278 = vpack.c.b16 %v4972, %v4966
        %v5279 = vpack.c.b16 %v4973, %v4967
        %v5280 = vpack.c.b16 %v4980, %v4974
        %v5281 = vpack.c.b16 %v4981, %v4975
        %v5282 = vpack.c.b16 %v4982, %v4976
        %v5283 = vpack.c.b16 %v4983, %v4977
        %v5284 = vpack.c.b16 %v4984, %v4978
        %v5285 = vpack.c.b16 %v4985, %v4979
        %v5286 = vpack.c.b16 %v4992, %v4986
        %v5287 = vpack.c.b16 %v4993, %v4987
        %v5288 = vpack.c.b16 %v4994, %v4988
        %v5289 = vpack.c.b16 %v4995, %v4989
        %v5290 = vpack.c.b16 %v4996, %v4990
        %v5291 = vpack.c.b16 %v4997, %v4991
        %v5292 = vpack.c.b16 %v5004, %v4998
        %v5293 = vpack.c.b16 %v5005, %v4999
        %v5294 = vpack.c.b16 %v5006, %v5000
        %v5295 = vpack.c.b16 %v5007, %v5001
        %v5296 = vpack.c.b16 %v5008, %v5002
        %v5297 = vpack.c.b16 %v5009, %v5003
        %5586 = vmatprep.subr.bf16.mxu0 %v5053
        %5587 = vmatpush1.bf16.msra.mxu0 %v5052
        %5588 = vmatprep.subr.bf16.mxu0 %v5047
        %5589 = vmatpush1.bf16.msra.mxu0 %v5046
        %5590 = vmatprep.subr.bf16.mxu0 %v5041
        %5591 = vmatpush1.bf16.msra.mxu0 %v5040
        %5592 = vmatprep.subr.bf16.mxu0 %v5035
        %5593 = vmatpush1.bf16.msra.mxu0 %v5034
        %5594 = vmatprep.subr.bf16.mxu0 %v5029
        %5595 = vmatpush1.bf16.msra.mxu0 %v5028
        %5596 = vmatprep.subr.bf16.mxu0 %v5023
        %5597 = vmatpush1.bf16.msra.mxu0 %v5022
        %5598 = vmatprep.subr.bf16.mxu0 %v5017
        %5599 = vmatpush1.bf16.msra.mxu0 %v5016
        %5600 = vmatprep.subr.bf16.mxu0 %v5011
        %5601 = vmatpush1.bf16.msra.mxu0 %v5010
        %5602 = vmatprep.subr.bf16.mxu0 %v5101
        %5603 = vmatpush2.bf16.msra.mxu0 %v5100
        %5604 = vmatprep.subr.bf16.mxu0 %v5095
        %5605 = vmatpush2.bf16.msra.mxu0 %v5094
        %5606 = vmatprep.subr.bf16.mxu0 %v5089
        %5607 = vmatpush2.bf16.msra.mxu0 %v5088
        %5608 = vmatprep.subr.bf16.mxu0 %v5083
        %5609 = vmatpush2.bf16.msra.mxu0 %v5082
        %5610 = vmatprep.subr.bf16.mxu0 %v5077
        %5611 = vmatpush2.bf16.msra.mxu0 %v5076
        %5612 = vmatprep.subr.bf16.mxu0 %v5071
        %5613 = vmatpush2.bf16.msra.mxu0 %v5070
        %5614 = vmatprep.subr.bf16.mxu0 %v5065
        %5615 = vmatpush2.bf16.msra.mxu0 %v5064
        %5616 = vmatprep.subr.bf16.mxu0 %v5059
        %5617 = vmatpush2.bf16.msra.mxu0 %v5058
        %5618 = vmatprep.mubr.bf16.mxu0 %v3821
        %5619 = vmatmul.mubr.bf16.gmra.mxu0 %v3820
        %v5620 = vpop.f32.mrf.mxu0
        %v5621 = vadd.f32 %v4119, %v5620
        %v5622 = vpop.f32.mrf.mxu0
        %v5623 = vadd.f32 %v4123, %v5622
        %v5624 = vpop.f32.mrf.mxu0
        %v5625 = vpop.f32.mrf.mxu0
        %5626 = vdwg.mxu0
        %5627 = vmatprep.subr.bf16.mxu0 %v5149
        %5628 = vmatpush1.bf16.msra.mxu0 %v5148
        %5629 = vmatprep.subr.bf16.mxu0 %v5143
        %5630 = vmatpush1.bf16.msra.mxu0 %v5142
        %5631 = vmatprep.subr.bf16.mxu0 %v5137
        %5632 = vmatpush1.bf16.msra.mxu0 %v5136
        %5633 = vmatprep.subr.bf16.mxu0 %v5131
        %5634 = vmatpush1.bf16.msra.mxu0 %v5130
        %5635 = vmatprep.subr.bf16.mxu0 %v5125
        %5636 = vmatpush1.bf16.msra.mxu0 %v5124
        %5637 = vmatprep.subr.bf16.mxu0 %v5119
        %5638 = vmatpush1.bf16.msra.mxu0 %v5118
        %5639 = vmatprep.subr.bf16.mxu0 %v5113
        %5640 = vmatpush1.bf16.msra.mxu0 %v5112
        %5641 = vmatprep.subr.bf16.mxu0 %v5107
        %5642 = vmatpush1.bf16.msra.mxu0 %v5106
        %5643 = vmatprep.subr.bf16.mxu0 %v5197
        %5644 = vmatpush2.bf16.msra.mxu0 %v5196
        %5645 = vmatprep.subr.bf16.mxu0 %v5191
        %5646 = vmatpush2.bf16.msra.mxu0 %v5190
        %5647 = vmatprep.subr.bf16.mxu0 %v5185
        %5648 = vmatpush2.bf16.msra.mxu0 %v5184
        %5649 = vmatprep.subr.bf16.mxu0 %v5179
        %5650 = vmatpush2.bf16.msra.mxu0 %v5178
        %5651 = vmatprep.subr.bf16.mxu0 %v5173
        %5652 = vmatpush2.bf16.msra.mxu0 %v5172
        %5653 = vmatprep.subr.bf16.mxu0 %v5167
        %5654 = vmatpush2.bf16.msra.mxu0 %v5166
        %5655 = vmatprep.subr.bf16.mxu0 %v5161
        %5656 = vmatpush2.bf16.msra.mxu0 %v5160
        %5657 = vmatprep.subr.bf16.mxu0 %v5155
        %5658 = vmatpush2.bf16.msra.mxu0 %v5154
        %5659 = vmatprep.mubr.bf16.mxu0 %v3823
        %5660 = vmatmul.mubr.bf16.gmra.mxu0 %v3822
        %v5661 = vpop.f32.mrf.mxu0
        %v5662 = vadd.f32 %v5621, %v5661
        %v5663 = vpop.f32.mrf.mxu0
        %v5664 = vadd.f32 %v5623, %v5663
        %v5665 = vpop.f32.mrf.mxu0
        %v5666 = vpop.f32.mrf.mxu0
        %5667 = vdwg.mxu0
        %5668 = vmatprep.subr.bf16.mxu0 %v5245
        %5669 = vmatpush1.bf16.msra.mxu0 %v5244
        %5670 = vmatprep.subr.bf16.mxu0 %v5239
        %5671 = vmatpush1.bf16.msra.mxu0 %v5238
        %5672 = vmatprep.subr.bf16.mxu0 %v5233
        %5673 = vmatpush1.bf16.msra.mxu0 %v5232
        %5674 = vmatprep.subr.bf16.mxu0 %v5227
        %5675 = vmatpush1.bf16.msra.mxu0 %v5226
        %5676 = vmatprep.subr.bf16.mxu0 %v5221
        %5677 = vmatpush1.bf16.msra.mxu0 %v5220
        %5678 = vmatprep.subr.bf16.mxu0 %v5215
        %5679 = vmatpush1.bf16.msra.mxu0 %v5214
        %5680 = vmatprep.subr.bf16.mxu0 %v5209
        %5681 = vmatpush1.bf16.msra.mxu0 %v5208
        %5682 = vmatprep.subr.bf16.mxu0 %v5203
        %5683 = vmatpush1.bf16.msra.mxu0 %v5202
        %5684 = vmatprep.subr.bf16.mxu0 %v5293
        %5685 = vmatpush2.bf16.msra.mxu0 %v5292
        %5686 = vmatprep.subr.bf16.mxu0 %v5287
        %5687 = vmatpush2.bf16.msra.mxu0 %v5286
        %5688 = vmatprep.subr.bf16.mxu0 %v5281
        %5689 = vmatpush2.bf16.msra.mxu0 %v5280
        %5690 = vmatprep.subr.bf16.mxu0 %v5275
        %5691 = vmatpush2.bf16.msra.mxu0 %v5274
        %5692 = vmatprep.subr.bf16.mxu0 %v5269
        %5693 = vmatpush2.bf16.msra.mxu0 %v5268
        %5694 = vmatprep.subr.bf16.mxu0 %v5263
        %5695 = vmatpush2.bf16.msra.mxu0 %v5262
        %5696 = vmatprep.subr.bf16.mxu0 %v5257
        %5697 = vmatpush2.bf16.msra.mxu0 %v5256
        %5698 = vmatprep.subr.bf16.mxu0 %v5251
        %5699 = vmatpush2.bf16.msra.mxu0 %v5250
        %5700 = vmatprep.mubr.bf16.mxu0 %v3825
        %5701 = vmatmul.mubr.bf16.gmra.mxu0 %v3824
        %v5702 = vpop.f32.mrf.mxu0
        %v5703 = vadd.f32 %v5662, %v5702
        %v5704 = vpop.f32.mrf.mxu0
        %v5705 = vadd.f32 %v5664, %v5704
        %v5706 = vpop.f32.mrf.mxu0
        %v5707 = vpop.f32.mrf.mxu0
        %5708 = vdwg.mxu0
        %5709 = vmatprep.subr.bf16.mxu0 %v5055
        %5710 = vmatpush1.bf16.msra.mxu0 %v5054
        %5711 = vmatprep.subr.bf16.mxu0 %v5049
        %5712 = vmatpush1.bf16.msra.mxu0 %v5048
        %5713 = vmatprep.subr.bf16.mxu0 %v5043
        %5714 = vmatpush1.bf16.msra.mxu0 %v5042
        %5715 = vmatprep.subr.bf16.mxu0 %v5037
        %5716 = vmatpush1.bf16.msra.mxu0 %v5036
        %5717 = vmatprep.subr.bf16.mxu0 %v5031
        %5718 = vmatpush1.bf16.msra.mxu0 %v5030
        %5719 = vmatprep.subr.bf16.mxu0 %v5025
        %5720 = vmatpush1.bf16.msra.mxu0 %v5024
        %5721 = vmatprep.subr.bf16.mxu0 %v5019
        %5722 = vmatpush1.bf16.msra.mxu0 %v5018
        %5723 = vmatprep.subr.bf16.mxu0 %v5013
        %5724 = vmatpush1.bf16.msra.mxu0 %v5012
        %5725 = vmatprep.subr.bf16.mxu0 %v5103
        %5726 = vmatpush2.bf16.msra.mxu0 %v5102
        %5727 = vmatprep.subr.bf16.mxu0 %v5097
        %5728 = vmatpush2.bf16.msra.mxu0 %v5096
        %5729 = vmatprep.subr.bf16.mxu0 %v5091
        %5730 = vmatpush2.bf16.msra.mxu0 %v5090
        %5731 = vmatprep.subr.bf16.mxu0 %v5085
        %5732 = vmatpush2.bf16.msra.mxu0 %v5084
        %5733 = vmatprep.subr.bf16.mxu0 %v5079
        %5734 = vmatpush2.bf16.msra.mxu0 %v5078
        %5735 = vmatprep.subr.bf16.mxu0 %v5073
        %5736 = vmatpush2.bf16.msra.mxu0 %v5072
        %5737 = vmatprep.subr.bf16.mxu0 %v5067
        %5738 = vmatpush2.bf16.msra.mxu0 %v5066
        %5739 = vmatprep.subr.bf16.mxu0 %v5061
        %5740 = vmatpush2.bf16.msra.mxu0 %v5060
        %5741 = vmatprep.mubr.bf16.mxu0 %v3821
        %5742 = vmatmul.mubr.bf16.gmra.mxu0 %v3820
        %v5743 = vpop.f32.mrf.mxu0
        %v5744 = vadd.f32 %v4127, %v5743
        %v5745 = vpop.f32.mrf.mxu0
        %v5746 = vadd.f32 %v4131, %v5745
        %v5747 = vpop.f32.mrf.mxu0
        %v5748 = vpop.f32.mrf.mxu0
        %5749 = vdwg.mxu0
        %5750 = vmatprep.subr.bf16.mxu0 %v5151
        %5751 = vmatpush1.bf16.msra.mxu0 %v5150
        %5752 = vmatprep.subr.bf16.mxu0 %v5145
        %5753 = vmatpush1.bf16.msra.mxu0 %v5144
        %5754 = vmatprep.subr.bf16.mxu0 %v5139
        %5755 = vmatpush1.bf16.msra.mxu0 %v5138
        %5756 = vmatprep.subr.bf16.mxu0 %v5133
        %5757 = vmatpush1.bf16.msra.mxu0 %v5132
        %5758 = vmatprep.subr.bf16.mxu0 %v5127
        %5759 = vmatpush1.bf16.msra.mxu0 %v5126
        %5760 = vmatprep.subr.bf16.mxu0 %v5121
        %5761 = vmatpush1.bf16.msra.mxu0 %v5120
        %5762 = vmatprep.subr.bf16.mxu0 %v5115
        %5763 = vmatpush1.bf16.msra.mxu0 %v5114
        %5764 = vmatprep.subr.bf16.mxu0 %v5109
        %5765 = vmatpush1.bf16.msra.mxu0 %v5108
        %5766 = vmatprep.subr.bf16.mxu0 %v5199
        %5767 = vmatpush2.bf16.msra.mxu0 %v5198
        %5768 = vmatprep.subr.bf16.mxu0 %v5193
        %5769 = vmatpush2.bf16.msra.mxu0 %v5192
        %5770 = vmatprep.subr.bf16.mxu0 %v5187
        %5771 = vmatpush2.bf16.msra.mxu0 %v5186
        %5772 = vmatprep.subr.bf16.mxu0 %v5181
        %5773 = vmatpush2.bf16.msra.mxu0 %v5180
        %5774 = vmatprep.subr.bf16.mxu0 %v5175
        %5775 = vmatpush2.bf16.msra.mxu0 %v5174
        %5776 = vmatprep.subr.bf16.mxu0 %v5169
        %5777 = vmatpush2.bf16.msra.mxu0 %v5168
        %5778 = vmatprep.subr.bf16.mxu0 %v5163
        %5779 = vmatpush2.bf16.msra.mxu0 %v5162
        %5780 = vmatprep.subr.bf16.mxu0 %v5157
        %5781 = vmatpush2.bf16.msra.mxu0 %v5156
        %5782 = vmatprep.mubr.bf16.mxu0 %v3823
        %5783 = vmatmul.mubr.bf16.gmra.mxu0 %v3822
        %v5784 = vpop.f32.mrf.mxu0
        %v5785 = vadd.f32 %v5744, %v5784
        %v5786 = vpop.f32.mrf.mxu0
        %v5787 = vadd.f32 %v5746, %v5786
        %v5788 = vpop.f32.mrf.mxu0
        %v5789 = vpop.f32.mrf.mxu0
        %5790 = vdwg.mxu0
        %5791 = vmatprep.subr.bf16.mxu0 %v5247
        %5792 = vmatpush1.bf16.msra.mxu0 %v5246
        %5793 = vmatprep.subr.bf16.mxu0 %v5241
        %5794 = vmatpush1.bf16.msra.mxu0 %v5240
        %5795 = vmatprep.subr.bf16.mxu0 %v5235
        %5796 = vmatpush1.bf16.msra.mxu0 %v5234
        %5797 = vmatprep.subr.bf16.mxu0 %v5229
        %5798 = vmatpush1.bf16.msra.mxu0 %v5228
        %5799 = vmatprep.subr.bf16.mxu0 %v5223
        %5800 = vmatpush1.bf16.msra.mxu0 %v5222
        %5801 = vmatprep.subr.bf16.mxu0 %v5217
        %5802 = vmatpush1.bf16.msra.mxu0 %v5216
        %5803 = vmatprep.subr.bf16.mxu0 %v5211
        %5804 = vmatpush1.bf16.msra.mxu0 %v5210
        %5805 = vmatprep.subr.bf16.mxu0 %v5205
        %5806 = vmatpush1.bf16.msra.mxu0 %v5204
        %5807 = vmatprep.subr.bf16.mxu0 %v5295
        %5808 = vmatpush2.bf16.msra.mxu0 %v5294
        %5809 = vmatprep.subr.bf16.mxu0 %v5289
        %5810 = vmatpush2.bf16.msra.mxu0 %v5288
        %5811 = vmatprep.subr.bf16.mxu0 %v5283
        %5812 = vmatpush2.bf16.msra.mxu0 %v5282
        %5813 = vmatprep.subr.bf16.mxu0 %v5277
        %5814 = vmatpush2.bf16.msra.mxu0 %v5276
        %5815 = vmatprep.subr.bf16.mxu0 %v5271
        %5816 = vmatpush2.bf16.msra.mxu0 %v5270
        %5817 = vmatprep.subr.bf16.mxu0 %v5265
        %5818 = vmatpush2.bf16.msra.mxu0 %v5264
        %5819 = vmatprep.subr.bf16.mxu0 %v5259
        %5820 = vmatpush2.bf16.msra.mxu0 %v5258
        %5821 = vmatprep.subr.bf16.mxu0 %v5253
        %5822 = vmatpush2.bf16.msra.mxu0 %v5252
        %5823 = vmatprep.mubr.bf16.mxu0 %v3825
        %5824 = vmatmul.mubr.bf16.gmra.mxu0 %v3824
        %v5825 = vpop.f32.mrf.mxu0
        %v5826 = vadd.f32 %v5785, %v5825
        %v5827 = vpop.f32.mrf.mxu0
        %v5828 = vadd.f32 %v5787, %v5827
        %v5829 = vpop.f32.mrf.mxu0
        %v5830 = vpop.f32.mrf.mxu0
        %5831 = vdwg.mxu0
        %5832 = vmatprep.subr.bf16.mxu0 %v5057
        %5833 = vmatpush1.bf16.msra.mxu0 %v5056
        %5834 = vmatprep.subr.bf16.mxu0 %v5051
        %5835 = vmatpush1.bf16.msra.mxu0 %v5050
        %5836 = vmatprep.subr.bf16.mxu0 %v5045
        %5837 = vmatpush1.bf16.msra.mxu0 %v5044
        %5838 = vmatprep.subr.bf16.mxu0 %v5039
        %5839 = vmatpush1.bf16.msra.mxu0 %v5038
        %5840 = vmatprep.subr.bf16.mxu0 %v5033
        %5841 = vmatpush1.bf16.msra.mxu0 %v5032
        %5842 = vmatprep.subr.bf16.mxu0 %v5027
        %5843 = vmatpush1.bf16.msra.mxu0 %v5026
        %5844 = vmatprep.subr.bf16.mxu0 %v5021
        %5845 = vmatpush1.bf16.msra.mxu0 %v5020
        %5846 = vmatprep.subr.bf16.mxu0 %v5015
        %5847 = vmatpush1.bf16.msra.mxu0 %v5014
        %5848 = vmatprep.subr.bf16.mxu0 %v5105
        %5849 = vmatpush2.bf16.msra.mxu0 %v5104
        %5850 = vmatprep.subr.bf16.mxu0 %v5099
        %5851 = vmatpush2.bf16.msra.mxu0 %v5098
        %5852 = vmatprep.subr.bf16.mxu0 %v5093
        %5853 = vmatpush2.bf16.msra.mxu0 %v5092
        %5854 = vmatprep.subr.bf16.mxu0 %v5087
        %5855 = vmatpush2.bf16.msra.mxu0 %v5086
        %5856 = vmatprep.subr.bf16.mxu0 %v5081
        %5857 = vmatpush2.bf16.msra.mxu0 %v5080
        %5858 = vmatprep.subr.bf16.mxu0 %v5075
        %5859 = vmatpush2.bf16.msra.mxu0 %v5074
        %5860 = vmatprep.subr.bf16.mxu0 %v5069
        %5861 = vmatpush2.bf16.msra.mxu0 %v5068
        %5862 = vmatprep.subr.bf16.mxu0 %v5063
        %5863 = vmatpush2.bf16.msra.mxu0 %v5062
        %5864 = vmatprep.mubr.bf16.mxu0 %v3821
        %5865 = vmatmul.mubr.bf16.gmra.mxu0 %v3820
        %v5866 = vpop.f32.mrf.mxu0
        %v5867 = vadd.f32 %v4135, %v5866
        %v5868 = vpop.f32.mrf.mxu0
        %v5869 = vadd.f32 %v4139, %v5868
        %v5870 = vpop.f32.mrf.mxu0
        %v5871 = vpop.f32.mrf.mxu0
        %5872 = vdwg.mxu0
        %5873 = vmatprep.subr.bf16.mxu0 %v5153
        %5874 = vmatpush1.bf16.msra.mxu0 %v5152
        %5875 = vmatprep.subr.bf16.mxu0 %v5147
        %5876 = vmatpush1.bf16.msra.mxu0 %v5146
        %5877 = vmatprep.subr.bf16.mxu0 %v5141
        %5878 = vmatpush1.bf16.msra.mxu0 %v5140
        %5879 = vmatprep.subr.bf16.mxu0 %v5135
        %5880 = vmatpush1.bf16.msra.mxu0 %v5134
        %5881 = vmatprep.subr.bf16.mxu0 %v5129
        %5882 = vmatpush1.bf16.msra.mxu0 %v5128
        %5883 = vmatprep.subr.bf16.mxu0 %v5123
        %5884 = vmatpush1.bf16.msra.mxu0 %v5122
        %5885 = vmatprep.subr.bf16.mxu0 %v5117
        %5886 = vmatpush1.bf16.msra.mxu0 %v5116
        %5887 = vmatprep.subr.bf16.mxu0 %v5111
        %5888 = vmatpush1.bf16.msra.mxu0 %v5110
        %5889 = vmatprep.subr.bf16.mxu0 %v5201
        %5890 = vmatpush2.bf16.msra.mxu0 %v5200
        %5891 = vmatprep.subr.bf16.mxu0 %v5195
        %5892 = vmatpush2.bf16.msra.mxu0 %v5194
        %5893 = vmatprep.subr.bf16.mxu0 %v5189
        %5894 = vmatpush2.bf16.msra.mxu0 %v5188
        %5895 = vmatprep.subr.bf16.mxu0 %v5183
        %5896 = vmatpush2.bf16.msra.mxu0 %v5182
        %5897 = vmatprep.subr.bf16.mxu0 %v5177
        %5898 = vmatpush2.bf16.msra.mxu0 %v5176
        %5899 = vmatprep.subr.bf16.mxu0 %v5171
        %5900 = vmatpush2.bf16.msra.mxu0 %v5170
        %5901 = vmatprep.subr.bf16.mxu0 %v5165
        %5902 = vmatpush2.bf16.msra.mxu0 %v5164
        %5903 = vmatprep.subr.bf16.mxu0 %v5159
        %5904 = vmatpush2.bf16.msra.mxu0 %v5158
        %5905 = vmatprep.mubr.bf16.mxu0 %v3823
        %5906 = vmatmul.mubr.bf16.gmra.mxu0 %v3822
        %v5907 = vpop.f32.mrf.mxu0
        %v5908 = vadd.f32 %v5867, %v5907
        %v5909 = vpop.f32.mrf.mxu0
        %v5910 = vadd.f32 %v5869, %v5909
        %v5911 = vpop.f32.mrf.mxu0
        %v5912 = vpop.f32.mrf.mxu0
        %5913 = vdwg.mxu0
        %5914 = vmatprep.subr.bf16.mxu0 %v5249
        %5915 = vmatpush1.bf16.msra.mxu0 %v5248
        %5916 = vmatprep.subr.bf16.mxu0 %v5243
        %5917 = vmatpush1.bf16.msra.mxu0 %v5242
        %5918 = vmatprep.subr.bf16.mxu0 %v5237
        %5919 = vmatpush1.bf16.msra.mxu0 %v5236
        %5920 = vmatprep.subr.bf16.mxu0 %v5231
        %5921 = vmatpush1.bf16.msra.mxu0 %v5230
        %5922 = vmatprep.subr.bf16.mxu0 %v5225
        %5923 = vmatpush1.bf16.msra.mxu0 %v5224
        %5924 = vmatprep.subr.bf16.mxu0 %v5219
        %5925 = vmatpush1.bf16.msra.mxu0 %v5218
        %5926 = vmatprep.subr.bf16.mxu0 %v5213
        %5927 = vmatpush1.bf16.msra.mxu0 %v5212
        %5928 = vmatprep.subr.bf16.mxu0 %v5207
        %5929 = vmatpush1.bf16.msra.mxu0 %v5206
        %5930 = vmatprep.subr.bf16.mxu0 %v5297
        %5931 = vmatpush2.bf16.msra.mxu0 %v5296
        %5932 = vmatprep.subr.bf16.mxu0 %v5291
        %5933 = vmatpush2.bf16.msra.mxu0 %v5290
        %5934 = vmatprep.subr.bf16.mxu0 %v5285
        %5935 = vmatpush2.bf16.msra.mxu0 %v5284
        %5936 = vmatprep.subr.bf16.mxu0 %v5279
        %5937 = vmatpush2.bf16.msra.mxu0 %v5278
        %5938 = vmatprep.subr.bf16.mxu0 %v5273
        %5939 = vmatpush2.bf16.msra.mxu0 %v5272
        %5940 = vmatprep.subr.bf16.mxu0 %v5267
        %5941 = vmatpush2.bf16.msra.mxu0 %v5266
        %5942 = vmatprep.subr.bf16.mxu0 %v5261
        %5943 = vmatpush2.bf16.msra.mxu0 %v5260
        %5944 = vmatprep.subr.bf16.mxu0 %v5255
        %5945 = vmatpush2.bf16.msra.mxu0 %v5254
        %5946 = vmatprep.mubr.bf16.mxu0 %v3825
        %5947 = vmatmul.mubr.bf16.gmra.mxu0 %v3824
        %v5948 = vpop.f32.mrf.mxu0
        %v5949 = vadd.f32 %v5908, %v5948
        %v5950 = vpop.f32.mrf.mxu0
        %v5951 = vadd.f32 %v5910, %v5950
        %v5952 = vpop.f32.mrf.mxu0
        %v5953 = vpop.f32.mrf.mxu0
        %5954 = vdwg.mxu0
        %v5955 = vmax.f32 %v5703, 0.0
        %v5956 = vmax.f32 %v5705, 0.0
        %v5957 = vmax.f32 %v5826, 0.0
        %v5958 = vmax.f32 %v5828, 0.0
        %v5959 = vmax.f32 %v5949, 0.0
        %v5960 = vmax.f32 %v5951, 0.0
        %v5961 = vpack.c.bf16 %v5955, %v5955
        %v5962 = vpack.c.bf16 %v5956, %v5956
        %v5963 = vpack.c.bf16 %v5957, %v5957
        %v5964 = vpack.c.bf16 %v5958, %v5958
        %v5965 = vpack.c.bf16 %v5959, %v5959
        %v5966 = vpack.c.bf16 %v5960, %v5960
        %v5967 = vld [vmem:[%s12] sm:$0xf]
        %v5968 = vld [vmem:[%s12 + $0x4] sm:$0xf]
        %v5969 = vld [vmem:[%s12 + $0x8] sm:$0xf]
        %v5970 = vld [vmem:[%s12 + $0xc] sm:$0xf]
        %v5971 = vld [vmem:[%s12 + $0x10] sm:$0xf]
        %v5972 = vld [vmem:[%s12 + $0x14] sm:$0xf]
        %v5973 = vld [vmem:[%s12 + $0x18] sm:$0xf]
        %v5974 = vld [vmem:[%s12 + $0x1c] sm:$0xf]
        %v5975 = vld [vmem:[%s12 + $0x20] sm:$0xf]
        %v5976 = vld [vmem:[%s12 + $0x24] sm:$0xf]
        %v5977 = vld [vmem:[%s12 + $0x28] sm:$0xf]
        %v5978 = vld [vmem:[%s12 + $0x2c] sm:$0xf]
        %v5979 = vld [vmem:[%s12 + $0x30] sm:$0xf]
        %v5980 = vld [vmem:[%s12 + $0x34] sm:$0xf]
        %v5981 = vld [vmem:[%s12 + $0x38] sm:$0xf]
        %v5982 = vld [vmem:[%s12 + $0x3c] sm:$0xf]
        %v5983 = vld [vmem:[%s12 + $0x40] sm:$0xf]
        %v5984 = vld [vmem:[%s12 + $0x44] sm:$0xf]
        %v5985 = vld [vmem:[%s12 + $0x48] sm:$0xf]
        %v5986 = vld [vmem:[%s12 + $0x4c] sm:$0xf]
        %v5987 = vld [vmem:[%s12 + $0x50] sm:$0xf]
        %v5988 = vld [vmem:[%s12 + $0x54] sm:$0xf]
        %v5989 = vld [vmem:[%s12 + $0x58] sm:$0xf]
        %v5990 = vld [vmem:[%s12 + $0x5c] sm:$0xf]
        %v5991 = vld [vmem:[%s12 + $0x60] sm:$0xf]
        %v5992 = vld [vmem:[%s12 + $0x64] sm:$0xf]
        %v5993 = vld [vmem:[%s12 + $0x68] sm:$0xf]
        %v5994 = vld [vmem:[%s12 + $0x6c] sm:$0xf]
        %v5995 = vld [vmem:[%s12 + $0x70] sm:$0xf]
        %v5996 = vld [vmem:[%s12 + $0x74] sm:$0xf]
        %v5997 = vld [vmem:[%s12 + $0x78] sm:$0xf]
        %v5998 = vld [vmem:[%s12 + $0x7c] sm:$0xf]
        %v5999 = vld [vmem:[%s12 + $0x80] sm:$0xf]
        %v6000 = vld [vmem:[%s12 + $0x84] sm:$0xf]
        %v6001 = vld [vmem:[%s12 + $0x88] sm:$0xf]
        %v6002 = vld [vmem:[%s12 + $0x8c] sm:$0xf]
        %v6003 = vld [vmem:[%s12 + $0x90] sm:$0xf]
        %v6004 = vld [vmem:[%s12 + $0x94] sm:$0xf]
        %v6005 = vld [vmem:[%s12 + $0x98] sm:$0xf]
        %v6006 = vld [vmem:[%s12 + $0x9c] sm:$0xf]
        %v6007 = vld [vmem:[%s12 + $0xa0] sm:$0xf]
        %v6008 = vld [vmem:[%s12 + $0xa4] sm:$0xf]
        %v6009 = vld [vmem:[%s12 + $0xa8] sm:$0xf]
        %v6010 = vld [vmem:[%s12 + $0xac] sm:$0xf]
        %v6011 = vld [vmem:[%s12 + $0xb0] sm:$0xf]
        %v6012 = vld [vmem:[%s12 + $0xb4] sm:$0xf]
        %v6013 = vld [vmem:[%s12 + $0xb8] sm:$0xf]
        %v6014 = vld [vmem:[%s12 + $0xbc] sm:$0xf]
        %v6015 = vld [vmem:[%s12 + $0xc0] sm:$0xf]
        %v6016 = vld [vmem:[%s12 + $0xc4] sm:$0xf]
        %v6017 = vld [vmem:[%s12 + $0xc8] sm:$0xf]
        %v6018 = vld [vmem:[%s12 + $0xcc] sm:$0xf]
        %v6019 = vld [vmem:[%s12 + $0xd0] sm:$0xf]
        %v6020 = vld [vmem:[%s12 + $0xd4] sm:$0xf]
        %v6021 = vld [vmem:[%s12 + $0xd8] sm:$0xf]
        %v6022 = vld [vmem:[%s12 + $0xdc] sm:$0xf]
        %v6023 = vld [vmem:[%s12 + $0xe0] sm:$0xf]
        %v6024 = vld [vmem:[%s12 + $0xe4] sm:$0xf]
        %v6025 = vld [vmem:[%s12 + $0xe8] sm:$0xf]
        %v6026 = vld [vmem:[%s12 + $0xec] sm:$0xf]
        %v6027 = vld [vmem:[%s12 + $0xf0] sm:$0xf]
        %v6028 = vld [vmem:[%s12 + $0xf4] sm:$0xf]
        %v6029 = vld [vmem:[%s12 + $0xf8] sm:$0xf]
        %v6030 = vld [vmem:[%s12 + $0xfc] sm:$0xf]
        %v6031 = vld [vmem:[%s12 + $0x100] sm:$0xf]
        %v6032 = vld [vmem:[%s12 + $0x104] sm:$0xf]
        %v6033 = vld [vmem:[%s12 + $0x108] sm:$0xf]
        %v6034 = vld [vmem:[%s12 + $0x10c] sm:$0xf]
        %v6035 = vld [vmem:[%s12 + $0x110] sm:$0xf]
        %v6036 = vld [vmem:[%s12 + $0x114] sm:$0xf]
        %v6037 = vld [vmem:[%s12 + $0x118] sm:$0xf]
        %v6038 = vld [vmem:[%s12 + $0x11c] sm:$0xf]
        %v6039 = vld [vmem:[%s12 + $0x120] sm:$0xf]
        %v6040 = vld [vmem:[%s12 + $0x124] sm:$0xf]
        %v6041 = vld [vmem:[%s12 + $0x128] sm:$0xf]
        %v6042 = vld [vmem:[%s12 + $0x12c] sm:$0xf]
        %v6043 = vld [vmem:[%s12 + $0x130] sm:$0xf]
        %v6044 = vld [vmem:[%s12 + $0x134] sm:$0xf]
        %v6045 = vld [vmem:[%s12 + $0x138] sm:$0xf]
        %v6046 = vld [vmem:[%s12 + $0x13c] sm:$0xf]
        %v6047 = vld [vmem:[%s12 + $0x140] sm:$0xf]
        %v6048 = vld [vmem:[%s12 + $0x144] sm:$0xf]
        %v6049 = vld [vmem:[%s12 + $0x148] sm:$0xf]
        %v6050 = vld [vmem:[%s12 + $0x14c] sm:$0xf]
        %v6051 = vld [vmem:[%s12 + $0x150] sm:$0xf]
        %v6052 = vld [vmem:[%s12 + $0x154] sm:$0xf]
        %v6053 = vld [vmem:[%s12 + $0x158] sm:$0xf]
        %v6054 = vld [vmem:[%s12 + $0x15c] sm:$0xf]
        %v6055 = vld [vmem:[%s12 + $0x160] sm:$0xf]
        %v6056 = vld [vmem:[%s12 + $0x164] sm:$0xf]
        %v6057 = vld [vmem:[%s12 + $0x168] sm:$0xf]
        %v6058 = vld [vmem:[%s12 + $0x16c] sm:$0xf]
        %v6059 = vld [vmem:[%s12 + $0x170] sm:$0xf]
        %v6060 = vld [vmem:[%s12 + $0x174] sm:$0xf]
        %v6061 = vld [vmem:[%s12 + $0x178] sm:$0xf]
        %v6062 = vld [vmem:[%s12 + $0x17c] sm:$0xf]
        %v6063 = vld [vmem:[#allocation16] sm:$0x1]
        %v6065 = vlaneseq
        %v6066 = vshrl.u32 %v6065, 7
        %v6067 = vsub.s32 0, %v6066
        %v6068 = vrot.slane %v6063, %v6067
        %v6166 = vunpack.c.l.b16 %v5967
        %v6167 = vunpack.c.l.b16 %v5968
        %v6168 = vunpack.c.l.b16 %v5969
        %v6169 = vunpack.c.l.b16 %v5970
        %v6170 = vunpack.c.l.b16 %v5971
        %v6171 = vunpack.c.l.b16 %v5972
        %v6172 = vunpack.c.l.b16 %v5973
        %v6173 = vunpack.c.l.b16 %v5974
        %v6174 = vunpack.c.l.b16 %v5975
        %v6175 = vunpack.c.l.b16 %v5976
        %v6176 = vunpack.c.l.b16 %v5977
        %v6177 = vunpack.c.l.b16 %v5978
        %v6178 = vunpack.c.l.b16 %v5979
        %v6179 = vunpack.c.l.b16 %v5980
        %v6180 = vunpack.c.l.b16 %v5981
        %v6181 = vunpack.c.l.b16 %v5982
        %v6182 = vunpack.c.l.b16 %v5983
        %v6183 = vunpack.c.l.b16 %v5984
        %v6184 = vunpack.c.l.b16 %v5985
        %v6185 = vunpack.c.l.b16 %v5986
        %v6186 = vunpack.c.l.b16 %v5987
        %v6187 = vunpack.c.l.b16 %v5988
        %v6188 = vunpack.c.l.b16 %v5989
        %v6189 = vunpack.c.l.b16 %v5990
        %v6190 = vunpack.c.l.b16 %v5991
        %v6191 = vunpack.c.l.b16 %v5992
        %v6192 = vunpack.c.l.b16 %v5993
        %v6193 = vunpack.c.l.b16 %v5994
        %v6194 = vunpack.c.l.b16 %v5995
        %v6195 = vunpack.c.l.b16 %v5996
        %v6196 = vunpack.c.l.b16 %v5997
        %v6197 = vunpack.c.l.b16 %v5998
        %v6198 = vunpack.c.l.b16 %v5999
        %v6199 = vunpack.c.l.b16 %v6000
        %v6200 = vunpack.c.l.b16 %v6001
        %v6201 = vunpack.c.l.b16 %v6002
        %v6202 = vunpack.c.l.b16 %v6003
        %v6203 = vunpack.c.l.b16 %v6004
        %v6204 = vunpack.c.l.b16 %v6005
        %v6205 = vunpack.c.l.b16 %v6006
        %v6206 = vunpack.c.l.b16 %v6007
        %v6207 = vunpack.c.l.b16 %v6008
        %v6208 = vunpack.c.l.b16 %v6009
        %v6209 = vunpack.c.l.b16 %v6010
        %v6210 = vunpack.c.l.b16 %v6011
        %v6211 = vunpack.c.l.b16 %v6012
        %v6212 = vunpack.c.l.b16 %v6013
        %v6213 = vunpack.c.l.b16 %v6014
        %v6214 = vunpack.c.l.b16 %v6015
        %v6215 = vunpack.c.l.b16 %v6016
        %v6216 = vunpack.c.l.b16 %v6017
        %v6217 = vunpack.c.l.b16 %v6018
        %v6218 = vunpack.c.l.b16 %v6019
        %v6219 = vunpack.c.l.b16 %v6020
        %v6220 = vunpack.c.l.b16 %v6021
        %v6221 = vunpack.c.l.b16 %v6022
        %v6222 = vunpack.c.l.b16 %v6023
        %v6223 = vunpack.c.l.b16 %v6024
        %v6224 = vunpack.c.l.b16 %v6025
        %v6225 = vunpack.c.l.b16 %v6026
        %v6226 = vunpack.c.l.b16 %v6027
        %v6227 = vunpack.c.l.b16 %v6028
        %v6228 = vunpack.c.l.b16 %v6029
        %v6229 = vunpack.c.l.b16 %v6030
        %v6230 = vunpack.c.l.b16 %v6031
        %v6231 = vunpack.c.l.b16 %v6032
        %v6232 = vunpack.c.l.b16 %v6033
        %v6233 = vunpack.c.l.b16 %v6034
        %v6234 = vunpack.c.l.b16 %v6035
        %v6235 = vunpack.c.l.b16 %v6036
        %v6236 = vunpack.c.l.b16 %v6037
        %v6237 = vunpack.c.l.b16 %v6038
        %v6238 = vunpack.c.l.b16 %v6039
        %v6239 = vunpack.c.l.b16 %v6040
        %v6240 = vunpack.c.l.b16 %v6041
        %v6241 = vunpack.c.l.b16 %v6042
        %v6242 = vunpack.c.l.b16 %v6043
        %v6243 = vunpack.c.l.b16 %v6044
        %v6244 = vunpack.c.l.b16 %v6045
        %v6245 = vunpack.c.l.b16 %v6046
        %v6246 = vunpack.c.l.b16 %v6047
        %v6247 = vunpack.c.l.b16 %v6048
        %v6248 = vunpack.c.l.b16 %v6049
        %v6249 = vunpack.c.l.b16 %v6050
        %v6250 = vunpack.c.l.b16 %v6051
        %v6251 = vunpack.c.l.b16 %v6052
        %v6252 = vunpack.c.l.b16 %v6053
        %v6253 = vunpack.c.l.b16 %v6054
        %v6254 = vunpack.c.l.b16 %v6055
        %v6255 = vunpack.c.l.b16 %v6056
        %v6256 = vunpack.c.l.b16 %v6057
        %v6257 = vunpack.c.l.b16 %v6058
        %v6258 = vunpack.c.l.b16 %v6059
        %v6259 = vunpack.c.l.b16 %v6060
        %v6260 = vunpack.c.l.b16 %v6061
        %v6261 = vunpack.c.l.b16 %v6062
        %v6262 = vpack.c.b16 %v6167, %v6166
        %v6263 = vpack.c.b16 %v6169, %v6168
        %v6264 = vpack.c.b16 %v6171, %v6170
        %v6265 = vpack.c.b16 %v6173, %v6172
        %v6266 = vpack.c.b16 %v6175, %v6174
        %v6267 = vpack.c.b16 %v6177, %v6176
        %v6268 = vpack.c.b16 %v6179, %v6178
        %v6269 = vpack.c.b16 %v6181, %v6180
        %v6270 = vpack.c.b16 %v6183, %v6182
        %v6271 = vpack.c.b16 %v6185, %v6184
        %v6272 = vpack.c.b16 %v6187, %v6186
        %v6273 = vpack.c.b16 %v6189, %v6188
        %v6274 = vpack.c.b16 %v6191, %v6190
        %v6275 = vpack.c.b16 %v6193, %v6192
        %v6276 = vpack.c.b16 %v6195, %v6194
        %v6277 = vpack.c.b16 %v6197, %v6196
        %v6278 = vpack.c.b16 %v6199, %v6198
        %v6279 = vpack.c.b16 %v6201, %v6200
        %v6280 = vpack.c.b16 %v6203, %v6202
        %v6281 = vpack.c.b16 %v6205, %v6204
        %v6282 = vpack.c.b16 %v6207, %v6206
        %v6283 = vpack.c.b16 %v6209, %v6208
        %v6284 = vpack.c.b16 %v6211, %v6210
        %v6285 = vpack.c.b16 %v6213, %v6212
        %v6286 = vpack.c.b16 %v6215, %v6214
        %v6287 = vpack.c.b16 %v6217, %v6216
        %v6288 = vpack.c.b16 %v6219, %v6218
        %v6289 = vpack.c.b16 %v6221, %v6220
        %v6290 = vpack.c.b16 %v6223, %v6222
        %v6291 = vpack.c.b16 %v6225, %v6224
        %v6292 = vpack.c.b16 %v6227, %v6226
        %v6293 = vpack.c.b16 %v6229, %v6228
        %v6294 = vpack.c.b16 %v6231, %v6230
        %v6295 = vpack.c.b16 %v6233, %v6232
        %v6296 = vpack.c.b16 %v6235, %v6234
        %v6297 = vpack.c.b16 %v6237, %v6236
        %v6298 = vpack.c.b16 %v6239, %v6238
        %v6299 = vpack.c.b16 %v6241, %v6240
        %v6300 = vpack.c.b16 %v6243, %v6242
        %v6301 = vpack.c.b16 %v6245, %v6244
        %v6302 = vpack.c.b16 %v6247, %v6246
        %v6303 = vpack.c.b16 %v6249, %v6248
        %v6304 = vpack.c.b16 %v6251, %v6250
        %v6305 = vpack.c.b16 %v6253, %v6252
        %v6306 = vpack.c.b16 %v6255, %v6254
        %v6307 = vpack.c.b16 %v6257, %v6256
        %v6308 = vpack.c.b16 %v6259, %v6258
        %v6309 = vpack.c.b16 %v6261, %v6260
        %6358 = vmatprep.subr.bf16.mxu0 0
        %6359 = vmatpush1.bf16.msra.mxu0 %v6269
        %6360 = vmatprep.subr.bf16.mxu0 0
        %6361 = vmatpush1.bf16.msra.mxu0 %v6268
        %6362 = vmatprep.subr.bf16.mxu0 0
        %6363 = vmatpush1.bf16.msra.mxu0 %v6267
        %6364 = vmatprep.subr.bf16.mxu0 0
        %6365 = vmatpush1.bf16.msra.mxu0 %v6266
        %6366 = vmatprep.subr.bf16.mxu0 0
        %6367 = vmatpush1.bf16.msra.mxu0 %v6265
        %6368 = vmatprep.subr.bf16.mxu0 0
        %6369 = vmatpush1.bf16.msra.mxu0 %v6264
        %6370 = vmatprep.subr.bf16.mxu0 0
        %6371 = vmatpush1.bf16.msra.mxu0 %v6263
        %6372 = vmatprep.subr.bf16.mxu0 0
        %6373 = vmatpush1.bf16.msra.mxu0 %v6262
        %6374 = vmatprep.subr.bf16.mxu0 0
        %6375 = vmatpush2.bf16.msra.mxu0 %v6277
        %6376 = vmatprep.subr.bf16.mxu0 0
        %6377 = vmatpush2.bf16.msra.mxu0 %v6276
        %6378 = vmatprep.subr.bf16.mxu0 0
        %6379 = vmatpush2.bf16.msra.mxu0 %v6275
        %6380 = vmatprep.subr.bf16.mxu0 0
        %6381 = vmatpush2.bf16.msra.mxu0 %v6274
        %6382 = vmatprep.subr.bf16.mxu0 0
        %6383 = vmatpush2.bf16.msra.mxu0 %v6273
        %6384 = vmatprep.subr.bf16.mxu0 0
        %6385 = vmatpush2.bf16.msra.mxu0 %v6272
        %6386 = vmatprep.subr.bf16.mxu0 0
        %6387 = vmatpush2.bf16.msra.mxu0 %v6271
        %6388 = vmatprep.subr.bf16.mxu0 0
        %6389 = vmatpush2.bf16.msra.mxu0 %v6270
        %6390 = vmatprep.mubr.bf16.mxu0 %v5962
        %6391 = vmatmul.mubr.bf16.gmra.mxu0 %v5961
        %v6392 = vpop.f32.mrf.mxu0
        %v6393 = vadd.f32 %v6068, %v6392
        %v6394 = vpop.f32.mrf.mxu0
        %v6395 = vpop.f32.mrf.mxu0
        %v6396 = vpop.f32.mrf.mxu0
        %6397 = vdwg.mxu0
        %6398 = vmatprep.subr.bf16.mxu0 0
        %6399 = vmatpush1.bf16.msra.mxu0 %v6285
        %6400 = vmatprep.subr.bf16.mxu0 0
        %6401 = vmatpush1.bf16.msra.mxu0 %v6284
        %6402 = vmatprep.subr.bf16.mxu0 0
        %6403 = vmatpush1.bf16.msra.mxu0 %v6283
        %6404 = vmatprep.subr.bf16.mxu0 0
        %6405 = vmatpush1.bf16.msra.mxu0 %v6282
        %6406 = vmatprep.subr.bf16.mxu0 0
        %6407 = vmatpush1.bf16.msra.mxu0 %v6281
        %6408 = vmatprep.subr.bf16.mxu0 0
        %6409 = vmatpush1.bf16.msra.mxu0 %v6280
        %6410 = vmatprep.subr.bf16.mxu0 0
        %6411 = vmatpush1.bf16.msra.mxu0 %v6279
        %6412 = vmatprep.subr.bf16.mxu0 0
        %6413 = vmatpush1.bf16.msra.mxu0 %v6278
        %6414 = vmatprep.subr.bf16.mxu0 0
        %6415 = vmatpush2.bf16.msra.mxu0 %v6293
        %6416 = vmatprep.subr.bf16.mxu0 0
        %6417 = vmatpush2.bf16.msra.mxu0 %v6292
        %6418 = vmatprep.subr.bf16.mxu0 0
        %6419 = vmatpush2.bf16.msra.mxu0 %v6291
        %6420 = vmatprep.subr.bf16.mxu0 0
        %6421 = vmatpush2.bf16.msra.mxu0 %v6290
        %6422 = vmatprep.subr.bf16.mxu0 0
        %6423 = vmatpush2.bf16.msra.mxu0 %v6289
        %6424 = vmatprep.subr.bf16.mxu0 0
        %6425 = vmatpush2.bf16.msra.mxu0 %v6288
        %6426 = vmatprep.subr.bf16.mxu0 0
        %6427 = vmatpush2.bf16.msra.mxu0 %v6287
        %6428 = vmatprep.subr.bf16.mxu0 0
        %6429 = vmatpush2.bf16.msra.mxu0 %v6286
        %6430 = vmatprep.mubr.bf16.mxu0 %v5964
        %6431 = vmatmul.mubr.bf16.gmra.mxu0 %v5963
        %v6432 = vpop.f32.mrf.mxu0
        %v6433 = vadd.f32 %v6393, %v6432
        %v6434 = vpop.f32.mrf.mxu0
        %v6435 = vpop.f32.mrf.mxu0
        %v6436 = vpop.f32.mrf.mxu0
        %6437 = vdwg.mxu0
        %6438 = vmatprep.subr.bf16.mxu0 0
        %6439 = vmatpush1.bf16.msra.mxu0 %v6301
        %6440 = vmatprep.subr.bf16.mxu0 0
        %6441 = vmatpush1.bf16.msra.mxu0 %v6300
        %6442 = vmatprep.subr.bf16.mxu0 0
        %6443 = vmatpush1.bf16.msra.mxu0 %v6299
        %6444 = vmatprep.subr.bf16.mxu0 0
        %6445 = vmatpush1.bf16.msra.mxu0 %v6298
        %6446 = vmatprep.subr.bf16.mxu0 0
        %6447 = vmatpush1.bf16.msra.mxu0 %v6297
        %6448 = vmatprep.subr.bf16.mxu0 0
        %6449 = vmatpush1.bf16.msra.mxu0 %v6296
        %6450 = vmatprep.subr.bf16.mxu0 0
        %6451 = vmatpush1.bf16.msra.mxu0 %v6295
        %6452 = vmatprep.subr.bf16.mxu0 0
        %6453 = vmatpush1.bf16.msra.mxu0 %v6294
        %6454 = vmatprep.subr.bf16.mxu0 0
        %6455 = vmatpush2.bf16.msra.mxu0 %v6309
        %6456 = vmatprep.subr.bf16.mxu0 0
        %6457 = vmatpush2.bf16.msra.mxu0 %v6308
        %6458 = vmatprep.subr.bf16.mxu0 0
        %6459 = vmatpush2.bf16.msra.mxu0 %v6307
        %6460 = vmatprep.subr.bf16.mxu0 0
        %6461 = vmatpush2.bf16.msra.mxu0 %v6306
        %6462 = vmatprep.subr.bf16.mxu0 0
        %6463 = vmatpush2.bf16.msra.mxu0 %v6305
        %6464 = vmatprep.subr.bf16.mxu0 0
        %6465 = vmatpush2.bf16.msra.mxu0 %v6304
        %6466 = vmatprep.subr.bf16.mxu0 0
        %6467 = vmatpush2.bf16.msra.mxu0 %v6303
        %6468 = vmatprep.subr.bf16.mxu0 0
        %6469 = vmatpush2.bf16.msra.mxu0 %v6302
        %6470 = vmatprep.mubr.bf16.mxu0 %v5966
        %6471 = vmatmul.mubr.bf16.gmra.mxu0 %v5965
        %v6472 = vpop.f32.mrf.mxu0
        %v6473 = vadd.f32 %v6433, %v6472
        %v6474 = vpop.f32.mrf.mxu0
        %v6475 = vpop.f32.mrf.mxu0
        %v6476 = vpop.f32.mrf.mxu0
        %6477 = vdwg.mxu0
        %v6478 = vtanh.pop %v6473
        %vm6479 = vcmask 23552
        %6480 = vst.msk [vmem:[%s676] sm:$0xff] %vm6479, %v6478
        %6481 = vst.msk [vmem:[%s680] sm:$0xff] %vm3668, %v3597
        %6483 = vrot.lane.b32.xlu0 %v3605, 122
        %v6484 = vpop.permute.xlu0 %6483
        %6486 = vst.msk [vmem:[%s684] sm:$0xff] %vm3668, %v6484
        %p6487 = scmp.lt.s32.totalorder %s34, 3
        %s6488 = scalar_select %p6487, %s34, 3
        %s6489 = smul.addr %s6488, 8
        %s6490 = scalar_lea.vmem %s14, %s6489
        %p6491 = scmp.lt.s32.totalorder %s34, 3
        %s6492 = scalar_select %p6491, %s34, 3
        %s6493 = smul.addr %s6492, 8
        %s6494 = scalar_lea.vmem %s15, %s6493
        %p6495 = scmp.lt.s32.totalorder %s34, 3
        %s6496 = scalar_select %p6495, %s34, 3
        %s6497 = smul.addr %s6496, 8
        %s6498 = scalar_lea.vmem %s16, %s6497
        // Predicated region
        $region117: #{tpu_custom_call.1} parent=75 // pred_check
          %p6499 = pneg %p356
        $region118: #{tpu_custom_call.1} parent=75 // pred_check_branch
          %6501 = sbr.rel (%p6499) target = $region120
        $region119: #{tpu_custom_call.1} parent=75 // pred_region
          _
        $region120: #{tpu_custom_call.1} parent=75 // pred_fallthru
          _
        // Predicated region
        $region121: #{tpu_custom_call.1} parent=75 // pred_check
          %p6502 = pneg %p382
        $region122: #{tpu_custom_call.1} parent=75 // pred_check_branch
          %6504 = sbr.rel (%p6502) target = $region124
        $region123: #{tpu_custom_call.1} parent=75 // pred_region
          _
        $region124: #{tpu_custom_call.1} parent=75 // pred_fallthru
          _
        // Predicated region
        $region125: #{tpu_custom_call.1} parent=75 // pred_check
          %p6505 = pneg %p408
        $region126: #{tpu_custom_call.1} parent=75 // pred_check_branch
          %6507 = sbr.rel (%p6505) target = $region128
        $region127: #{tpu_custom_call.1} parent=75 // pred_region
          _
        $region128: #{tpu_custom_call.1} parent=75 // pred_fallthru
          _
      $region76: #{tpu_custom_call.1} parent=5 // pred_fallthru
        _
      %p6508 = scmp.le.s32.totalorder 2, %s29
      // Predicated region
      $region129: #{tpu_custom_call.1} parent=5 // pred_check
        %p6509 = pneg %p6508
      $region130: #{tpu_custom_call.1} parent=5 // pred_check_branch
        %6511 = sbr.rel (%p6509) target = $region132
      $region131: #{tpu_custom_call.1} parent=5 // pred_region
        %s6512 = ssub.s32 %s29, 2
        // Predicated region
        $region133: #{tpu_custom_call.1} parent=131 // pred_check
          %p6513 = pneg %p362
        $region134: #{tpu_custom_call.1} parent=131 // pred_check_branch
          %6515 = sbr.rel (%p6513) target = $region136
        $region135: #{tpu_custom_call.1} parent=131 // pred_region
          %p6516 = scmp.lt.s32.totalorder %s35, 3
          %s6517 = scalar_select %p6516, %s35, 3
          %s6518 = smul.addr %s6517, 8
          %s6519 = scalar_lea.vmem %s14, %s6518
        $region136: #{tpu_custom_call.1} parent=131 // pred_fallthru
          _
        // Predicated region
        $region137: #{tpu_custom_call.1} parent=131 // pred_check
          %p6520 = pneg %p388
        $region138: #{tpu_custom_call.1} parent=131 // pred_check_branch
          %6522 = sbr.rel (%p6520) target = $region140
        $region139: #{tpu_custom_call.1} parent=131 // pred_region
          %p6523 = scmp.lt.s32.totalorder %s35, 3
          %s6524 = scalar_select %p6523, %s35, 3
          %s6525 = smul.addr %s6524, 8
          %s6526 = scalar_lea.vmem %s15, %s6525
        $region140: #{tpu_custom_call.1} parent=131 // pred_fallthru
          _
        // Predicated region
        $region141: #{tpu_custom_call.1} parent=131 // pred_check
          %p6527 = pneg %p414
        $region142: #{tpu_custom_call.1} parent=131 // pred_check_branch
          %6529 = sbr.rel (%p6527) target = $region144
        $region143: #{tpu_custom_call.1} parent=131 // pred_region
          %p6530 = scmp.lt.s32.totalorder %s35, 3
          %s6531 = scalar_select %p6530, %s35, 3
          %s6532 = smul.addr %s6531, 8
          %s6533 = scalar_lea.vmem %s16, %s6532
        $region144: #{tpu_custom_call.1} parent=131 // pred_fallthru
          _
      $region132: #{tpu_custom_call.1} parent=5 // pred_fallthru
        _
    $region6: #{tpu_custom_call.1} parent=1 // loop_footer
      %s33 = sadd.s32 1, %s29
    $region7: #{tpu_custom_call.1} parent=1 // loop_footer_branch
      %28 = sbr.rel target = $region3
    $region8: #{tpu_custom_call.1} parent=1 // loop_exit
      _
    %6534 = vsyncpa [#allocation3], 1
    %s6535 = scalar_lea.sflag [#allocation3], 1
    %6536 = vsyncpa %s6535, 1
    %6537 = vsyncpa [#allocation5], 1
    %6538 = vsyncpa [#allocation8], 1
    %6539 = vsyncpa [#allocation11], 1
    %6540 = vsyncpa [#allocation14], 1
    %6541 = vsyncpa [#allocation17], 1

</llo_original>
